<compile_context>
chip_gen: v5e
topology: v5e:2x2
jax: 0.10.0
libtpu: 0.0.40
codegen_flags: <defaults>
</compile_context>

<pallas_src>
import jax
import jax.numpy as jnp
from jax import lax
from jax.experimental import pallas as pl
from jax.experimental.pallas import tpu as pltpu

EPS = 1e-5
LANE = 128
VMEM_LIMIT = 32 * 1024 * 1024


def _round_up(x, m):
    return (x + m - 1) // m * m


# --------------------------- pass 1: conv1 (+ 1x1 projection) -----------------------------
def _pass1_proj_kernel(xcol_ref, xctr_ref, w1_ref, ws_ref,
                       z1_ref, s1_ref, q1_ref, zsc_ref, ssc_ref, qsc_ref):
    # conv1 as a single im2col matmul: (P, 9*Cin) @ (9*Cin, Cp), bf16 operands, f32 acc.
    z1 = jnp.dot(xcol_ref[...], w1_ref[...], preferred_element_type=jnp.float32)
    z1_ref[...] = z1
    s1_ref[...] = jnp.sum(z1, axis=0, keepdims=True)          # per-batch partial BN stats
    q1_ref[...] = jnp.sum(z1 * z1, axis=0, keepdims=True)
    # projection shortcut: 1x1 strided conv = (P, Cin) @ (Cin, Cp)
    zsc = jnp.dot(xctr_ref[...], ws_ref[...], preferred_element_type=jnp.float32)
    zsc_ref[...] = zsc
    ssc_ref[...] = jnp.sum(zsc, axis=0, keepdims=True)
    qsc_ref[...] = jnp.sum(zsc * zsc, axis=0, keepdims=True)


def _pass1_id_kernel(xcol_ref, w1_ref, z1_ref, s1_ref, q1_ref):
    z1 = jnp.dot(xcol_ref[...], w1_ref[...], preferred_element_type=jnp.float32)
    z1_ref[...] = z1
    s1_ref[...] = jnp.sum(z1, axis=0, keepdims=True)
    q1_ref[...] = jnp.sum(z1 * z1, axis=0, keepdims=True)


# ------------------ pass 2: BN1 (folded) + ReLU + conv2 + partial BN stats -----------------
def _make_pass2_kernel(Ho, Wo, Cp):
    P = Ho * Wo

    def kernel(z1_ref, sc1_ref, sh1_ref, w2_ref, z2_ref, s2_ref, q2_ref, pad_ref):
        # BN1 as a single scale/shift FMA (global stats precomputed in the wrapper) + ReLU.
        y = jnp.maximum(z1_ref[...] * sc1_ref[...] + sh1_ref[...], 0.0)      # (P, Cp) f32

        # Stage conv2's padded activation in VMEM: zero ONLY the 4 border strips
        # (re-done every grid step so no stale data leaks between batches),
        # then write the interior once.
        pad_ref[0:1, :, :] = jnp.zeros((1, Wo + 2, Cp), jnp.float32)
        pad_ref[Ho + 1:Ho + 2, :, :] = jnp.zeros((1, Wo + 2, Cp), jnp.float32)
        pad_ref[1:Ho + 1, 0:1, :] = jnp.zeros((Ho, 1, Cp), jnp.float32)
        pad_ref[1:Ho + 1, Wo + 1:Wo + 2, :] = jnp.zeros((Ho, 1, Cp), jnp.float32)
        pad_ref[1:Ho + 1, 1:Wo + 1, :] = y.reshape(Ho, Wo, Cp)

        # Fused conv2: build the (P, 9*Cp) im2col slab (bf16) and do ONE MXU matmul.
        taps = [pad_ref[kh:kh + Ho, kw:kw + Wo, :].astype(jnp.bfloat16).reshape(P, Cp)
                for kh in range(3) for kw in range(3)]
        ycol = jnp.concatenate(taps, axis=-1)                                # (P, 9*Cp) bf16
        z2 = jnp.dot(ycol, w2_ref[...], preferred_element_type=jnp.float32)  # (P, Cp) f32
        z2_ref[...] = z2
        s2_ref[...] = jnp.sum(z2, axis=0, keepdims=True)
        q2_ref[...] = jnp.sum(z2 * z2, axis=0, keepdims=True)

    return kernel


# --------------------- pass 3: BN2 + BN_shortcut + residual add + ReLU ---------------------
def _pass3_kernel(z2_ref, sc2_ref, sh2_ref, zsc_ref, scs_ref, shs_ref, o_ref):
    y2 = z2_ref[...] * sc2_ref[...] + sh2_ref[...]
    sc = zsc_ref[...] * scs_ref[...] + shs_ref[...]
    o_ref[...] = jnp.maximum(y2 + sc, 0.0)


# ----------------------------------------- wrapper ----------------------------------------
def resblock_forward(x_nchw, params, stride=1):
    B, Cin, H, W = x_nchw.shape
    Cout = params["w1"].shape[-1]
    has_proj = (stride != 1) or (Cin != Cout)

    Ho = (H + 2 - 3) // stride + 1
    Wo = (W + 2 - 3) // stride + 1
    P = Ho * Wo
    Npix = B * P
    Cp = _round_up(Cout, LANE)                  # lane-dense channel axis inside the kernels

    def padc(a):                                # zero-pad the last (channel) axis up to Cp
        return jnp.pad(a, [(0, 0)] * (a.ndim - 1) + [(0, Cp - a.shape[-1])])

    x = jnp.transpose(x_nchw, (0, 2, 3, 1)).astype(jnp.float32)              # NCHW -> NHWC
    x_pad = jnp.pad(x, ((0, 0), (1, 1), (1, 1), (0, 0)))

    # im2col for conv1 in the wrapper (tap order (kh, kw) row-major, Cin fastest — this
    # matches the row-major reshape of the HWIO weight below).
    cols = []
    for kh in range(3):
        for kw in range(3):
            cols.append(x_pad[:, kh:kh + stride * (Ho - 1) + 1:stride,
                              kw:kw + stride * (Wo - 1) + 1:stride, :])
    x_col = jnp.concatenate(cols, axis=-1).reshape(B, P, 9 * Cin).astype(jnp.bfloat16)

    w1 = padc(params["w1"]).reshape(9 * Cin, Cp).astype(jnp.bfloat16)
    w2 = jnp.pad(params["w2"],
                 ((0, 0), (0, 0), (0, Cp - Cout), (0, Cp - Cout))
                 ).reshape(9 * Cp, Cp).astype(jnp.bfloat16)
    g1, be1 = padc(params["g1"]), padc(params["be1"])
    g2, be2 = padc(params["g2"]), padc(params["be2"])
    # NOTE: conv biases (b1/b2/bs) are intentionally dropped — a per-channel constant added
    # right before a training-mode BatchNorm is exactly cancelled by the mean subtraction.

    cparams = pltpu.CompilerParams(dimension_semantics=("parallel",),
                                   vmem_limit_bytes=VMEM_LIMIT)

    z_spec = pl.BlockSpec((None, P, Cp), lambda b: (b, 0, 0))
    stat_spec = pl.BlockSpec((None, 1, Cp), lambda b: (b, 0, 0))
    vec_spec = pl.BlockSpec((1, Cp), lambda b: (0, 0))
    z_shape = jax.ShapeDtypeStruct((B, P, Cp), jnp.float32)
    stat_shape = jax.ShapeDtypeStruct((B, 1, Cp), jnp.float32)

    # ------------------------------ pass 1 ------------------------------
    if has_proj:
        x_ctr = x[:, ::stride, ::stride, :].reshape(B, P, Cin).astype(jnp.bfloat16)
        ws = padc(params["ws"]).astype(jnp.bfloat16)
        z1, s1, q1, zsc, ssc, qsc = pl.pallas_call(
            _pass1_proj_kernel,
            grid=(B,),
            in_specs=[
                pl.BlockSpec((None, P, 9 * Cin), lambda b: (b, 0, 0)),
                pl.BlockSpec((None, P, Cin), lambda b: (b, 0, 0)),
                pl.BlockSpec((9 * Cin, Cp), lambda b: (0, 0)),
                pl.BlockSpec((Cin, Cp), lambda b: (0, 0)),
            ],
            out_specs=[z_spec, stat_spec, stat_spec, z_spec, stat_spec, stat_spec],
            out_shape=[z_shape, stat_shape, stat_shape, z_shape, stat_shape, stat_shape],
            compiler_params=cparams,
        )(x_col, x_ctr, w1, ws)
    else:
        z1, s1, q1 = pl.pallas_call(
            _pass1_id_kernel,
            grid=(B,),
            in_specs=[
                pl.BlockSpec((None, P, 9 * Cin), lambda b: (b, 0, 0)),
                pl.BlockSpec((9 * Cin, Cp), lambda b: (0, 0)),
            ],
            out_specs=[z_spec, stat_spec, stat_spec],
            out_shape=[z_shape, stat_shape, stat_shape],
            compiler_params=cparams,
        )(x_col, w1)
        zsc = padc(x.reshape(B, P, Cin))          # identity shortcut (Cin == Cout, stride 1)

    def bn_affine(s_part, q_part, gamma, beta):
        # single-pass stats: E[x^2] - E[x]^2 (biased variance, training-mode BN)
        s = jnp.sum(s_part, axis=0)               # (1, Cp)
        q = jnp.sum(q_part, axis=0)
        mean = s / Npix
        var = jnp.maximum(q / Npix - mean * mean, 0.0)
        scale = gamma * lax.rsqrt(var + EPS)
        return scale, beta - mean * scale

    scale1, shift1 = bn_affine(s1, q1, g1, be1)
    if has_proj:
        scale_sc, shift_sc = bn_affine(ssc, qsc, padc(params["gs"]), padc(params["bes"]))
    else:
        scale_sc = jnp.ones((1, Cp), jnp.float32)
        shift_sc = jnp.zeros((1, Cp), jnp.float32)

    # ------------------------------ pass 2 ------------------------------
    z2, s2, q2 = pl.pallas_call(
        _make_pass2_kernel(Ho, Wo, Cp),
        grid=(B,),
        in_specs=[z_spec, vec_spec, vec_spec,
                  pl.BlockSpec((9 * Cp, Cp), lambda b: (0, 0))],
        out_specs=[z_spec, stat_spec, stat_spec],
        out_shape=[z_shape, stat_shape, stat_shape],
        scratch_shapes=[pltpu.VMEM((Ho + 2, Wo + 2, Cp), jnp.float32)],
        compiler_params=cparams,
    )(z1, scale1, shift1, w2)
    scale2, shift2 = bn_affine(s2, q2, g2, be2)

    # ------------------------------ pass 3 ------------------------------
    out = pl.pallas_call(
        _pass3_kernel,
        grid=(B,),
        in_specs=[z_spec, vec_spec, vec_spec, z_spec, vec_spec, vec_spec],
        out_specs=z_spec,
        out_shape=z_shape,
        compiler_params=cparams,
    )(z2, scale2, shift2, zsc, scale_sc, shift_sc)

    out = out[:, :, :Cout].reshape(B, Ho, Wo, Cout)
    return jnp.transpose(out, (0, 3, 1, 2))                                  # NHWC -> NCHW


resblock_forward_jit = jax.jit(resblock_forward, static_argnames=("stride",))


# --------------------------------------- reference ----------------------------------------
def init_params(key, Cin, Cout):
    ks = jax.random.split(key, 6)
    ones = jnp.ones((1, Cout), jnp.float32)
    zeros = jnp.zeros((1, Cout), jnp.float32)
    return dict(
        w1=jax.random.normal(ks[0], (3, 3, Cin, Cout), jnp.float32) * 0.1,   # HWIO
        b1=jax.random.normal(ks[1], (1, Cout), jnp.float32) * 0.1,
        g1=ones, be1=zeros,
        w2=jax.random.normal(ks[2], (3, 3, Cout, Cout), jnp.float32) * 0.1,
        b2=jax.random.normal(ks[3], (1, Cout), jnp.float32) * 0.1,
        g2=ones, be2=zeros,
        ws=jax.random.normal(ks[4], (Cin, Cout), jnp.float32) * 0.1,         # 1x1 conv
        bs=jax.random.normal(ks[5], (1, Cout), jnp.float32) * 0.1,
        gs=ones, bes=zeros,
    )


def resblock_reference(x_nchw, params, stride=1):
    """Pure-JAX reference of the PyTorch ResBlock forward (training-mode BN, biased var).
    Conv operands are cast to bf16 with f32 accumulation to mirror the kernel's MXU dtypes."""
    x = jnp.transpose(x_nchw, (0, 2, 3, 1)).astype(jnp.float32)
    Cin, Cout = x.shape[-1], params["w1"].shape[-1]

    def conv(x, w, b, s, pad):
        y = lax.conv_general_dilated(
            x.astype(jnp.bfloat16), w.astype(jnp.bfloat16),
            window_strides=(s, s), padding=pad,
            dimension_numbers=("NHWC", "HWIO", "NHWC"),
            preferred_element_type=jnp.float32)
        return y + b.reshape(1, 1, 1, -1)

    def bn(y, g, be):
        mean = jnp.mean(y, axis=(0, 1, 2), keepdims=True)
        var = jnp.mean((y - mean) ** 2, axis=(0, 1, 2), keepdims=True)
        return (y - mean) * lax.rsqrt(var + EPS) * g.reshape(1, 1, 1, -1) + be.reshape(1, 1, 1, -1)

    y = conv(x, params["w1"], params["b1"], stride, [(1, 1), (1, 1)])
    y = jnp.maximum(bn(y, params["g1"], params["be1"]), 0.0)
    y = conv(y, params["w2"], params["b2"], 1, [(1, 1), (1, 1)])
    y = bn(y, params["g2"], params["be2"])

    if stride != 1 or Cin != Cout:
        sc = conv(x, params["ws"].reshape(1, 1, Cin, Cout), params["bs"], stride,
                  [(0, 0), (0, 0)])
        sc = bn(sc, params["gs"], params["bes"])
    else:
        sc = x
    out = jnp.maximum(y + sc, 0.0)
    return jnp.transpose(out, (0, 3, 1, 2))


if __name__ == "__main__":
    key = jax.random.PRNGKey(0)

    # (B, Cin, Cout, H, W, stride): projection / identity / strided-projection shortcuts
    configs = [
        (2, 4, 8, 16, 16, 1),
        (2, 8, 8, 16, 16, 1),
        (2, 4, 8, 16, 16, 2),
    ]
    for i, (B, Cin, Cout, H, W, stride) in enumerate(configs):
        kx, kp, key = jax.random.split(key, 3)
        x = jax.random.normal(kx, (B, Cin, H, W), jnp.float32)
        params = init_params(kp, Cin, Cout)

        out = jax.block_until_ready(resblock_forward_jit(x, params, stride=stride))
        ref = resblock_reference(x, params, stride=stride)
        assert out.shape == ref.shape
        err = float(jnp.max(jnp.abs(out - ref)))
        if err > 2e-2:
            raise SystemExit(f"config {i}: max abs err too large: {err}")
    print("KERNEL_OK")
</pallas_src>

<mosaic_0001>
module attributes {stable_mosaic.version = 11 : i64} {
  func.func @_pass1_proj_kernel(%arg0: i32, %arg1: memref<1x256x36xbf16, #tpu.memory_space<vmem>>, %arg2: memref<1x256x4xbf16, #tpu.memory_space<vmem>>, %arg3: memref<36x128xbf16, #tpu.memory_space<vmem>>, %arg4: memref<4x128xbf16, #tpu.memory_space<vmem>>, %arg5: memref<1x256x128xf32, #tpu.memory_space<vmem>>, %arg6: memref<1x1x128xf32, #tpu.memory_space<vmem>>, %arg7: memref<1x1x128xf32, #tpu.memory_space<vmem>>, %arg8: memref<1x256x128xf32, #tpu.memory_space<vmem>>, %arg9: memref<1x1x128xf32, #tpu.memory_space<vmem>>, %arg10: memref<1x1x128xf32, #tpu.memory_space<vmem>>) attributes {dimension_semantics = [#tpu.dimension_semantics<parallel>], iteration_bounds = array<i64: 2>, scalar_prefetch = 0 : i64, scratch_operands = 0 : i64, tpu.core_type = #tpu.core_type<tc>, window_params = [{transform_indices = @transform_0, window_bounds = array<i64: 1, 256, 36>}, {transform_indices = @transform_1, window_bounds = array<i64: 1, 256, 4>}, {pipeline_mode = #tpu.pipeline_mode<synchronous>, transform_indices = @transform_2, window_bounds = array<i64: 36, 128>}, {pipeline_mode = #tpu.pipeline_mode<synchronous>, transform_indices = @transform_3, window_bounds = array<i64: 4, 128>}, {transform_indices = @transform_4, window_bounds = array<i64: 1, 256, 128>}, {transform_indices = @transform_5, window_bounds = array<i64: 1, 1, 128>}, {transform_indices = @transform_6, window_bounds = array<i64: 1, 1, 128>}, {transform_indices = @transform_7, window_bounds = array<i64: 1, 256, 128>}, {transform_indices = @transform_8, window_bounds = array<i64: 1, 1, 128>}, {transform_indices = @transform_9, window_bounds = array<i64: 1, 1, 128>}]} {
    %c0 = arith.constant 0 : index
    %c0_0 = arith.constant 0 : index
    %c0_1 = arith.constant 0 : index
    %0 = vector.load %arg1[%c0, %c0_0, %c0_1] : memref<1x256x36xbf16, #tpu.memory_space<vmem>>, vector<1x256x36xbf16>
    %1 = vector.shape_cast %0 : vector<1x256x36xbf16> to vector<256x36xbf16>
    %c0_2 = arith.constant 0 : index
    %c0_3 = arith.constant 0 : index
    %2 = vector.load %arg3[%c0_2, %c0_3] : memref<36x128xbf16, #tpu.memory_space<vmem>>, vector<36x128xbf16>
    %cst = arith.constant dense<0.000000e+00> : vector<256x128xf32>
    %3 = tpu.matmul %1, %2, %cst {dimension_numbers = #tpu.dot_dimension_numbers<[1], [0], [0], [1], [0, 0, 1, 1], [], []>} : vector<256x36xbf16>, vector<36x128xbf16>, vector<256x128xf32> -> vector<256x128xf32>
    %c0_4 = arith.constant 0 : index
    %c0_5 = arith.constant 0 : index
    %c0_6 = arith.constant 0 : index
    %4 = vector.load %arg5[%c0_4, %c0_5, %c0_6] : memref<1x256x128xf32, #tpu.memory_space<vmem>>, vector<1x256x128xf32>
    %5 = vector.shape_cast %4 : vector<1x256x128xf32> to vector<256x128xf32>
    %6 = vector.shape_cast %3 : vector<256x128xf32> to vector<1x256x128xf32>
    tpu.vector_store %arg5[%c0_4, %c0_5, %c0_6], %6 {strides = array<i32>} : memref<1x256x128xf32, #tpu.memory_space<vmem>>, vector<1x256x128xf32>,
    %cst_7 = arith.constant dense<0.000000e+00> : vector<128xf32>
    %7 = vector.multi_reduction <add>, %3, %cst_7 [0] : vector<256x128xf32> to vector<128xf32>
    %8 = vector.shape_cast %7 : vector<128xf32> to vector<1x128xf32>
    %c0_8 = arith.constant 0 : index
    %c0_9 = arith.constant 0 : index
    %c0_10 = arith.constant 0 : index
    %9 = vector.load %arg6[%c0_8, %c0_9, %c0_10] : memref<1x1x128xf32, #tpu.memory_space<vmem>>, vector<1x1x128xf32>
    %10 = vector.shape_cast %9 : vector<1x1x128xf32> to vector<1x128xf32>
    %11 = vector.shape_cast %8 : vector<1x128xf32> to vector<1x1x128xf32>
    tpu.vector_store %arg6[%c0_8, %c0_9, %c0_10], %11 {strides = array<i32>} : memref<1x1x128xf32, #tpu.memory_space<vmem>>, vector<1x1x128xf32>,
    %12 = arith.mulf %3, %3 : vector<256x128xf32>
    %cst_11 = arith.constant dense<0.000000e+00> : vector<128xf32>
    %13 = vector.multi_reduction <add>, %12, %cst_11 [0] : vector<256x128xf32> to vector<128xf32>
    %14 = vector.shape_cast %13 : vector<128xf32> to vector<1x128xf32>
    %c0_12 = arith.constant 0 : index
    %c0_13 = arith.constant 0 : index
    %c0_14 = arith.constant 0 : index
    %15 = vector.load %arg7[%c0_12, %c0_13, %c0_14] : memref<1x1x128xf32, #tpu.memory_space<vmem>>, vector<1x1x128xf32>
    %16 = vector.shape_cast %15 : vector<1x1x128xf32> to vector<1x128xf32>
    %17 = vector.shape_cast %14 : vector<1x128xf32> to vector<1x1x128xf32>
    tpu.vector_store %arg7[%c0_12, %c0_13, %c0_14], %17 {strides = array<i32>} : memref<1x1x128xf32, #tpu.memory_space<vmem>>, vector<1x1x128xf32>,
    %c0_15 = arith.constant 0 : index
    %c0_16 = arith.constant 0 : index
    %c0_17 = arith.constant 0 : index
    %18 = vector.load %arg2[%c0_15, %c0_16, %c0_17] : memref<1x256x4xbf16, #tpu.memory_space<vmem>>, vector<1x256x4xbf16>
    %19 = vector.shape_cast %18 : vector<1x256x4xbf16> to vector<256x4xbf16>
    %c0_18 = arith.constant 0 : index
    %c0_19 = arith.constant 0 : index
    %20 = vector.load %arg4[%c0_18, %c0_19] : memref<4x128xbf16, #tpu.memory_space<vmem>>, vector<4x128xbf16>
    %cst_20 = arith.constant dense<0.000000e+00> : vector<256x128xf32>
    %21 = tpu.matmul %19, %20, %cst_20 {dimension_numbers = #tpu.dot_dimension_numbers<[1], [0], [0], [1], [0, 0, 1, 1], [], []>} : vector<256x4xbf16>, vector<4x128xbf16>, vector<256x128xf32> -> vector<256x128xf32>
    %c0_21 = arith.constant 0 : index
    %c0_22 = arith.constant 0 : index
    %c0_23 = arith.constant 0 : index
    %22 = vector.load %arg8[%c0_21, %c0_22, %c0_23] : memref<1x256x128xf32, #tpu.memory_space<vmem>>, vector<1x256x128xf32>
    %23 = vector.shape_cast %22 : vector<1x256x128xf32> to vector<256x128xf32>
    %24 = vector.shape_cast %21 : vector<256x128xf32> to vector<1x256x128xf32>
    tpu.vector_store %arg8[%c0_21, %c0_22, %c0_23], %24 {strides = array<i32>} : memref<1x256x128xf32, #tpu.memory_space<vmem>>, vector<1x256x128xf32>,
    %cst_24 = arith.constant dense<0.000000e+00> : vector<128xf32>
    %25 = vector.multi_reduction <add>, %21, %cst_24 [0] : vector<256x128xf32> to vector<128xf32>
    %26 = vector.shape_cast %25 : vector<128xf32> to vector<1x128xf32>
    %c0_25 = arith.constant 0 : index
    %c0_26 = arith.constant 0 : index
    %c0_27 = arith.constant 0 : index
    %27 = vector.load %arg9[%c0_25, %c0_26, %c0_27] : memref<1x1x128xf32, #tpu.memory_space<vmem>>, vector<1x1x128xf32>
    %28 = vector.shape_cast %27 : vector<1x1x128xf32> to vector<1x128xf32>
    %29 = vector.shape_cast %26 : vector<1x128xf32> to vector<1x1x128xf32>
    tpu.vector_store %arg9[%c0_25, %c0_26, %c0_27], %29 {strides = array<i32>} : memref<1x1x128xf32, #tpu.memory_space<vmem>>, vector<1x1x128xf32>,
    %30 = arith.mulf %21, %21 : vector<256x128xf32>
    %cst_28 = arith.constant dense<0.000000e+00> : vector<128xf32>
    %31 = vector.multi_reduction <add>, %30, %cst_28 [0] : vector<256x128xf32> to vector<128xf32>
    %32 = vector.shape_cast %31 : vector<128xf32> to vector<1x128xf32>
    %c0_29 = arith.constant 0 : index
    %c0_30 = arith.constant 0 : index
    %c0_31 = arith.constant 0 : index
    %33 = vector.load %arg10[%c0_29, %c0_30, %c0_31] : memref<1x1x128xf32, #tpu.memory_space<vmem>>, vector<1x1x128xf32>
    %34 = vector.shape_cast %33 : vector<1x1x128xf32> to vector<1x128xf32>
    %35 = vector.shape_cast %32 : vector<1x128xf32> to vector<1x1x128xf32>
    tpu.vector_store %arg10[%c0_29, %c0_30, %c0_31], %35 {strides = array<i32>} : memref<1x1x128xf32, #tpu.memory_space<vmem>>, vector<1x1x128xf32>,
    return
  }
  func.func @transform_0(%arg0: i32) -> (i32, i32, i32) {
    %c0_i32 = arith.constant 0 : i32
    %c0_i32_0 = arith.constant 0 : i32
    %c0_i32_1 = arith.constant 0 : i32
    return %arg0, %c0_i32, %c0_i32_0 : i32, i32, i32
  }
  func.func @transform_1(%arg0: i32) -> (i32, i32, i32) {
    %c0_i32 = arith.constant 0 : i32
    %c0_i32_0 = arith.constant 0 : i32
    %c0_i32_1 = arith.constant 0 : i32
    return %arg0, %c0_i32, %c0_i32_0 : i32, i32, i32
  }
  func.func @transform_2(%arg0: i32) -> (i32, i32) {
    %c0_i32 = arith.constant 0 : i32
    %c0_i32_0 = arith.constant 0 : i32
    %c0_i32_1 = arith.constant 0 : i32
    return %c0_i32, %c0_i32_0 : i32, i32
  }
  func.func @transform_3(%arg0: i32) -> (i32, i32) {
    %c0_i32 = arith.constant 0 : i32
    %c0_i32_0 = arith.constant 0 : i32
    %c0_i32_1 = arith.constant 0 : i32
    return %c0_i32, %c0_i32_0 : i32, i32
  }
  func.func @transform_4(%arg0: i32) -> (i32, i32, i32) {
    %c0_i32 = arith.constant 0 : i32
    %c0_i32_0 = arith.constant 0 : i32
    %c0_i32_1 = arith.constant 0 : i32
    return %arg0, %c0_i32, %c0_i32_0 : i32, i32, i32
  }
  func.func @transform_5(%arg0: i32) -> (i32, i32, i32) {
    %c0_i32 = arith.constant 0 : i32
    %c0_i32_0 = arith.constant 0 : i32
    %c0_i32_1 = arith.constant 0 : i32
    return %arg0, %c0_i32, %c0_i32_0 : i32, i32, i32
  }
  func.func @transform_6(%arg0: i32) -> (i32, i32, i32) {
    %c0_i32 = arith.constant 0 : i32
    %c0_i32_0 = arith.constant 0 : i32
    %c0_i32_1 = arith.constant 0 : i32
    return %arg0, %c0_i32, %c0_i32_0 : i32, i32, i32
  }
  func.func @transform_7(%arg0: i32) -> (i32, i32, i32) {
    %c0_i32 = arith.constant 0 : i32
    %c0_i32_0 = arith.constant 0 : i32
    %c0_i32_1 = arith.constant 0 : i32
    return %arg0, %c0_i32, %c0_i32_0 : i32, i32, i32
  }
  func.func @transform_8(%arg0: i32) -> (i32, i32, i32) {
    %c0_i32 = arith.constant 0 : i32
    %c0_i32_0 = arith.constant 0 : i32
    %c0_i32_1 = arith.constant 0 : i32
    return %arg0, %c0_i32, %c0_i32_0 : i32, i32, i32
  }
  func.func @transform_9(%arg0: i32) -> (i32, i32, i32) {
    %c0_i32 = arith.constant 0 : i32
    %c0_i32_0 = arith.constant 0 : i32
    %c0_i32_1 = arith.constant 0 : i32
    return %arg0, %c0_i32, %c0_i32_0 : i32, i32, i32
  }
}

module attributes {stable_mosaic.version = 11 : i64} {
  func.func @_pass3_kernel(%arg0: i32, %arg1: memref<1x256x128xf32, #tpu.memory_space<vmem>>, %arg2: memref<1x128xf32, #tpu.memory_space<vmem>>, %arg3: memref<1x128xf32, #tpu.memory_space<vmem>>, %arg4: memref<1x256x128xf32, #tpu.memory_space<vmem>>, %arg5: memref<1x128xf32, #tpu.memory_space<vmem>>, %arg6: memref<1x128xf32, #tpu.memory_space<vmem>>, %arg7: memref<1x256x128xf32, #tpu.memory_space<vmem>>) attributes {dimension_semantics = [#tpu.dimension_semantics<parallel>], iteration_bounds = array<i64: 2>, scalar_prefetch = 0 : i64, scratch_operands = 0 : i64, tpu.core_type = #tpu.core_type<tc>, window_params = [{transform_indices = @transform_0, window_bounds = array<i64: 1, 256, 128>}, {pipeline_mode = #tpu.pipeline_mode<synchronous>, transform_indices = @transform_1, window_bounds = array<i64: 1, 128>}, {pipeline_mode = #tpu.pipeline_mode<synchronous>, transform_indices = @transform_2, window_bounds = array<i64: 1, 128>}, {transform_indices = @transform_3, window_bounds = array<i64: 1, 256, 128>}, {pipeline_mode = #tpu.pipeline_mode<synchronous>, transform_indices = @transform_4, window_bounds = array<i64: 1, 128>}, {pipeline_mode = #tpu.pipeline_mode<synchronous>, transform_indices = @transform_5, window_bounds = array<i64: 1, 128>}, {transform_indices = @transform_6, window_bounds = array<i64: 1, 256, 128>}]} {
    %c0 = arith.constant 0 : index
    %c0_0 = arith.constant 0 : index
    %c0_1 = arith.constant 0 : index
    %0 = vector.load %arg1[%c0, %c0_0, %c0_1] : memref<1x256x128xf32, #tpu.memory_space<vmem>>, vector<1x256x128xf32>
    %1 = vector.shape_cast %0 : vector<1x256x128xf32> to vector<256x128xf32>
    %c0_2 = arith.constant 0 : index
    %c0_3 = arith.constant 0 : index
    %2 = vector.load %arg2[%c0_2, %c0_3] : memref<1x128xf32, #tpu.memory_space<vmem>>, vector<1x128xf32>
    %3 = vector.broadcast %2 : vector<1x128xf32> to vector<256x128xf32>
    %4 = arith.mulf %1, %3 : vector<256x128xf32>
    %c0_4 = arith.constant 0 : index
    %c0_5 = arith.constant 0 : index
    %5 = vector.load %arg3[%c0_4, %c0_5] : memref<1x128xf32, #tpu.memory_space<vmem>>, vector<1x128xf32>
    %6 = vector.broadcast %5 : vector<1x128xf32> to vector<256x128xf32>
    %7 = arith.addf %4, %6 : vector<256x128xf32>
    %c0_6 = arith.constant 0 : index
    %c0_7 = arith.constant 0 : index
    %c0_8 = arith.constant 0 : index
    %8 = vector.load %arg4[%c0_6, %c0_7, %c0_8] : memref<1x256x128xf32, #tpu.memory_space<vmem>>, vector<1x256x128xf32>
    %9 = vector.shape_cast %8 : vector<1x256x128xf32> to vector<256x128xf32>
    %c0_9 = arith.constant 0 : index
    %c0_10 = arith.constant 0 : index
    %10 = vector.load %arg5[%c0_9, %c0_10] : memref<1x128xf32, #tpu.memory_space<vmem>>, vector<1x128xf32>
    %11 = vector.broadcast %10 : vector<1x128xf32> to vector<256x128xf32>
    %12 = arith.mulf %9, %11 : vector<256x128xf32>
    %c0_11 = arith.constant 0 : index
    %c0_12 = arith.constant 0 : index
    %13 = vector.load %arg6[%c0_11, %c0_12] : memref<1x128xf32, #tpu.memory_space<vmem>>, vector<1x128xf32>
    %14 = vector.broadcast %13 : vector<1x128xf32> to vector<256x128xf32>
    %15 = arith.addf %12, %14 : vector<256x128xf32>
    %16 = arith.addf %7, %15 : vector<256x128xf32>
    %cst = arith.constant 0.000000e+00 : f32
    %17 = vector.broadcast %cst : f32 to vector<256x128xf32>
    %18 = arith.maximumf %16, %17 : vector<256x128xf32>
    %c0_13 = arith.constant 0 : index
    %c0_14 = arith.constant 0 : index
    %c0_15 = arith.constant 0 : index
    %19 = vector.load %arg7[%c0_13, %c0_14, %c0_15] : memref<1x256x128xf32, #tpu.memory_space<vmem>>, vector<1x256x128xf32>
    %20 = vector.shape_cast %19 : vector<1x256x128xf32> to vector<256x128xf32>
    %21 = vector.shape_cast %18 : vector<256x128xf32> to vector<1x256x128xf32>
    tpu.vector_store %arg7[%c0_13, %c0_14, %c0_15], %21 {strides = array<i32>} : memref<1x256x128xf32, #tpu.memory_space<vmem>>, vector<1x256x128xf32>,
    return
  }
  func.func @transform_0(%arg0: i32) -> (i32, i32, i32) {
    %c0_i32 = arith.constant 0 : i32
    %c0_i32_0 = arith.constant 0 : i32
    %c0_i32_1 = arith.constant 0 : i32
    return %arg0, %c0_i32, %c0_i32_0 : i32, i32, i32
  }
  func.func @transform_1(%arg0: i32) -> (i32, i32) {
    %c0_i32 = arith.constant 0 : i32
    %c0_i32_0 = arith.constant 0 : i32
    %c0_i32_1 = arith.constant 0 : i32
    return %c0_i32, %c0_i32_0 : i32, i32
  }
  func.func @transform_2(%arg0: i32) -> (i32, i32) {
    %c0_i32 = arith.constant 0 : i32
    %c0_i32_0 = arith.constant 0 : i32
    %c0_i32_1 = arith.constant 0 : i32
    return %c0_i32, %c0_i32_0 : i32, i32
  }
  func.func @transform_3(%arg0: i32) -> (i32, i32, i32) {
    %c0_i32 = arith.constant 0 : i32
    %c0_i32_0 = arith.constant 0 : i32
    %c0_i32_1 = arith.constant 0 : i32
    return %arg0, %c0_i32, %c0_i32_0 : i32, i32, i32
  }
  func.func @transform_4(%arg0: i32) -> (i32, i32) {
    %c0_i32 = arith.constant 0 : i32
    %c0_i32_0 = arith.constant 0 : i32
    %c0_i32_1 = arith.constant 0 : i32
    return %c0_i32, %c0_i32_0 : i32, i32
  }
  func.func @transform_5(%arg0: i32) -> (i32, i32) {
    %c0_i32 = arith.constant 0 : i32
    %c0_i32_0 = arith.constant 0 : i32
    %c0_i32_1 = arith.constant 0 : i32
    return %c0_i32, %c0_i32_0 : i32, i32
  }
  func.func @transform_6(%arg0: i32) -> (i32, i32, i32) {
    %c0_i32 = arith.constant 0 : i32
    %c0_i32_0 = arith.constant 0 : i32
    %c0_i32_1 = arith.constant 0 : i32
    return %arg0, %c0_i32, %c0_i32_0 : i32, i32, i32
  }
}

module attributes {stable_mosaic.version = 11 : i64} {
  func.func @kernel(%arg0: i32, %arg1: memref<1x256x128xf32, #tpu.memory_space<vmem>>, %arg2: memref<1x128xf32, #tpu.memory_space<vmem>>, %arg3: memref<1x128xf32, #tpu.memory_space<vmem>>, %arg4: memref<1152x128xbf16, #tpu.memory_space<vmem>>, %arg5: memref<1x256x128xf32, #tpu.memory_space<vmem>>, %arg6: memref<1x1x128xf32, #tpu.memory_space<vmem>>, %arg7: memref<1x1x128xf32, #tpu.memory_space<vmem>>, %arg8: memref<18x18x128xf32, #tpu.memory_space<vmem>>) attributes {dimension_semantics = [#tpu.dimension_semantics<parallel>], iteration_bounds = array<i64: 2>, scalar_prefetch = 0 : i64, scratch_operands = 1 : i64, tpu.core_type = #tpu.core_type<tc>, window_params = [{transform_indices = @transform_0, window_bounds = array<i64: 1, 256, 128>}, {pipeline_mode = #tpu.pipeline_mode<synchronous>, transform_indices = @transform_1, window_bounds = array<i64: 1, 128>}, {pipeline_mode = #tpu.pipeline_mode<synchronous>, transform_indices = @transform_2, window_bounds = array<i64: 1, 128>}, {pipeline_mode = #tpu.pipeline_mode<synchronous>, transform_indices = @transform_3, window_bounds = array<i64: 1152, 128>}, {transform_indices = @transform_4, window_bounds = array<i64: 1, 256, 128>}, {transform_indices = @transform_5, window_bounds = array<i64: 1, 1, 128>}, {transform_indices = @transform_6, window_bounds = array<i64: 1, 1, 128>}]} {
    %c0 = arith.constant 0 : index
    %c0_0 = arith.constant 0 : index
    %c0_1 = arith.constant 0 : index
    %0 = vector.load %arg1[%c0, %c0_0, %c0_1] : memref<1x256x128xf32, #tpu.memory_space<vmem>>, vector<1x256x128xf32>
    %1 = vector.shape_cast %0 : vector<1x256x128xf32> to vector<256x128xf32>
    %c0_2 = arith.constant 0 : index
    %c0_3 = arith.constant 0 : index
    %2 = vector.load %arg2[%c0_2, %c0_3] : memref<1x128xf32, #tpu.memory_space<vmem>>, vector<1x128xf32>
    %3 = vector.broadcast %2 : vector<1x128xf32> to vector<256x128xf32>
    %4 = arith.mulf %1, %3 : vector<256x128xf32>
    %c0_4 = arith.constant 0 : index
    %c0_5 = arith.constant 0 : index
    %5 = vector.load %arg3[%c0_4, %c0_5] : memref<1x128xf32, #tpu.memory_space<vmem>>, vector<1x128xf32>
    %6 = vector.broadcast %5 : vector<1x128xf32> to vector<256x128xf32>
    %7 = arith.addf %4, %6 : vector<256x128xf32>
    %cst = arith.constant 0.000000e+00 : f32
    %8 = vector.broadcast %cst : f32 to vector<256x128xf32>
    %9 = arith.maximumf %7, %8 : vector<256x128xf32>
    %cst_6 = arith.constant 0.000000e+00 : f32
    %10 = vector.broadcast %cst_6 : f32 to vector<1x18x128xf32>
    %c0_7 = arith.constant 0 : index
    %c0_8 = arith.constant 0 : index
    %c0_9 = arith.constant 0 : index
    %11 = vector.load %arg8[%c0_7, %c0_8, %c0_9] : memref<18x18x128xf32, #tpu.memory_space<vmem>>, vector<1x18x128xf32>
    tpu.vector_store %arg8[%c0_7, %c0_8, %c0_9], %10 {strides = array<i32>} : memref<18x18x128xf32, #tpu.memory_space<vmem>>, vector<1x18x128xf32>,
    %cst_10 = arith.constant 0.000000e+00 : f32
    %12 = vector.broadcast %cst_10 : f32 to vector<1x18x128xf32>
    %c17 = arith.constant 17 : index
    %c0_11 = arith.constant 0 : index
    %c0_12 = arith.constant 0 : index
    %13 = vector.load %arg8[%c17, %c0_11, %c0_12] : memref<18x18x128xf32, #tpu.memory_space<vmem>>, vector<1x18x128xf32>
    tpu.vector_store %arg8[%c17, %c0_11, %c0_12], %12 {strides = array<i32>} : memref<18x18x128xf32, #tpu.memory_space<vmem>>, vector<1x18x128xf32>,
    %cst_13 = arith.constant 0.000000e+00 : f32
    %14 = vector.broadcast %cst_13 : f32 to vector<16x1x128xf32>
    %c1 = arith.constant 1 : index
    %c0_14 = arith.constant 0 : index
    %c0_15 = arith.constant 0 : index
    %15 = vector.load %arg8[%c1, %c0_14, %c0_15] : memref<18x18x128xf32, #tpu.memory_space<vmem>>, vector<16x1x128xf32>
    tpu.vector_store %arg8[%c1, %c0_14, %c0_15], %14 {strides = array<i32>} : memref<18x18x128xf32, #tpu.memory_space<vmem>>, vector<16x1x128xf32>,
    %cst_16 = arith.constant 0.000000e+00 : f32
    %16 = vector.broadcast %cst_16 : f32 to vector<16x1x128xf32>
    %c1_17 = arith.constant 1 : index
    %c17_18 = arith.constant 17 : index
    %c0_19 = arith.constant 0 : index
    %17 = vector.load %arg8[%c1_17, %c17_18, %c0_19] : memref<18x18x128xf32, #tpu.memory_space<vmem>>, vector<16x1x128xf32>
    tpu.vector_store %arg8[%c1_17, %c17_18, %c0_19], %16 {strides = array<i32>} : memref<18x18x128xf32, #tpu.memory_space<vmem>>, vector<16x1x128xf32>,
    %18 = vector.shape_cast %9 : vector<256x128xf32> to vector<16x16x128xf32>
    %c1_20 = arith.constant 1 : index
    %c1_21 = arith.constant 1 : index
    %c0_22 = arith.constant 0 : index
    %19 = vector.load %arg8[%c1_20, %c1_21, %c0_22] : memref<18x18x128xf32, #tpu.memory_space<vmem>>, vector<16x16x128xf32>
    tpu.vector_store %arg8[%c1_20, %c1_21, %c0_22], %18 {strides = array<i32>} : memref<18x18x128xf32, #tpu.memory_space<vmem>>, vector<16x16x128xf32>,
    %c0_23 = arith.constant 0 : index
    %c0_24 = arith.constant 0 : index
    %c0_25 = arith.constant 0 : index
    %20 = vector.load %arg8[%c0_23, %c0_24, %c0_25] : memref<18x18x128xf32, #tpu.memory_space<vmem>>, vector<16x16x128xf32>
    %21 = arith.truncf %20 : vector<16x16x128xf32> to vector<16x16x128xbf16>
    %22 = vector.shape_cast %21 : vector<16x16x128xbf16> to vector<256x128xbf16>
    %c0_26 = arith.constant 0 : index
    %c1_27 = arith.constant 1 : index
    %c0_28 = arith.constant 0 : index
    %23 = vector.load %arg8[%c0_26, %c1_27, %c0_28] : memref<18x18x128xf32, #tpu.memory_space<vmem>>, vector<16x16x128xf32>
    %24 = arith.truncf %23 : vector<16x16x128xf32> to vector<16x16x128xbf16>
    %25 = vector.shape_cast %24 : vector<16x16x128xbf16> to vector<256x128xbf16>
    %c0_29 = arith.constant 0 : index
    %c2 = arith.constant 2 : index
    %c0_30 = arith.constant 0 : index
    %26 = vector.load %arg8[%c0_29, %c2, %c0_30] : memref<18x18x128xf32, #tpu.memory_space<vmem>>, vector<16x16x128xf32>
    %27 = arith.truncf %26 : vector<16x16x128xf32> to vector<16x16x128xbf16>
    %28 = vector.shape_cast %27 : vector<16x16x128xbf16> to vector<256x128xbf16>
    %c1_31 = arith.constant 1 : index
    %c0_32 = arith.constant 0 : index
    %c0_33 = arith.constant 0 : index
    %29 = vector.load %arg8[%c1_31, %c0_32, %c0_33] : memref<18x18x128xf32, #tpu.memory_space<vmem>>, vector<16x16x128xf32>
    %30 = arith.truncf %29 : vector<16x16x128xf32> to vector<16x16x128xbf16>
    %31 = vector.shape_cast %30 : vector<16x16x128xbf16> to vector<256x128xbf16>
    %c1_34 = arith.constant 1 : index
    %c1_35 = arith.constant 1 : index
    %c0_36 = arith.constant 0 : index
    %32 = vector.load %arg8[%c1_34, %c1_35, %c0_36] : memref<18x18x128xf32, #tpu.memory_space<vmem>>, vector<16x16x128xf32>
    %33 = arith.truncf %32 : vector<16x16x128xf32> to vector<16x16x128xbf16>
    %34 = vector.shape_cast %33 : vector<16x16x128xbf16> to vector<256x128xbf16>
    %c1_37 = arith.constant 1 : index
    %c2_38 = arith.constant 2 : index
    %c0_39 = arith.constant 0 : index
    %35 = vector.load %arg8[%c1_37, %c2_38, %c0_39] : memref<18x18x128xf32, #tpu.memory_space<vmem>>, vector<16x16x128xf32>
    %36 = arith.truncf %35 : vector<16x16x128xf32> to vector<16x16x128xbf16>
    %37 = vector.shape_cast %36 : vector<16x16x128xbf16> to vector<256x128xbf16>
    %c2_40 = arith.constant 2 : index
    %c0_41 = arith.constant 0 : index
    %c0_42 = arith.constant 0 : index
    %38 = vector.load %arg8[%c2_40, %c0_41, %c0_42] : memref<18x18x128xf32, #tpu.memory_space<vmem>>, vector<16x16x128xf32>
    %39 = arith.truncf %38 : vector<16x16x128xf32> to vector<16x16x128xbf16>
    %40 = vector.shape_cast %39 : vector<16x16x128xbf16> to vector<256x128xbf16>
    %c2_43 = arith.constant 2 : index
    %c1_44 = arith.constant 1 : index
    %c0_45 = arith.constant 0 : index
    %41 = vector.load %arg8[%c2_43, %c1_44, %c0_45] : memref<18x18x128xf32, #tpu.memory_space<vmem>>, vector<16x16x128xf32>
    %42 = arith.truncf %41 : vector<16x16x128xf32> to vector<16x16x128xbf16>
    %43 = vector.shape_cast %42 : vector<16x16x128xbf16> to vector<256x128xbf16>
    %c2_46 = arith.constant 2 : index
    %c2_47 = arith.constant 2 : index
    %c0_48 = arith.constant 0 : index
    %44 = vector.load %arg8[%c2_46, %c2_47, %c0_48] : memref<18x18x128xf32, #tpu.memory_space<vmem>>, vector<16x16x128xf32>
    %45 = arith.truncf %44 : vector<16x16x128xf32> to vector<16x16x128xbf16>
    %46 = vector.shape_cast %45 : vector<16x16x128xbf16> to vector<256x128xbf16>
    %47 = tpu.concatenate %22, %25, %28, %31, %34, %37, %40, %43, %46 in 1 : vector<256x128xbf16>, vector<256x128xbf16>, vector<256x128xbf16>, vector<256x128xbf16>, vector<256x128xbf16>, vector<256x128xbf16>, vector<256x128xbf16>, vector<256x128xbf16>, vector<256x128xbf16> -> vector<256x1152xbf16>
    %c0_49 = arith.constant 0 : index
    %c0_50 = arith.constant 0 : index
    %48 = vector.load %arg4[%c0_49, %c0_50] : memref<1152x128xbf16, #tpu.memory_space<vmem>>, vector<1152x128xbf16>
    %cst_51 = arith.constant dense<0.000000e+00> : vector<256x128xf32>
    %49 = tpu.matmul %47, %48, %cst_51 {dimension_numbers = #tpu.dot_dimension_numbers<[1], [0], [0], [1], [0, 0, 1, 1], [], []>} : vector<256x1152xbf16>, vector<1152x128xbf16>, vector<256x128xf32> -> vector<256x128xf32>
    %c0_52 = arith.constant 0 : index
    %c0_53 = arith.constant 0 : index
    %c0_54 = arith.constant 0 : index
    %50 = vector.load %arg5[%c0_52, %c0_53, %c0_54] : memref<1x256x128xf32, #tpu.memory_space<vmem>>, vector<1x256x128xf32>
    %51 = vector.shape_cast %50 : vector<1x256x128xf32> to vector<256x128xf32>
    %52 = vector.shape_cast %49 : vector<256x128xf32> to vector<1x256x128xf32>
    tpu.vector_store %arg5[%c0_52, %c0_53, %c0_54], %52 {strides = array<i32>} : memref<1x256x128xf32, #tpu.memory_space<vmem>>, vector<1x256x128xf32>,
    %cst_55 = arith.constant dense<0.000000e+00> : vector<128xf32>
    %53 = vector.multi_reduction <add>, %49, %cst_55 [0] : vector<256x128xf32> to vector<128xf32>
    %54 = vector.shape_cast %53 : vector<128xf32> to vector<1x128xf32>
    %c0_56 = arith.constant 0 : index
    %c0_57 = arith.constant 0 : index
    %c0_58 = arith.constant 0 : index
    %55 = vector.load %arg6[%c0_56, %c0_57, %c0_58] : memref<1x1x128xf32, #tpu.memory_space<vmem>>, vector<1x1x128xf32>
    %56 = vector.shape_cast %55 : vector<1x1x128xf32> to vector<1x128xf32>
    %57 = vector.shape_cast %54 : vector<1x128xf32> to vector<1x1x128xf32>
    tpu.vector_store %arg6[%c0_56, %c0_57, %c0_58], %57 {strides = array<i32>} : memref<1x1x128xf32, #tpu.memory_space<vmem>>, vector<1x1x128xf32>,
    %58 = arith.mulf %49, %49 : vector<256x128xf32>
    %cst_59 = arith.constant dense<0.000000e+00> : vector<128xf32>
    %59 = vector.multi_reduction <add>, %58, %cst_59 [0] : vector<256x128xf32> to vector<128xf32>
    %60 = vector.shape_cast %59 : vector<128xf32> to vector<1x128xf32>
    %c0_60 = arith.constant 0 : index
    %c0_61 = arith.constant 0 : index
    %c0_62 = arith.constant 0 : index
    %61 = vector.load %arg7[%c0_60, %c0_61, %c0_62] : memref<1x1x128xf32, #tpu.memory_space<vmem>>, vector<1x1x128xf32>
    %62 = vector.shape_cast %61 : vector<1x1x128xf32> to vector<1x128xf32>
    %63 = vector.shape_cast %60 : vector<1x128xf32> to vector<1x1x128xf32>
    tpu.vector_store %arg7[%c0_60, %c0_61, %c0_62], %63 {strides = array<i32>} : memref<1x1x128xf32, #tpu.memory_space<vmem>>, vector<1x1x128xf32>,
    return
  }
  func.func @transform_0(%arg0: i32) -> (i32, i32, i32) {
    %c0_i32 = arith.constant 0 : i32
    %c0_i32_0 = arith.constant 0 : i32
    %c0_i32_1 = arith.constant 0 : i32
    return %arg0, %c0_i32, %c0_i32_0 : i32, i32, i32
  }
  func.func @transform_1(%arg0: i32) -> (i32, i32) {
    %c0_i32 = arith.constant 0 : i32
    %c0_i32_0 = arith.constant 0 : i32
    %c0_i32_1 = arith.constant 0 : i32
    return %c0_i32, %c0_i32_0 : i32, i32
  }
  func.func @transform_2(%arg0: i32) -> (i32, i32) {
    %c0_i32 = arith.constant 0 : i32
    %c0_i32_0 = arith.constant 0 : i32
    %c0_i32_1 = arith.constant 0 : i32
    return %c0_i32, %c0_i32_0 : i32, i32
  }
  func.func @transform_3(%arg0: i32) -> (i32, i32) {
    %c0_i32 = arith.constant 0 : i32
    %c0_i32_0 = arith.constant 0 : i32
    %c0_i32_1 = arith.constant 0 : i32
    return %c0_i32, %c0_i32_0 : i32, i32
  }
  func.func @transform_4(%arg0: i32) -> (i32, i32, i32) {
    %c0_i32 = arith.constant 0 : i32
    %c0_i32_0 = arith.constant 0 : i32
    %c0_i32_1 = arith.constant 0 : i32
    return %arg0, %c0_i32, %c0_i32_0 : i32, i32, i32
  }
  func.func @transform_5(%arg0: i32) -> (i32, i32, i32) {
    %c0_i32 = arith.constant 0 : i32
    %c0_i32_0 = arith.constant 0 : i32
    %c0_i32_1 = arith.constant 0 : i32
    return %arg0, %c0_i32, %c0_i32_0 : i32, i32, i32
  }
  func.func @transform_6(%arg0: i32) -> (i32, i32, i32) {
    %c0_i32 = arith.constant 0 : i32
    %c0_i32_0 = arith.constant 0 : i32
    %c0_i32_1 = arith.constant 0 : i32
    return %arg0, %c0_i32, %c0_i32_0 : i32, i32, i32
  }
}

</mosaic_0001>

<llo_original>
// kernel: resblock_forward.5
$region0: #{resblock_forward.5}
  #allocation0 [shape = 'u32[]', space=smem, size = 0x4, offset = 0x4, fixed_abs, tag = 'smem constant byte address 0x4 - core index']
  #allocation1 [shape = 'u32[72,128]{1,0:T(1,128)}', space=vmem, size = 0x9000, scoped, tag = 'internal scratch']
  %s0 = inlined_call_operand.vmem [shape: f32[2,256,128], index: 0, kind: input, shape index: {}]
  %s1 = inlined_call_operand.vmem [shape: f32[1,128], index: 1, kind: input, shape index: {}]
  %s2 = inlined_call_operand.vmem [shape: f32[1,128], index: 2, kind: input, shape index: {}]
  %s3 = inlined_call_operand.vmem [shape: f32[2,256,128], index: 3, kind: input, shape index: {}]
  %s4 = inlined_call_operand.vmem [shape: f32[1,128], index: 4, kind: input, shape index: {}]
  %s5 = inlined_call_operand.vmem [shape: f32[1,128], index: 5, kind: input, shape index: {}]
  %s6 = inlined_call_operand.vmem [shape: f32[2,256,128], index: 6, kind: output, shape index: {}]
  %s7 = sld [smem:[#allocation0]]
  $region57: #{resblock_forward.5} parent=0
    _
  %s9 = ssub.s32 1, %s7
  %s10 = scalar_select 0, %s9, %s7
  loop: start=0, step=1, limit=4
  $region2: #{resblock_forward.5} parent=0 // loop_pre_header
    _
  $region3: #{resblock_forward.5} parent=0 // loop_header
    %s12 = sphi 0, %s16
    %p13 = scmp.ge.s32.totalorder %s12, 4
    %s22 = sphi 0, %s24
    %s25 = sphi 0, %s22
    %s26 = sphi 0, %s25
    %s42 = sphi 0, %s26
    %s46 = sphi 0, %s46
    %s48 = sphi 0, %s46
    %s49 = sphi 0, %s48
    %s63 = sphi 0, %s49
    %s67 = sphi 0, %s67
    %s69 = sphi 0, %s67
    %s70 = sphi 0, %s69
    %s84 = sphi 0, %s70
    %s90 = sphi 0, %s92
    %s93 = sphi 0, %s90
    %s94 = sphi 0, %s93
    %s110 = sphi 0, %s94
    %s114 = sphi 0, %s114
    %s116 = sphi 0, %s114
    %s117 = sphi 0, %s116
    %s131 = sphi 0, %s117
    %s135 = sphi 0, %s135
    %s137 = sphi 0, %s135
    %s138 = sphi 0, %s137
    %s152 = sphi 0, %s138
    %s158 = sphi 0, %s160
    %s161 = sphi 0, %s158
    %s162 = sphi 0, %s161
    %s178 = sphi 0, %s162
  $region4: #{resblock_forward.5} parent=0 // loop_header_branch
    %15 = sbr.rel (%p13) target = $region8
  $region5: #{resblock_forward.5} parent=0 // loop_body
    %s17 = ssub.s32 %s12, 1
    %s18 = ssub.s32 %s12, 2
    %s19 = sadd.s32 %s12, 1
    %s20 = ssub.s32 %s12, %s19
    %p21 = scmp.eq.s32.totalorder %s20, 0
    %s23 = sadd.s32 %s22, 1
    %s24 = scalar_select %p21, %s22, %s23
    %p27 = pneg %p21
    %p28 = scmp.eq.s32.totalorder %s12, 1
    %p29 = por %p27, %p28
    %p30 = scmp.ne.s32.totalorder %s22, %s25
    %p31 = scmp.eq.s32.totalorder %s12, 0
    %p32 = por %p30, %p31
    %p33 = scmp.ne.s32.totalorder %s22, %s25
    %p34 = scmp.eq.s32.totalorder %s17, 1
    %p35 = por %p33, %p34
    %p36 = scmp.ne.s32.totalorder %s25, %s26
    %p37 = scmp.eq.s32.totalorder %s17, 0
    %p38 = por %p36, %p37
    %p39 = scmp.ne.s32.totalorder %s25, %s26
    %p40 = scmp.eq.s32.totalorder %s18, 1
    %p41 = por %p39, %p40
    %p43 = scmp.ne.s32.totalorder %s26, %s42
    %p44 = scmp.eq.s32.totalorder %s18, 0
    %p45 = por %p43, %p44
    %s47 = sadd.s32 %s46, 1
    %p50 = scmp.eq.s32.totalorder %s12, 1
    %p51 = scmp.ne.s32.totalorder %s46, %s48
    %p52 = scmp.eq.s32.totalorder %s12, 0
    %p53 = por %p51, %p52
    %p54 = scmp.ne.s32.totalorder %s46, %s48
    %p55 = scmp.eq.s32.totalorder %s17, 1
    %p56 = por %p54, %p55
    %p57 = scmp.ne.s32.totalorder %s48, %s49
    %p58 = scmp.eq.s32.totalorder %s17, 0
    %p59 = por %p57, %p58
    %p60 = scmp.ne.s32.totalorder %s48, %s49
    %p61 = scmp.eq.s32.totalorder %s18, 1
    %p62 = por %p60, %p61
    %p64 = scmp.ne.s32.totalorder %s49, %s63
    %p65 = scmp.eq.s32.totalorder %s18, 0
    %p66 = por %p64, %p65
    %s68 = sadd.s32 %s67, 1
    %p71 = scmp.eq.s32.totalorder %s12, 1
    %p72 = scmp.ne.s32.totalorder %s67, %s69
    %p73 = scmp.eq.s32.totalorder %s12, 0
    %p74 = por %p72, %p73
    %p75 = scmp.ne.s32.totalorder %s67, %s69
    %p76 = scmp.eq.s32.totalorder %s17, 1
    %p77 = por %p75, %p76
    %p78 = scmp.ne.s32.totalorder %s69, %s70
    %p79 = scmp.eq.s32.totalorder %s17, 0
    %p80 = por %p78, %p79
    %p81 = scmp.ne.s32.totalorder %s69, %s70
    %p82 = scmp.eq.s32.totalorder %s18, 1
    %p83 = por %p81, %p82
    %p85 = scmp.ne.s32.totalorder %s70, %s84
    %p86 = scmp.eq.s32.totalorder %s18, 0
    %p87 = por %p85, %p86
    %s88 = ssub.s32 %s12, %s19
    %p89 = scmp.eq.s32.totalorder %s88, 0
    %s91 = sadd.s32 %s90, 1
    %s92 = scalar_select %p89, %s90, %s91
    %p95 = pneg %p89
    %p96 = scmp.eq.s32.totalorder %s12, 1
    %p97 = por %p95, %p96
    %p98 = scmp.ne.s32.totalorder %s90, %s93
    %p99 = scmp.eq.s32.totalorder %s12, 0
    %p100 = por %p98, %p99
    %p101 = scmp.ne.s32.totalorder %s90, %s93
    %p102 = scmp.eq.s32.totalorder %s17, 1
    %p103 = por %p101, %p102
    %p104 = scmp.ne.s32.totalorder %s93, %s94
    %p105 = scmp.eq.s32.totalorder %s17, 0
    %p106 = por %p104, %p105
    %p107 = scmp.ne.s32.totalorder %s93, %s94
    %p108 = scmp.eq.s32.totalorder %s18, 1
    %p109 = por %p107, %p108
    %p111 = scmp.ne.s32.totalorder %s94, %s110
    %p112 = scmp.eq.s32.totalorder %s18, 0
    %p113 = por %p111, %p112
    %s115 = sadd.s32 %s114, 1
    %p118 = scmp.eq.s32.totalorder %s12, 1
    %p119 = scmp.ne.s32.totalorder %s114, %s116
    %p120 = scmp.eq.s32.totalorder %s12, 0
    %p121 = por %p119, %p120
    %p122 = scmp.ne.s32.totalorder %s114, %s116
    %p123 = scmp.eq.s32.totalorder %s17, 1
    %p124 = por %p122, %p123
    %p125 = scmp.ne.s32.totalorder %s116, %s117
    %p126 = scmp.eq.s32.totalorder %s17, 0
    %p127 = por %p125, %p126
    %p128 = scmp.ne.s32.totalorder %s116, %s117
    %p129 = scmp.eq.s32.totalorder %s18, 1
    %p130 = por %p128, %p129
    %p132 = scmp.ne.s32.totalorder %s117, %s131
    %p133 = scmp.eq.s32.totalorder %s18, 0
    %p134 = por %p132, %p133
    %s136 = sadd.s32 %s135, 1
    %p139 = scmp.eq.s32.totalorder %s12, 1
    %p140 = scmp.ne.s32.totalorder %s135, %s137
    %p141 = scmp.eq.s32.totalorder %s12, 0
    %p142 = por %p140, %p141
    %p143 = scmp.ne.s32.totalorder %s135, %s137
    %p144 = scmp.eq.s32.totalorder %s17, 1
    %p145 = por %p143, %p144
    %p146 = scmp.ne.s32.totalorder %s137, %s138
    %p147 = scmp.eq.s32.totalorder %s17, 0
    %p148 = por %p146, %p147
    %p149 = scmp.ne.s32.totalorder %s137, %s138
    %p150 = scmp.eq.s32.totalorder %s18, 1
    %p151 = por %p149, %p150
    %p153 = scmp.ne.s32.totalorder %s138, %s152
    %p154 = scmp.eq.s32.totalorder %s18, 0
    %p155 = por %p153, %p154
    %s156 = ssub.s32 %s12, %s19
    %p157 = scmp.eq.s32.totalorder %s156, 0
    %s159 = sadd.s32 %s158, 1
    %s160 = scalar_select %p157, %s158, %s159
    %p163 = pneg %p157
    %p164 = scmp.eq.s32.totalorder %s12, 1
    %p165 = por %p163, %p164
    %p166 = scmp.ne.s32.totalorder %s158, %s161
    %p167 = scmp.eq.s32.totalorder %s12, 0
    %p168 = por %p166, %p167
    %p169 = scmp.ne.s32.totalorder %s158, %s161
    %p170 = scmp.eq.s32.totalorder %s17, 1
    %p171 = por %p169, %p170
    %p172 = scmp.ne.s32.totalorder %s161, %s162
    %p173 = scmp.eq.s32.totalorder %s17, 0
    %p174 = por %p172, %p173
    %p175 = scmp.ne.s32.totalorder %s161, %s162
    %p176 = scmp.eq.s32.totalorder %s18, 1
    %p177 = por %p175, %p176
    %p179 = scmp.ne.s32.totalorder %s162, %s178
    %p180 = scmp.eq.s32.totalorder %s18, 0
    %p181 = por %p179, %p180
    %p182 = scmp.le.s32.totalorder 1, %s12
    %p183 = scmp.lt.s32.totalorder %s12, 3
    %p184 = pnand %p182, %p183
    %p185 = pneg %p184
    // Predicated region
    $region9: #{resblock_forward.5} parent=5 // pred_check
      _
    $region10: #{resblock_forward.5} parent=5 // pred_check_branch
      %187 = sbr.rel (%p184) target = $region12
    $region11: #{resblock_forward.5} parent=5 // pred_region
      %s188 = ssub.s32 %s12, 1
      // Predicated region
      $region13: #{resblock_forward.5} parent=11 // pred_check
        %p189 = pneg %p59
      $region14: #{resblock_forward.5} parent=11 // pred_check_branch
        %191 = sbr.rel (%p189) target = $region16
      $region15: #{resblock_forward.5} parent=11 // pred_region
        _
      $region16: #{resblock_forward.5} parent=11 // pred_fallthru
        _
      // Predicated region
      $region17: #{resblock_forward.5} parent=11 // pred_check
        %p192 = pneg %p80
      $region18: #{resblock_forward.5} parent=11 // pred_check_branch
        %194 = sbr.rel (%p192) target = $region20
      $region19: #{resblock_forward.5} parent=11 // pred_region
        _
      $region20: #{resblock_forward.5} parent=11 // pred_fallthru
        _
      // Predicated region
      $region21: #{resblock_forward.5} parent=11 // pred_check
        %p195 = pneg %p127
      $region22: #{resblock_forward.5} parent=11 // pred_check_branch
        %197 = sbr.rel (%p195) target = $region24
      $region23: #{resblock_forward.5} parent=11 // pred_region
        _
      $region24: #{resblock_forward.5} parent=11 // pred_fallthru
        _
      // Predicated region
      $region25: #{resblock_forward.5} parent=11 // pred_check
        %p198 = pneg %p148
      $region26: #{resblock_forward.5} parent=11 // pred_check_branch
        %200 = sbr.rel (%p198) target = $region28
      $region27: #{resblock_forward.5} parent=11 // pred_region
        _
      $region28: #{resblock_forward.5} parent=11 // pred_fallthru
        _
    $region12: #{resblock_forward.5} parent=5 // pred_fallthru
      _
    %p201 = scmp.lt.s32.totalorder %s12, 2
    // Predicated region
    $region29: #{resblock_forward.5} parent=5 // pred_check
      %p202 = pneg %p201
    $region30: #{resblock_forward.5} parent=5 // pred_check_branch
      %204 = sbr.rel (%p202) target = $region32
    $region31: #{resblock_forward.5} parent=5 // pred_region
      // Predicated region
      $region33: #{resblock_forward.5} parent=31 // pred_check
        %p205 = pneg %p32
      $region34: #{resblock_forward.5} parent=31 // pred_check_branch
        %207 = sbr.rel (%p205) target = $region36
      $region35: #{resblock_forward.5} parent=31 // pred_region
        %p208 = scmp.lt.s32.totalorder %s12, 1
        %s209 = scalar_select %p208, %s12, 1
        %s210 = smul.addr %s209, 32
        %s211 = smul.addr %s210, 8
        %s212 = scalar_lea.vmem %s0, %s211
      $region36: #{resblock_forward.5} parent=31 // pred_fallthru
        _
      // Predicated region
      $region37: #{resblock_forward.5} parent=31 // pred_check
        %p213 = pneg %p100
      $region38: #{resblock_forward.5} parent=31 // pred_check_branch
        %215 = sbr.rel (%p213) target = $region40
      $region39: #{resblock_forward.5} parent=31 // pred_region
        %p216 = scmp.lt.s32.totalorder %s12, 1
        %s217 = scalar_select %p216, %s12, 1
        %s218 = smul.addr %s217, 32
        %s219 = smul.addr %s218, 8
        %s220 = scalar_lea.vmem %s3, %s219
      $region40: #{resblock_forward.5} parent=31 // pred_fallthru
        _
    $region32: #{resblock_forward.5} parent=5 // pred_fallthru
      _
    %p221 = scmp.le.s32.totalorder 1, %s12
    %p222 = scmp.lt.s32.totalorder %s12, 3
    %p223 = pnand %p221, %p222
    %p224 = pneg %p223
    // Predicated region
    $region41: #{resblock_forward.5} parent=5 // pred_check
      _
    $region42: #{resblock_forward.5} parent=5 // pred_check_branch
      %226 = sbr.rel (%p223) target = $region44
    $region43: #{resblock_forward.5} parent=5 // pred_region
      %s227 = ssub.s32 %s12, 1
      %p228 = scmp.lt.s32.totalorder %s17, 1
      %s229 = scalar_select %p228, %s17, 1
      %s230 = smul.addr %s229, 32
      %s231 = smul.addr %s230, 8
      %s232 = scalar_lea.vmem %s0, %s231
      %p233 = pneg %p38
      %p234 = pneg %p35
      %p235 = pneg %p59
      %p236 = pneg %p56
      %p237 = pneg %p80
      %p238 = pneg %p77
      %p239 = scmp.lt.s32.totalorder %s17, 1
      %s240 = scalar_select %p239, %s17, 1
      %s241 = smul.addr %s240, 32
      %s242 = smul.addr %s241, 8
      %s243 = scalar_lea.vmem %s3, %s242
      %p244 = pneg %p106
      %p245 = pneg %p103
      %p246 = pneg %p127
      %p247 = pneg %p124
      %p248 = pneg %p148
      %p249 = pneg %p145
      %p250 = pneg %p174
      %p251 = pneg %p171
      %p252 = scmp.lt.s32.totalorder %s17, 1
      %s253 = scalar_select %p252, %s17, 1
      %s254 = smul.addr %s253, 32
      %s255 = smul.addr %s254, 8
      %s256 = scalar_lea.vmem %s6, %s255
      %p257 = scmp.lt.s32.totalorder %s17, 1
      %s258 = scalar_select %p257, %s17, 1
      %s259 = smul.addr %s258, 32
      %s260 = smul.addr %s259, 8
      %s261 = scalar_lea.vmem %s0, %s260
      %p262 = scmp.lt.s32.totalorder %s17, 1
      %s263 = scalar_select %p262, %s17, 1
      %s264 = smul.addr %s263, 32
      %s265 = smul.addr %s264, 8
      %s266 = scalar_lea.vmem %s3, %s265
      %p267 = scmp.lt.s32.totalorder %s17, 1
      %s268 = scalar_select %p267, %s17, 1
      %s269 = smul.addr %s268, 32
      %s270 = smul.addr %s269, 8
      %s271 = scalar_lea.vmem %s6, %s270
      %v272 = vld [vmem:[%s261] sm:$0xff]
      %v273 = vld [vmem:[%s261 + $0x8] sm:$0xff]
      %v274 = vld [vmem:[%s261 + $0x10] sm:$0xff]
      %v275 = vld [vmem:[%s261 + $0x18] sm:$0xff]
      %v276 = vld [vmem:[%s261 + $0x20] sm:$0xff]
      %v277 = vld [vmem:[%s261 + $0x28] sm:$0xff]
      %v278 = vld [vmem:[%s261 + $0x30] sm:$0xff]
      %v279 = vld [vmem:[%s261 + $0x38] sm:$0xff]
      %v280 = vld [vmem:[%s261 + $0x40] sm:$0xff]
      %v281 = vld [vmem:[%s261 + $0x48] sm:$0xff]
      %v282 = vld [vmem:[%s261 + $0x50] sm:$0xff]
      %v283 = vld [vmem:[%s261 + $0x58] sm:$0xff]
      %v284 = vld [vmem:[%s261 + $0x60] sm:$0xff]
      %v285 = vld [vmem:[%s261 + $0x68] sm:$0xff]
      %v286 = vld [vmem:[%s261 + $0x70] sm:$0xff]
      %v287 = vld [vmem:[%s261 + $0x78] sm:$0xff]
      %v288 = vld [vmem:[%s261 + $0x80] sm:$0xff]
      %v289 = vld [vmem:[%s261 + $0x88] sm:$0xff]
      %v290 = vld [vmem:[%s261 + $0x90] sm:$0xff]
      %v291 = vld [vmem:[%s261 + $0x98] sm:$0xff]
      %v292 = vld [vmem:[%s261 + $0xa0] sm:$0xff]
      %v293 = vld [vmem:[%s261 + $0xa8] sm:$0xff]
      %v294 = vld [vmem:[%s261 + $0xb0] sm:$0xff]
      %v295 = vld [vmem:[%s261 + $0xb8] sm:$0xff]
      %v296 = vld [vmem:[%s261 + $0xc0] sm:$0xff]
      %v297 = vld [vmem:[%s261 + $0xc8] sm:$0xff]
      %v298 = vld [vmem:[%s261 + $0xd0] sm:$0xff]
      %v299 = vld [vmem:[%s261 + $0xd8] sm:$0xff]
      %v300 = vld [vmem:[%s261 + $0xe0] sm:$0xff]
      %v301 = vld [vmem:[%s261 + $0xe8] sm:$0xff]
      %v302 = vld [vmem:[%s261 + $0xf0] sm:$0xff]
      %v303 = vld [vmem:[%s261 + $0xf8] sm:$0xff]
      %v304 = vld [vmem:[%s1] sm:$0x1]
      %v306 = vperm.slane %v304, 0
      %v308 = vmul.f32 %v272, %v306
      %v309 = vmul.f32 %v273, %v306
      %v310 = vmul.f32 %v274, %v306
      %v311 = vmul.f32 %v275, %v306
      %v312 = vmul.f32 %v276, %v306
      %v313 = vmul.f32 %v277, %v306
      %v314 = vmul.f32 %v278, %v306
      %v315 = vmul.f32 %v279, %v306
      %v316 = vmul.f32 %v280, %v306
      %v317 = vmul.f32 %v281, %v306
      %v318 = vmul.f32 %v282, %v306
      %v319 = vmul.f32 %v283, %v306
      %v320 = vmul.f32 %v284, %v306
      %v321 = vmul.f32 %v285, %v306
      %v322 = vmul.f32 %v286, %v306
      %v323 = vmul.f32 %v287, %v306
      %v324 = vmul.f32 %v288, %v306
      %v325 = vmul.f32 %v289, %v306
      %v326 = vmul.f32 %v290, %v306
      %v327 = vmul.f32 %v291, %v306
      %v328 = vmul.f32 %v292, %v306
      %v329 = vmul.f32 %v293, %v306
      %v330 = vmul.f32 %v294, %v306
      %v331 = vmul.f32 %v295, %v306
      %v332 = vmul.f32 %v296, %v306
      %v333 = vmul.f32 %v297, %v306
      %v334 = vmul.f32 %v298, %v306
      %v335 = vmul.f32 %v299, %v306
      %v336 = vmul.f32 %v300, %v306
      %v337 = vmul.f32 %v301, %v306
      %v338 = vmul.f32 %v302, %v306
      %v339 = vmul.f32 %v303, %v306
      %v340 = vld [vmem:[%s2] sm:$0x1]
      %v342 = vperm.slane %v340, 0
      %v344 = vadd.f32 %v308, %v342
      %v345 = vadd.f32 %v309, %v342
      %v346 = vadd.f32 %v310, %v342
      %v347 = vadd.f32 %v311, %v342
      %v348 = vadd.f32 %v312, %v342
      %v349 = vadd.f32 %v313, %v342
      %v350 = vadd.f32 %v314, %v342
      %v351 = vadd.f32 %v315, %v342
      %v352 = vadd.f32 %v316, %v342
      %v353 = vadd.f32 %v317, %v342
      %v354 = vadd.f32 %v318, %v342
      %v355 = vadd.f32 %v319, %v342
      %v356 = vadd.f32 %v320, %v342
      %v357 = vadd.f32 %v321, %v342
      %v358 = vadd.f32 %v322, %v342
      %v359 = vadd.f32 %v323, %v342
      %v360 = vadd.f32 %v324, %v342
      %v361 = vadd.f32 %v325, %v342
      %v362 = vadd.f32 %v326, %v342
      %v363 = vadd.f32 %v327, %v342
      %v364 = vadd.f32 %v328, %v342
      %v365 = vadd.f32 %v329, %v342
      %v366 = vadd.f32 %v330, %v342
      %v367 = vadd.f32 %v331, %v342
      %v368 = vadd.f32 %v332, %v342
      %v369 = vadd.f32 %v333, %v342
      %v370 = vadd.f32 %v334, %v342
      %v371 = vadd.f32 %v335, %v342
      %v372 = vadd.f32 %v336, %v342
      %v373 = vadd.f32 %v337, %v342
      %v374 = vadd.f32 %v338, %v342
      %v375 = vadd.f32 %v339, %v342
      %v376 = vld [vmem:[%s266] sm:$0xff]
      %v377 = vld [vmem:[%s266 + $0x8] sm:$0xff]
      %v378 = vld [vmem:[%s266 + $0x10] sm:$0xff]
      %v379 = vld [vmem:[%s266 + $0x18] sm:$0xff]
      %v380 = vld [vmem:[%s266 + $0x20] sm:$0xff]
      %v381 = vld [vmem:[%s266 + $0x28] sm:$0xff]
      %v382 = vld [vmem:[%s266 + $0x30] sm:$0xff]
      %v383 = vld [vmem:[%s266 + $0x38] sm:$0xff]
      %v384 = vld [vmem:[%s266 + $0x40] sm:$0xff]
      %v385 = vld [vmem:[%s266 + $0x48] sm:$0xff]
      %v386 = vld [vmem:[%s266 + $0x50] sm:$0xff]
      %v387 = vld [vmem:[%s266 + $0x58] sm:$0xff]
      %v388 = vld [vmem:[%s266 + $0x60] sm:$0xff]
      %v389 = vld [vmem:[%s266 + $0x68] sm:$0xff]
      %v390 = vld [vmem:[%s266 + $0x70] sm:$0xff]
      %v391 = vld [vmem:[%s266 + $0x78] sm:$0xff]
      %v392 = vld [vmem:[%s266 + $0x80] sm:$0xff]
      %v393 = vld [vmem:[%s266 + $0x88] sm:$0xff]
      %v394 = vld [vmem:[%s266 + $0x90] sm:$0xff]
      %v395 = vld [vmem:[%s266 + $0x98] sm:$0xff]
      %v396 = vld [vmem:[%s266 + $0xa0] sm:$0xff]
      %v397 = vld [vmem:[%s266 + $0xa8] sm:$0xff]
      %v398 = vld [vmem:[%s266 + $0xb0] sm:$0xff]
      %v399 = vld [vmem:[%s266 + $0xb8] sm:$0xff]
      %v400 = vld [vmem:[%s266 + $0xc0] sm:$0xff]
      %v401 = vld [vmem:[%s266 + $0xc8] sm:$0xff]
      %v402 = vld [vmem:[%s266 + $0xd0] sm:$0xff]
      %v403 = vld [vmem:[%s266 + $0xd8] sm:$0xff]
      %v404 = vld [vmem:[%s266 + $0xe0] sm:$0xff]
      %v405 = vld [vmem:[%s266 + $0xe8] sm:$0xff]
      %v406 = vld [vmem:[%s266 + $0xf0] sm:$0xff]
      %v407 = vld [vmem:[%s266 + $0xf8] sm:$0xff]
      %v408 = vld [vmem:[%s4] sm:$0x1]
      %v410 = vperm.slane %v408, 0
      %v412 = vmul.f32 %v376, %v410
      %v413 = vmul.f32 %v377, %v410
      %v414 = vmul.f32 %v378, %v410
      %v415 = vmul.f32 %v379, %v410
      %v416 = vmul.f32 %v380, %v410
      %v417 = vmul.f32 %v381, %v410
      %v418 = vmul.f32 %v382, %v410
      %v419 = vmul.f32 %v383, %v410
      %v420 = vmul.f32 %v384, %v410
      %v421 = vmul.f32 %v385, %v410
      %v422 = vmul.f32 %v386, %v410
      %v423 = vmul.f32 %v387, %v410
      %v424 = vmul.f32 %v388, %v410
      %v425 = vmul.f32 %v389, %v410
      %v426 = vmul.f32 %v390, %v410
      %v427 = vmul.f32 %v391, %v410
      %v428 = vmul.f32 %v392, %v410
      %v429 = vmul.f32 %v393, %v410
      %v430 = vmul.f32 %v394, %v410
      %v431 = vmul.f32 %v395, %v410
      %v432 = vmul.f32 %v396, %v410
      %v433 = vmul.f32 %v397, %v410
      %v434 = vmul.f32 %v398, %v410
      %v435 = vmul.f32 %v399, %v410
      %v436 = vmul.f32 %v400, %v410
      %v437 = vmul.f32 %v401, %v410
      %v438 = vmul.f32 %v402, %v410
      %v439 = vmul.f32 %v403, %v410
      %v440 = vmul.f32 %v404, %v410
      %v441 = vmul.f32 %v405, %v410
      %v442 = vmul.f32 %v406, %v410
      %v443 = vmul.f32 %v407, %v410
      %v444 = vld [vmem:[%s5] sm:$0x1]
      %v446 = vperm.slane %v444, 0
      %v448 = vadd.f32 %v412, %v446
      %v449 = vadd.f32 %v413, %v446
      %v450 = vadd.f32 %v414, %v446
      %v451 = vadd.f32 %v415, %v446
      %v452 = vadd.f32 %v416, %v446
      %v453 = vadd.f32 %v417, %v446
      %v454 = vadd.f32 %v418, %v446
      %v455 = vadd.f32 %v419, %v446
      %v456 = vadd.f32 %v420, %v446
      %v457 = vadd.f32 %v421, %v446
      %v458 = vadd.f32 %v422, %v446
      %v459 = vadd.f32 %v423, %v446
      %v460 = vadd.f32 %v424, %v446
      %v461 = vadd.f32 %v425, %v446
      %v462 = vadd.f32 %v426, %v446
      %v463 = vadd.f32 %v427, %v446
      %v464 = vadd.f32 %v428, %v446
      %v465 = vadd.f32 %v429, %v446
      %v466 = vadd.f32 %v430, %v446
      %v467 = vadd.f32 %v431, %v446
      %v468 = vadd.f32 %v432, %v446
      %v469 = vadd.f32 %v433, %v446
      %v470 = vadd.f32 %v434, %v446
      %v471 = vadd.f32 %v435, %v446
      %v472 = vadd.f32 %v436, %v446
      %v473 = vadd.f32 %v437, %v446
      %v474 = vadd.f32 %v438, %v446
      %v475 = vadd.f32 %v439, %v446
      %v476 = vadd.f32 %v440, %v446
      %v477 = vadd.f32 %v441, %v446
      %v478 = vadd.f32 %v442, %v446
      %v479 = vadd.f32 %v443, %v446
      %v480 = vadd.f32 %v344, %v448
      %v481 = vadd.f32 %v345, %v449
      %v482 = vadd.f32 %v346, %v450
      %v483 = vadd.f32 %v347, %v451
      %v484 = vadd.f32 %v348, %v452
      %v485 = vadd.f32 %v349, %v453
      %v486 = vadd.f32 %v350, %v454
      %v487 = vadd.f32 %v351, %v455
      %v488 = vadd.f32 %v352, %v456
      %v489 = vadd.f32 %v353, %v457
      %v490 = vadd.f32 %v354, %v458
      %v491 = vadd.f32 %v355, %v459
      %v492 = vadd.f32 %v356, %v460
      %v493 = vadd.f32 %v357, %v461
      %v494 = vadd.f32 %v358, %v462
      %v495 = vadd.f32 %v359, %v463
      %v496 = vadd.f32 %v360, %v464
      %v497 = vadd.f32 %v361, %v465
      %v498 = vadd.f32 %v362, %v466
      %v499 = vadd.f32 %v363, %v467
      %v500 = vadd.f32 %v364, %v468
      %v501 = vadd.f32 %v365, %v469
      %v502 = vadd.f32 %v366, %v470
      %v503 = vadd.f32 %v367, %v471
      %v504 = vadd.f32 %v368, %v472
      %v505 = vadd.f32 %v369, %v473
      %v506 = vadd.f32 %v370, %v474
      %v507 = vadd.f32 %v371, %v475
      %v508 = vadd.f32 %v372, %v476
      %v509 = vadd.f32 %v373, %v477
      %v510 = vadd.f32 %v374, %v478
      %v511 = vadd.f32 %v375, %v479
      %v512 = vmax.f32 %v480, 0.0
      %v513 = vmax.f32 %v481, 0.0
      %v514 = vmax.f32 %v482, 0.0
      %v515 = vmax.f32 %v483, 0.0
      %v516 = vmax.f32 %v484, 0.0
      %v517 = vmax.f32 %v485, 0.0
      %v518 = vmax.f32 %v486, 0.0
      %v519 = vmax.f32 %v487, 0.0
      %v520 = vmax.f32 %v488, 0.0
      %v521 = vmax.f32 %v489, 0.0
      %v522 = vmax.f32 %v490, 0.0
      %v523 = vmax.f32 %v491, 0.0
      %v524 = vmax.f32 %v492, 0.0
      %v525 = vmax.f32 %v493, 0.0
      %v526 = vmax.f32 %v494, 0.0
      %v527 = vmax.f32 %v495, 0.0
      %v528 = vmax.f32 %v496, 0.0
      %v529 = vmax.f32 %v497, 0.0
      %v530 = vmax.f32 %v498, 0.0
      %v531 = vmax.f32 %v499, 0.0
      %v532 = vmax.f32 %v500, 0.0
      %v533 = vmax.f32 %v501, 0.0
      %v534 = vmax.f32 %v502, 0.0
      %v535 = vmax.f32 %v503, 0.0
      %v536 = vmax.f32 %v504, 0.0
      %v537 = vmax.f32 %v505, 0.0
      %v538 = vmax.f32 %v506, 0.0
      %v539 = vmax.f32 %v507, 0.0
      %v540 = vmax.f32 %v508, 0.0
      %v541 = vmax.f32 %v509, 0.0
      %v542 = vmax.f32 %v510, 0.0
      %v543 = vmax.f32 %v511, 0.0
      %544 = vst [vmem:[%s271] sm:$0xff] %v512
      %545 = vst [vmem:[%s271 + $0x8] sm:$0xff] %v513
      %546 = vst [vmem:[%s271 + $0x10] sm:$0xff] %v514
      %547 = vst [vmem:[%s271 + $0x18] sm:$0xff] %v515
      %548 = vst [vmem:[%s271 + $0x20] sm:$0xff] %v516
      %549 = vst [vmem:[%s271 + $0x28] sm:$0xff] %v517
      %550 = vst [vmem:[%s271 + $0x30] sm:$0xff] %v518
      %551 = vst [vmem:[%s271 + $0x38] sm:$0xff] %v519
      %552 = vst [vmem:[%s271 + $0x40] sm:$0xff] %v520
      %553 = vst [vmem:[%s271 + $0x48] sm:$0xff] %v521
      %554 = vst [vmem:[%s271 + $0x50] sm:$0xff] %v522
      %555 = vst [vmem:[%s271 + $0x58] sm:$0xff] %v523
      %556 = vst [vmem:[%s271 + $0x60] sm:$0xff] %v524
      %557 = vst [vmem:[%s271 + $0x68] sm:$0xff] %v525
      %558 = vst [vmem:[%s271 + $0x70] sm:$0xff] %v526
      %559 = vst [vmem:[%s271 + $0x78] sm:$0xff] %v527
      %560 = vst [vmem:[%s271 + $0x80] sm:$0xff] %v528
      %561 = vst [vmem:[%s271 + $0x88] sm:$0xff] %v529
      %562 = vst [vmem:[%s271 + $0x90] sm:$0xff] %v530
      %563 = vst [vmem:[%s271 + $0x98] sm:$0xff] %v531
      %564 = vst [vmem:[%s271 + $0xa0] sm:$0xff] %v532
      %565 = vst [vmem:[%s271 + $0xa8] sm:$0xff] %v533
      %566 = vst [vmem:[%s271 + $0xb0] sm:$0xff] %v534
      %567 = vst [vmem:[%s271 + $0xb8] sm:$0xff] %v535
      %568 = vst [vmem:[%s271 + $0xc0] sm:$0xff] %v536
      %569 = vst [vmem:[%s271 + $0xc8] sm:$0xff] %v537
      %570 = vst [vmem:[%s271 + $0xd0] sm:$0xff] %v538
      %571 = vst [vmem:[%s271 + $0xd8] sm:$0xff] %v539
      %572 = vst [vmem:[%s271 + $0xe0] sm:$0xff] %v540
      %573 = vst [vmem:[%s271 + $0xe8] sm:$0xff] %v541
      %574 = vst [vmem:[%s271 + $0xf0] sm:$0xff] %v542
      %575 = vst [vmem:[%s271 + $0xf8] sm:$0xff] %v543
      %p576 = scmp.lt.s32.totalorder %s17, 1
      %s577 = scalar_select %p576, %s17, 1
      %s578 = smul.addr %s577, 32
      %s579 = smul.addr %s578, 8
      %s580 = scalar_lea.vmem %s6, %s579
      // Predicated region
      $region45: #{resblock_forward.5} parent=43 // pred_check
        %p581 = pneg %p171
      $region46: #{resblock_forward.5} parent=43 // pred_check_branch
        %583 = sbr.rel (%p581) target = $region48
      $region47: #{resblock_forward.5} parent=43 // pred_region
        _
      $region48: #{resblock_forward.5} parent=43 // pred_fallthru
        _
    $region44: #{resblock_forward.5} parent=5 // pred_fallthru
      _
    %p584 = scmp.le.s32.totalorder 2, %s12
    // Predicated region
    $region49: #{resblock_forward.5} parent=5 // pred_check
      %p585 = pneg %p584
    $region50: #{resblock_forward.5} parent=5 // pred_check_branch
      %587 = sbr.rel (%p585) target = $region52
    $region51: #{resblock_forward.5} parent=5 // pred_region
      %s588 = ssub.s32 %s12, 2
      // Predicated region
      $region53: #{resblock_forward.5} parent=51 // pred_check
        %p589 = pneg %p177
      $region54: #{resblock_forward.5} parent=51 // pred_check_branch
        %591 = sbr.rel (%p589) target = $region56
      $region55: #{resblock_forward.5} parent=51 // pred_region
        %p592 = scmp.lt.s32.totalorder %s18, 1
        %s593 = scalar_select %p592, %s18, 1
        %s594 = smul.addr %s593, 32
        %s595 = smul.addr %s594, 8
        %s596 = scalar_lea.vmem %s6, %s595
      $region56: #{resblock_forward.5} parent=51 // pred_fallthru
        _
    $region52: #{resblock_forward.5} parent=5 // pred_fallthru
      _
  $region6: #{resblock_forward.5} parent=0 // loop_footer
    %s16 = sadd.s32 1, %s12
  $region7: #{resblock_forward.5} parent=0 // loop_footer_branch
    %11 = sbr.rel target = $region3
  $region8: #{resblock_forward.5} parent=0 // loop_exit
    _

// kernel: resblock_forward.3
$region0: #{resblock_forward.3}
  #allocation0 [shape = 'u32[]', space=smem, size = 0x4, offset = 0x4, fixed_abs, tag = 'smem constant byte address 0x4 - core index']
  #allocation1 [shape = 'u32[72,128]{1,0:T(1,128)}', space=vmem, size = 0x9000, scoped, tag = 'internal scratch']
  %s0 = inlined_call_operand.vmem [shape: bf16[2,256,36], index: 0, kind: input, shape index: {}]
  %s1 = inlined_call_operand.vmem [shape: bf16[2,256,4], index: 1, kind: input, shape index: {}]
  %s2 = inlined_call_operand.vmem [shape: bf16[36,128], index: 2, kind: input, shape index: {}]
  %s3 = inlined_call_operand.vmem [shape: bf16[4,128], index: 3, kind: input, shape index: {}]
  %s4 = inlined_call_operand.vmem [shape: f32[2,256,128], index: 4, kind: output, shape index: {0}]
  %s5 = inlined_call_operand.vmem [shape: f32[2,1,128], index: 5, kind: output, shape index: {1}]
  %s6 = inlined_call_operand.vmem [shape: f32[2,1,128], index: 6, kind: output, shape index: {2}]
  %s7 = inlined_call_operand.vmem [shape: f32[2,256,128], index: 7, kind: output, shape index: {3}]
  %s8 = inlined_call_operand.vmem [shape: f32[2,1,128], index: 8, kind: output, shape index: {4}]
  %s9 = inlined_call_operand.vmem [shape: f32[2,1,128], index: 9, kind: output, shape index: {5}]
  %10 = xla_tuple %s4, %s5, %s6, %s7, %s8, %s9
  %s11 = sld [smem:[#allocation0]]
  $region89: #{resblock_forward.3} parent=0
    _
  %s13 = ssub.s32 1, %s11
  %s14 = scalar_select 0, %s13, %s11
  loop: start=0, step=1, limit=4
  $region2: #{resblock_forward.3} parent=0 // loop_pre_header
    _
  $region3: #{resblock_forward.3} parent=0 // loop_header
    %s16 = sphi 0, %s20
    %p17 = scmp.ge.s32.totalorder %s16, 4
    %s26 = sphi 0, %s28
    %s29 = sphi 0, %s26
    %s30 = sphi 0, %s29
    %s46 = sphi 0, %s30
    %s52 = sphi 0, %s54
    %s55 = sphi 0, %s52
    %s56 = sphi 0, %s55
    %s72 = sphi 0, %s56
    %s76 = sphi 0, %s76
    %s78 = sphi 0, %s76
    %s79 = sphi 0, %s78
    %s93 = sphi 0, %s79
    %s97 = sphi 0, %s97
    %s99 = sphi 0, %s97
    %s100 = sphi 0, %s99
    %s114 = sphi 0, %s100
    %s120 = sphi 0, %s122
    %s123 = sphi 0, %s120
    %s124 = sphi 0, %s123
    %s140 = sphi 0, %s124
    %s146 = sphi 0, %s148
    %s149 = sphi 0, %s146
    %s150 = sphi 0, %s149
    %s166 = sphi 0, %s150
    %s172 = sphi 0, %s174
    %s175 = sphi 0, %s172
    %s176 = sphi 0, %s175
    %s192 = sphi 0, %s176
    %s198 = sphi 0, %s200
    %s201 = sphi 0, %s198
    %s202 = sphi 0, %s201
    %s218 = sphi 0, %s202
    %s224 = sphi 0, %s226
    %s227 = sphi 0, %s224
    %s228 = sphi 0, %s227
    %s244 = sphi 0, %s228
    %s250 = sphi 0, %s252
    %s253 = sphi 0, %s250
    %s254 = sphi 0, %s253
    %s270 = sphi 0, %s254
  $region4: #{resblock_forward.3} parent=0 // loop_header_branch
    %19 = sbr.rel (%p17) target = $region8
  $region5: #{resblock_forward.3} parent=0 // loop_body
    %s21 = ssub.s32 %s16, 1
    %s22 = ssub.s32 %s16, 2
    %s23 = sadd.s32 %s16, 1
    %s24 = ssub.s32 %s16, %s23
    %p25 = scmp.eq.s32.totalorder %s24, 0
    %s27 = sadd.s32 %s26, 1
    %s28 = scalar_select %p25, %s26, %s27
    %p31 = pneg %p25
    %p32 = scmp.eq.s32.totalorder %s16, 1
    %p33 = por %p31, %p32
    %p34 = scmp.ne.s32.totalorder %s26, %s29
    %p35 = scmp.eq.s32.totalorder %s16, 0
    %p36 = por %p34, %p35
    %p37 = scmp.ne.s32.totalorder %s26, %s29
    %p38 = scmp.eq.s32.totalorder %s21, 1
    %p39 = por %p37, %p38
    %p40 = scmp.ne.s32.totalorder %s29, %s30
    %p41 = scmp.eq.s32.totalorder %s21, 0
    %p42 = por %p40, %p41
    %p43 = scmp.ne.s32.totalorder %s29, %s30
    %p44 = scmp.eq.s32.totalorder %s22, 1
    %p45 = por %p43, %p44
    %p47 = scmp.ne.s32.totalorder %s30, %s46
    %p48 = scmp.eq.s32.totalorder %s22, 0
    %p49 = por %p47, %p48
    %s50 = ssub.s32 %s16, %s23
    %p51 = scmp.eq.s32.totalorder %s50, 0
    %s53 = sadd.s32 %s52, 1
    %s54 = scalar_select %p51, %s52, %s53
    %p57 = pneg %p51
    %p58 = scmp.eq.s32.totalorder %s16, 1
    %p59 = por %p57, %p58
    %p60 = scmp.ne.s32.totalorder %s52, %s55
    %p61 = scmp.eq.s32.totalorder %s16, 0
    %p62 = por %p60, %p61
    %p63 = scmp.ne.s32.totalorder %s52, %s55
    %p64 = scmp.eq.s32.totalorder %s21, 1
    %p65 = por %p63, %p64
    %p66 = scmp.ne.s32.totalorder %s55, %s56
    %p67 = scmp.eq.s32.totalorder %s21, 0
    %p68 = por %p66, %p67
    %p69 = scmp.ne.s32.totalorder %s55, %s56
    %p70 = scmp.eq.s32.totalorder %s22, 1
    %p71 = por %p69, %p70
    %p73 = scmp.ne.s32.totalorder %s56, %s72
    %p74 = scmp.eq.s32.totalorder %s22, 0
    %p75 = por %p73, %p74
    %s77 = sadd.s32 %s76, 1
    %p80 = scmp.eq.s32.totalorder %s16, 1
    %p81 = scmp.ne.s32.totalorder %s76, %s78
    %p82 = scmp.eq.s32.totalorder %s16, 0
    %p83 = por %p81, %p82
    %p84 = scmp.ne.s32.totalorder %s76, %s78
    %p85 = scmp.eq.s32.totalorder %s21, 1
    %p86 = por %p84, %p85
    %p87 = scmp.ne.s32.totalorder %s78, %s79
    %p88 = scmp.eq.s32.totalorder %s21, 0
    %p89 = por %p87, %p88
    %p90 = scmp.ne.s32.totalorder %s78, %s79
    %p91 = scmp.eq.s32.totalorder %s22, 1
    %p92 = por %p90, %p91
    %p94 = scmp.ne.s32.totalorder %s79, %s93
    %p95 = scmp.eq.s32.totalorder %s22, 0
    %p96 = por %p94, %p95
    %s98 = sadd.s32 %s97, 1
    %p101 = scmp.eq.s32.totalorder %s16, 1
    %p102 = scmp.ne.s32.totalorder %s97, %s99
    %p103 = scmp.eq.s32.totalorder %s16, 0
    %p104 = por %p102, %p103
    %p105 = scmp.ne.s32.totalorder %s97, %s99
    %p106 = scmp.eq.s32.totalorder %s21, 1
    %p107 = por %p105, %p106
    %p108 = scmp.ne.s32.totalorder %s99, %s100
    %p109 = scmp.eq.s32.totalorder %s21, 0
    %p110 = por %p108, %p109
    %p111 = scmp.ne.s32.totalorder %s99, %s100
    %p112 = scmp.eq.s32.totalorder %s22, 1
    %p113 = por %p111, %p112
    %p115 = scmp.ne.s32.totalorder %s100, %s114
    %p116 = scmp.eq.s32.totalorder %s22, 0
    %p117 = por %p115, %p116
    %s118 = ssub.s32 %s16, %s23
    %p119 = scmp.eq.s32.totalorder %s118, 0
    %s121 = sadd.s32 %s120, 1
    %s122 = scalar_select %p119, %s120, %s121
    %p125 = pneg %p119
    %p126 = scmp.eq.s32.totalorder %s16, 1
    %p127 = por %p125, %p126
    %p128 = scmp.ne.s32.totalorder %s120, %s123
    %p129 = scmp.eq.s32.totalorder %s16, 0
    %p130 = por %p128, %p129
    %p131 = scmp.ne.s32.totalorder %s120, %s123
    %p132 = scmp.eq.s32.totalorder %s21, 1
    %p133 = por %p131, %p132
    %p134 = scmp.ne.s32.totalorder %s123, %s124
    %p135 = scmp.eq.s32.totalorder %s21, 0
    %p136 = por %p134, %p135
    %p137 = scmp.ne.s32.totalorder %s123, %s124
    %p138 = scmp.eq.s32.totalorder %s22, 1
    %p139 = por %p137, %p138
    %p141 = scmp.ne.s32.totalorder %s124, %s140
    %p142 = scmp.eq.s32.totalorder %s22, 0
    %p143 = por %p141, %p142
    %s144 = ssub.s32 %s16, %s23
    %p145 = scmp.eq.s32.totalorder %s144, 0
    %s147 = sadd.s32 %s146, 1
    %s148 = scalar_select %p145, %s146, %s147
    %p151 = pneg %p145
    %p152 = scmp.eq.s32.totalorder %s16, 1
    %p153 = por %p151, %p152
    %p154 = scmp.ne.s32.totalorder %s146, %s149
    %p155 = scmp.eq.s32.totalorder %s16, 0
    %p156 = por %p154, %p155
    %p157 = scmp.ne.s32.totalorder %s146, %s149
    %p158 = scmp.eq.s32.totalorder %s21, 1
    %p159 = por %p157, %p158
    %p160 = scmp.ne.s32.totalorder %s149, %s150
    %p161 = scmp.eq.s32.totalorder %s21, 0
    %p162 = por %p160, %p161
    %p163 = scmp.ne.s32.totalorder %s149, %s150
    %p164 = scmp.eq.s32.totalorder %s22, 1
    %p165 = por %p163, %p164
    %p167 = scmp.ne.s32.totalorder %s150, %s166
    %p168 = scmp.eq.s32.totalorder %s22, 0
    %p169 = por %p167, %p168
    %s170 = ssub.s32 %s16, %s23
    %p171 = scmp.eq.s32.totalorder %s170, 0
    %s173 = sadd.s32 %s172, 1
    %s174 = scalar_select %p171, %s172, %s173
    %p177 = pneg %p171
    %p178 = scmp.eq.s32.totalorder %s16, 1
    %p179 = por %p177, %p178
    %p180 = scmp.ne.s32.totalorder %s172, %s175
    %p181 = scmp.eq.s32.totalorder %s16, 0
    %p182 = por %p180, %p181
    %p183 = scmp.ne.s32.totalorder %s172, %s175
    %p184 = scmp.eq.s32.totalorder %s21, 1
    %p185 = por %p183, %p184
    %p186 = scmp.ne.s32.totalorder %s175, %s176
    %p187 = scmp.eq.s32.totalorder %s21, 0
    %p188 = por %p186, %p187
    %p189 = scmp.ne.s32.totalorder %s175, %s176
    %p190 = scmp.eq.s32.totalorder %s22, 1
    %p191 = por %p189, %p190
    %p193 = scmp.ne.s32.totalorder %s176, %s192
    %p194 = scmp.eq.s32.totalorder %s22, 0
    %p195 = por %p193, %p194
    %s196 = ssub.s32 %s16, %s23
    %p197 = scmp.eq.s32.totalorder %s196, 0
    %s199 = sadd.s32 %s198, 1
    %s200 = scalar_select %p197, %s198, %s199
    %p203 = pneg %p197
    %p204 = scmp.eq.s32.totalorder %s16, 1
    %p205 = por %p203, %p204
    %p206 = scmp.ne.s32.totalorder %s198, %s201
    %p207 = scmp.eq.s32.totalorder %s16, 0
    %p208 = por %p206, %p207
    %p209 = scmp.ne.s32.totalorder %s198, %s201
    %p210 = scmp.eq.s32.totalorder %s21, 1
    %p211 = por %p209, %p210
    %p212 = scmp.ne.s32.totalorder %s201, %s202
    %p213 = scmp.eq.s32.totalorder %s21, 0
    %p214 = por %p212, %p213
    %p215 = scmp.ne.s32.totalorder %s201, %s202
    %p216 = scmp.eq.s32.totalorder %s22, 1
    %p217 = por %p215, %p216
    %p219 = scmp.ne.s32.totalorder %s202, %s218
    %p220 = scmp.eq.s32.totalorder %s22, 0
    %p221 = por %p219, %p220
    %s222 = ssub.s32 %s16, %s23
    %p223 = scmp.eq.s32.totalorder %s222, 0
    %s225 = sadd.s32 %s224, 1
    %s226 = scalar_select %p223, %s224, %s225
    %p229 = pneg %p223
    %p230 = scmp.eq.s32.totalorder %s16, 1
    %p231 = por %p229, %p230
    %p232 = scmp.ne.s32.totalorder %s224, %s227
    %p233 = scmp.eq.s32.totalorder %s16, 0
    %p234 = por %p232, %p233
    %p235 = scmp.ne.s32.totalorder %s224, %s227
    %p236 = scmp.eq.s32.totalorder %s21, 1
    %p237 = por %p235, %p236
    %p238 = scmp.ne.s32.totalorder %s227, %s228
    %p239 = scmp.eq.s32.totalorder %s21, 0
    %p240 = por %p238, %p239
    %p241 = scmp.ne.s32.totalorder %s227, %s228
    %p242 = scmp.eq.s32.totalorder %s22, 1
    %p243 = por %p241, %p242
    %p245 = scmp.ne.s32.totalorder %s228, %s244
    %p246 = scmp.eq.s32.totalorder %s22, 0
    %p247 = por %p245, %p246
    %s248 = ssub.s32 %s16, %s23
    %p249 = scmp.eq.s32.totalorder %s248, 0
    %s251 = sadd.s32 %s250, 1
    %s252 = scalar_select %p249, %s250, %s251
    %p255 = pneg %p249
    %p256 = scmp.eq.s32.totalorder %s16, 1
    %p257 = por %p255, %p256
    %p258 = scmp.ne.s32.totalorder %s250, %s253
    %p259 = scmp.eq.s32.totalorder %s16, 0
    %p260 = por %p258, %p259
    %p261 = scmp.ne.s32.totalorder %s250, %s253
    %p262 = scmp.eq.s32.totalorder %s21, 1
    %p263 = por %p261, %p262
    %p264 = scmp.ne.s32.totalorder %s253, %s254
    %p265 = scmp.eq.s32.totalorder %s21, 0
    %p266 = por %p264, %p265
    %p267 = scmp.ne.s32.totalorder %s253, %s254
    %p268 = scmp.eq.s32.totalorder %s22, 1
    %p269 = por %p267, %p268
    %p271 = scmp.ne.s32.totalorder %s254, %s270
    %p272 = scmp.eq.s32.totalorder %s22, 0
    %p273 = por %p271, %p272
    %p274 = scmp.le.s32.totalorder 1, %s16
    %p275 = scmp.lt.s32.totalorder %s16, 3
    %p276 = pnand %p274, %p275
    %p277 = pneg %p276
    // Predicated region
    $region9: #{resblock_forward.3} parent=5 // pred_check
      _
    $region10: #{resblock_forward.3} parent=5 // pred_check_branch
      %279 = sbr.rel (%p276) target = $region12
    $region11: #{resblock_forward.3} parent=5 // pred_region
      %s280 = ssub.s32 %s16, 1
      // Predicated region
      $region13: #{resblock_forward.3} parent=11 // pred_check
        %p281 = pneg %p89
      $region14: #{resblock_forward.3} parent=11 // pred_check_branch
        %283 = sbr.rel (%p281) target = $region16
      $region15: #{resblock_forward.3} parent=11 // pred_region
        _
      $region16: #{resblock_forward.3} parent=11 // pred_fallthru
        _
      // Predicated region
      $region17: #{resblock_forward.3} parent=11 // pred_check
        %p284 = pneg %p110
      $region18: #{resblock_forward.3} parent=11 // pred_check_branch
        %286 = sbr.rel (%p284) target = $region20
      $region19: #{resblock_forward.3} parent=11 // pred_region
        _
      $region20: #{resblock_forward.3} parent=11 // pred_fallthru
        _
    $region12: #{resblock_forward.3} parent=5 // pred_fallthru
      _
    %p287 = scmp.lt.s32.totalorder %s16, 2
    // Predicated region
    $region21: #{resblock_forward.3} parent=5 // pred_check
      %p288 = pneg %p287
    $region22: #{resblock_forward.3} parent=5 // pred_check_branch
      %290 = sbr.rel (%p288) target = $region24
    $region23: #{resblock_forward.3} parent=5 // pred_region
      // Predicated region
      $region25: #{resblock_forward.3} parent=23 // pred_check
        %p291 = pneg %p36
      $region26: #{resblock_forward.3} parent=23 // pred_check_branch
        %293 = sbr.rel (%p291) target = $region28
      $region27: #{resblock_forward.3} parent=23 // pred_region
        %p294 = scmp.lt.s32.totalorder %s16, 1
        %s295 = scalar_select %p294, %s16, 1
        %s296 = smul.addr %s295, 32
        %s297 = smul.addr %s296, 4
        %s298 = scalar_lea.vmem %s0, %s297
      $region28: #{resblock_forward.3} parent=23 // pred_fallthru
        _
      // Predicated region
      $region29: #{resblock_forward.3} parent=23 // pred_check
        %p299 = pneg %p62
      $region30: #{resblock_forward.3} parent=23 // pred_check_branch
        %301 = sbr.rel (%p299) target = $region32
      $region31: #{resblock_forward.3} parent=23 // pred_region
        %p302 = scmp.lt.s32.totalorder %s16, 1
        %s303 = scalar_select %p302, %s16, 1
        %s304 = smul.addr %s303, 32
        %s305 = smul.addr %s304, 4
        %s306 = scalar_lea.vmem %s1, %s305
      $region32: #{resblock_forward.3} parent=23 // pred_fallthru
        _
    $region24: #{resblock_forward.3} parent=5 // pred_fallthru
      _
    %p307 = scmp.le.s32.totalorder 1, %s16
    %p308 = scmp.lt.s32.totalorder %s16, 3
    %p309 = pnand %p307, %p308
    %p310 = pneg %p309
    // Predicated region
    $region33: #{resblock_forward.3} parent=5 // pred_check
      _
    $region34: #{resblock_forward.3} parent=5 // pred_check_branch
      %312 = sbr.rel (%p309) target = $region36
    $region35: #{resblock_forward.3} parent=5 // pred_region
      %s313 = ssub.s32 %s16, 1
      %p314 = scmp.lt.s32.totalorder %s21, 1
      %s315 = scalar_select %p314, %s21, 1
      %s316 = smul.addr %s315, 32
      %s317 = smul.addr %s316, 4
      %s318 = scalar_lea.vmem %s0, %s317
      %p319 = pneg %p42
      %p320 = pneg %p39
      %p321 = scmp.lt.s32.totalorder %s21, 1
      %s322 = scalar_select %p321, %s21, 1
      %s323 = smul.addr %s322, 32
      %s324 = smul.addr %s323, 4
      %s325 = scalar_lea.vmem %s1, %s324
      %p326 = pneg %p68
      %p327 = pneg %p65
      %p328 = pneg %p89
      %p329 = pneg %p86
      %p330 = pneg %p110
      %p331 = pneg %p107
      %p332 = pneg %p136
      %p333 = pneg %p133
      %p334 = scmp.lt.s32.totalorder %s21, 1
      %s335 = scalar_select %p334, %s21, 1
      %s336 = smul.addr %s335, 32
      %s337 = smul.addr %s336, 8
      %s338 = scalar_lea.vmem %s4, %s337
      %p339 = pneg %p162
      %p340 = pneg %p159
      %p341 = scmp.lt.s32.totalorder %s21, 1
      %s342 = scalar_select %p341, %s21, 1
      %s343 = scalar_lea.vmem %s5, %s342
      %p344 = pneg %p188
      %p345 = pneg %p185
      %p346 = scmp.lt.s32.totalorder %s21, 1
      %s347 = scalar_select %p346, %s21, 1
      %s348 = scalar_lea.vmem %s6, %s347
      %p349 = pneg %p214
      %p350 = pneg %p211
      %p351 = scmp.lt.s32.totalorder %s21, 1
      %s352 = scalar_select %p351, %s21, 1
      %s353 = smul.addr %s352, 32
      %s354 = smul.addr %s353, 8
      %s355 = scalar_lea.vmem %s7, %s354
      %p356 = pneg %p240
      %p357 = pneg %p237
      %p358 = scmp.lt.s32.totalorder %s21, 1
      %s359 = scalar_select %p358, %s21, 1
      %s360 = scalar_lea.vmem %s8, %s359
      %p361 = pneg %p266
      %p362 = pneg %p263
      %p363 = scmp.lt.s32.totalorder %s21, 1
      %s364 = scalar_select %p363, %s21, 1
      %s365 = scalar_lea.vmem %s9, %s364
      %p366 = scmp.lt.s32.totalorder %s21, 1
      %s367 = scalar_select %p366, %s21, 1
      %s368 = smul.addr %s367, 32
      %s369 = smul.addr %s368, 4
      %s370 = scalar_lea.vmem %s0, %s369
      %p371 = scmp.lt.s32.totalorder %s21, 1
      %s372 = scalar_select %p371, %s21, 1
      %s373 = smul.addr %s372, 32
      %s374 = smul.addr %s373, 4
      %s375 = scalar_lea.vmem %s1, %s374
      %p376 = scmp.lt.s32.totalorder %s21, 1
      %s377 = scalar_select %p376, %s21, 1
      %s378 = smul.addr %s377, 32
      %s379 = smul.addr %s378, 8
      %s380 = scalar_lea.vmem %s4, %s379
      %p381 = scmp.lt.s32.totalorder %s21, 1
      %s382 = scalar_select %p381, %s21, 1
      %s383 = scalar_lea.vmem %s5, %s382
      %p384 = scmp.lt.s32.totalorder %s21, 1
      %s385 = scalar_select %p384, %s21, 1
      %s386 = scalar_lea.vmem %s6, %s385
      %p387 = scmp.lt.s32.totalorder %s21, 1
      %s388 = scalar_select %p387, %s21, 1
      %s389 = smul.addr %s388, 32
      %s390 = smul.addr %s389, 8
      %s391 = scalar_lea.vmem %s7, %s390
      %p392 = scmp.lt.s32.totalorder %s21, 1
      %s393 = scalar_select %p392, %s21, 1
      %s394 = scalar_lea.vmem %s8, %s393
      %p395 = scmp.lt.s32.totalorder %s21, 1
      %s396 = scalar_select %p395, %s21, 1
      %s397 = scalar_lea.vmem %s9, %s396
      %v399 = vld [vmem:[%s370] sm:$0xf]
      %v400 = vld [vmem:[%s370 + $0x4] sm:$0xf]
      %v401 = vld [vmem:[%s370 + $0x8] sm:$0xf]
      %v402 = vld [vmem:[%s370 + $0xc] sm:$0xf]
      %v403 = vld [vmem:[%s370 + $0x10] sm:$0xf]
      %v404 = vld [vmem:[%s370 + $0x14] sm:$0xf]
      %v405 = vld [vmem:[%s370 + $0x18] sm:$0xf]
      %v406 = vld [vmem:[%s370 + $0x1c] sm:$0xf]
      %v407 = vld [vmem:[%s370 + $0x20] sm:$0xf]
      %v408 = vld [vmem:[%s370 + $0x24] sm:$0xf]
      %v409 = vld [vmem:[%s370 + $0x28] sm:$0xf]
      %v410 = vld [vmem:[%s370 + $0x2c] sm:$0xf]
      %v411 = vld [vmem:[%s370 + $0x30] sm:$0xf]
      %v412 = vld [vmem:[%s370 + $0x34] sm:$0xf]
      %v413 = vld [vmem:[%s370 + $0x38] sm:$0xf]
      %v414 = vld [vmem:[%s370 + $0x3c] sm:$0xf]
      %v415 = vld [vmem:[%s370 + $0x40] sm:$0xf]
      %v416 = vld [vmem:[%s370 + $0x44] sm:$0xf]
      %v417 = vld [vmem:[%s370 + $0x48] sm:$0xf]
      %v418 = vld [vmem:[%s370 + $0x4c] sm:$0xf]
      %v419 = vld [vmem:[%s370 + $0x50] sm:$0xf]
      %v420 = vld [vmem:[%s370 + $0x54] sm:$0xf]
      %v421 = vld [vmem:[%s370 + $0x58] sm:$0xf]
      %v422 = vld [vmem:[%s370 + $0x5c] sm:$0xf]
      %v423 = vld [vmem:[%s370 + $0x60] sm:$0xf]
      %v424 = vld [vmem:[%s370 + $0x64] sm:$0xf]
      %v425 = vld [vmem:[%s370 + $0x68] sm:$0xf]
      %v426 = vld [vmem:[%s370 + $0x6c] sm:$0xf]
      %v427 = vld [vmem:[%s370 + $0x70] sm:$0xf]
      %v428 = vld [vmem:[%s370 + $0x74] sm:$0xf]
      %v429 = vld [vmem:[%s370 + $0x78] sm:$0xf]
      %v430 = vld [vmem:[%s370 + $0x7c] sm:$0xf]
      %v431 = vld [vmem:[%s2] sm:$0xf]
      %v432 = vld [vmem:[%s2 + $0x4] sm:$0xf]
      %v433 = vld [vmem:[%s2 + $0x8] sm:$0xf]
      %v434 = vld [vmem:[%s2 + $0xc] sm:$0xf]
      %v435 = vld [vmem:[%s2 + $0x10] sm:$0x3]
      %v468 = vunpack.c.l.b16 %v399
      %v469 = vunpack.c.l.b16 %v400
      %v470 = vunpack.c.l.b16 %v401
      %v471 = vunpack.c.l.b16 %v402
      %v472 = vunpack.c.l.b16 %v403
      %v473 = vunpack.c.l.b16 %v404
      %v474 = vunpack.c.l.b16 %v405
      %v475 = vunpack.c.l.b16 %v406
      %v476 = vunpack.c.l.b16 %v407
      %v477 = vunpack.c.l.b16 %v408
      %v478 = vunpack.c.l.b16 %v409
      %v479 = vunpack.c.l.b16 %v410
      %v480 = vunpack.c.l.b16 %v411
      %v481 = vunpack.c.l.b16 %v412
      %v482 = vunpack.c.l.b16 %v413
      %v483 = vunpack.c.l.b16 %v414
      %v484 = vunpack.c.l.b16 %v415
      %v485 = vunpack.c.l.b16 %v416
      %v486 = vunpack.c.l.b16 %v417
      %v487 = vunpack.c.l.b16 %v418
      %v488 = vunpack.c.l.b16 %v419
      %v489 = vunpack.c.l.b16 %v420
      %v490 = vunpack.c.l.b16 %v421
      %v491 = vunpack.c.l.b16 %v422
      %v492 = vunpack.c.l.b16 %v423
      %v493 = vunpack.c.l.b16 %v424
      %v494 = vunpack.c.l.b16 %v425
      %v495 = vunpack.c.l.b16 %v426
      %v496 = vunpack.c.l.b16 %v427
      %v497 = vunpack.c.l.b16 %v428
      %v498 = vunpack.c.l.b16 %v429
      %v499 = vunpack.c.l.b16 %v430
      %v500 = vpack.c.b16 %v469, %v468
      %v501 = vpack.c.b16 %v471, %v470
      %v502 = vpack.c.b16 %v473, %v472
      %v503 = vpack.c.b16 %v475, %v474
      %v504 = vpack.c.b16 %v477, %v476
      %v505 = vpack.c.b16 %v479, %v478
      %v506 = vpack.c.b16 %v481, %v480
      %v507 = vpack.c.b16 %v483, %v482
      %v508 = vpack.c.b16 %v485, %v484
      %v509 = vpack.c.b16 %v487, %v486
      %v510 = vpack.c.b16 %v489, %v488
      %v511 = vpack.c.b16 %v491, %v490
      %v512 = vpack.c.b16 %v493, %v492
      %v513 = vpack.c.b16 %v495, %v494
      %v514 = vpack.c.b16 %v497, %v496
      %v515 = vpack.c.b16 %v499, %v498
      %v521 = vunpack.c.l.b16 %v431
      %v522 = vunpack.c.l.b16 %v432
      %v523 = vunpack.c.l.b16 %v433
      %v524 = vunpack.c.l.b16 %v434
      %v525 = vunpack.c.l.b16 %v435
      %v526 = vpack.c.b16 %v522, %v521
      %v527 = vpack.c.b16 %v524, %v523
      %v528 = vpack.c.b16 %v525, %v525
      %vm531 = vcmask 293888
      %v533 = vsel %vm531, %v500, 0
      %v536 = vsel %vm531, %v501, 0
      %v539 = vsel %vm531, %v502, 0
      %v542 = vsel %vm531, %v503, 0
      %v545 = vsel %vm531, %v504, 0
      %v548 = vsel %vm531, %v505, 0
      %v551 = vsel %vm531, %v506, 0
      %v554 = vsel %vm531, %v507, 0
      %v557 = vsel %vm531, %v508, 0
      %v560 = vsel %vm531, %v509, 0
      %v563 = vsel %vm531, %v510, 0
      %v566 = vsel %vm531, %v511, 0
      %v569 = vsel %vm531, %v512, 0
      %v572 = vsel %vm531, %v513, 0
      %v575 = vsel %vm531, %v514, 0
      %v578 = vsel %vm531, %v515, 0
      %vm580 = vcmask 1041408
      %v582 = vsel %vm580, %v528, 0
      %584 = vmatpush.bf16.msra.mxu0 0
      %585 = vmatpush.bf16.msra.mxu0 0
      %586 = vmatpush.bf16.msra.mxu0 0
      %587 = vmatpush.bf16.msra.mxu0 0
      %588 = vmatpush.bf16.msra.mxu0 0
      %589 = vmatpush.bf16.msra.mxu0 %v582
      %590 = vmatpush.bf16.msra.mxu0 %v527
      %591 = vmatpush.bf16.msra.mxu0 %v526
      %592 = vmatmul.bf16.gmra.mxu0 %v533
      %v593 = vpop.f32.mrf.mxu0
      %v594 = vadd.f32 0.0, %v593
      %v595 = vpop.f32.mrf.mxu0
      %v596 = vadd.f32 0.0, %v595
      %597 = vmatmul.bf16.gmra.mxu0 %v536
      %v598 = vpop.f32.mrf.mxu0
      %v599 = vadd.f32 0.0, %v598
      %v600 = vpop.f32.mrf.mxu0
      %v601 = vadd.f32 0.0, %v600
      %602 = vmatmul.bf16.gmra.mxu0 %v539
      %v603 = vpop.f32.mrf.mxu0
      %v604 = vadd.f32 0.0, %v603
      %v605 = vpop.f32.mrf.mxu0
      %v606 = vadd.f32 0.0, %v605
      %607 = vmatmul.bf16.gmra.mxu0 %v542
      %v608 = vpop.f32.mrf.mxu0
      %v609 = vadd.f32 0.0, %v608
      %v610 = vpop.f32.mrf.mxu0
      %v611 = vadd.f32 0.0, %v610
      %612 = vmatmul.bf16.gmra.mxu0 %v545
      %v613 = vpop.f32.mrf.mxu0
      %v614 = vadd.f32 0.0, %v613
      %v615 = vpop.f32.mrf.mxu0
      %v616 = vadd.f32 0.0, %v615
      %617 = vmatmul.bf16.gmra.mxu0 %v548
      %v618 = vpop.f32.mrf.mxu0
      %v619 = vadd.f32 0.0, %v618
      %v620 = vpop.f32.mrf.mxu0
      %v621 = vadd.f32 0.0, %v620
      %622 = vmatmul.bf16.gmra.mxu0 %v551
      %v623 = vpop.f32.mrf.mxu0
      %v624 = vadd.f32 0.0, %v623
      %v625 = vpop.f32.mrf.mxu0
      %v626 = vadd.f32 0.0, %v625
      %627 = vmatmul.bf16.gmra.mxu0 %v554
      %v628 = vpop.f32.mrf.mxu0
      %v629 = vadd.f32 0.0, %v628
      %v630 = vpop.f32.mrf.mxu0
      %v631 = vadd.f32 0.0, %v630
      %632 = vmatmul.bf16.gmra.mxu0 %v557
      %v633 = vpop.f32.mrf.mxu0
      %v634 = vadd.f32 0.0, %v633
      %v635 = vpop.f32.mrf.mxu0
      %v636 = vadd.f32 0.0, %v635
      %637 = vmatmul.bf16.gmra.mxu0 %v560
      %v638 = vpop.f32.mrf.mxu0
      %v639 = vadd.f32 0.0, %v638
      %v640 = vpop.f32.mrf.mxu0
      %v641 = vadd.f32 0.0, %v640
      %642 = vmatmul.bf16.gmra.mxu0 %v563
      %v643 = vpop.f32.mrf.mxu0
      %v644 = vadd.f32 0.0, %v643
      %v645 = vpop.f32.mrf.mxu0
      %v646 = vadd.f32 0.0, %v645
      %647 = vmatmul.bf16.gmra.mxu0 %v566
      %v648 = vpop.f32.mrf.mxu0
      %v649 = vadd.f32 0.0, %v648
      %v650 = vpop.f32.mrf.mxu0
      %v651 = vadd.f32 0.0, %v650
      %652 = vmatmul.bf16.gmra.mxu0 %v569
      %v653 = vpop.f32.mrf.mxu0
      %v654 = vadd.f32 0.0, %v653
      %v655 = vpop.f32.mrf.mxu0
      %v656 = vadd.f32 0.0, %v655
      %657 = vmatmul.bf16.gmra.mxu0 %v572
      %v658 = vpop.f32.mrf.mxu0
      %v659 = vadd.f32 0.0, %v658
      %v660 = vpop.f32.mrf.mxu0
      %v661 = vadd.f32 0.0, %v660
      %662 = vmatmul.bf16.gmra.mxu0 %v575
      %v663 = vpop.f32.mrf.mxu0
      %v664 = vadd.f32 0.0, %v663
      %v665 = vpop.f32.mrf.mxu0
      %v666 = vadd.f32 0.0, %v665
      %667 = vmatmul.bf16.gmra.mxu0 %v578
      %v668 = vpop.f32.mrf.mxu0
      %v669 = vadd.f32 0.0, %v668
      %v670 = vpop.f32.mrf.mxu0
      %v671 = vadd.f32 0.0, %v670
      %672 = vdwg.mxu0
      %673 = vst [vmem:[%s380] sm:$0xff] %v594
      %674 = vst [vmem:[%s380 + $0x8] sm:$0xff] %v596
      %675 = vst [vmem:[%s380 + $0x10] sm:$0xff] %v599
      %676 = vst [vmem:[%s380 + $0x18] sm:$0xff] %v601
      %677 = vst [vmem:[%s380 + $0x20] sm:$0xff] %v604
      %678 = vst [vmem:[%s380 + $0x28] sm:$0xff] %v606
      %679 = vst [vmem:[%s380 + $0x30] sm:$0xff] %v609
      %680 = vst [vmem:[%s380 + $0x38] sm:$0xff] %v611
      %681 = vst [vmem:[%s380 + $0x40] sm:$0xff] %v614
      %682 = vst [vmem:[%s380 + $0x48] sm:$0xff] %v616
      %683 = vst [vmem:[%s380 + $0x50] sm:$0xff] %v619
      %684 = vst [vmem:[%s380 + $0x58] sm:$0xff] %v621
      %685 = vst [vmem:[%s380 + $0x60] sm:$0xff] %v624
      %686 = vst [vmem:[%s380 + $0x68] sm:$0xff] %v626
      %687 = vst [vmem:[%s380 + $0x70] sm:$0xff] %v629
      %688 = vst [vmem:[%s380 + $0x78] sm:$0xff] %v631
      %689 = vst [vmem:[%s380 + $0x80] sm:$0xff] %v634
      %690 = vst [vmem:[%s380 + $0x88] sm:$0xff] %v636
      %691 = vst [vmem:[%s380 + $0x90] sm:$0xff] %v639
      %692 = vst [vmem:[%s380 + $0x98] sm:$0xff] %v641
      %693 = vst [vmem:[%s380 + $0xa0] sm:$0xff] %v644
      %694 = vst [vmem:[%s380 + $0xa8] sm:$0xff] %v646
      %695 = vst [vmem:[%s380 + $0xb0] sm:$0xff] %v649
      %696 = vst [vmem:[%s380 + $0xb8] sm:$0xff] %v651
      %697 = vst [vmem:[%s380 + $0xc0] sm:$0xff] %v654
      %698 = vst [vmem:[%s380 + $0xc8] sm:$0xff] %v656
      %699 = vst [vmem:[%s380 + $0xd0] sm:$0xff] %v659
      %700 = vst [vmem:[%s380 + $0xd8] sm:$0xff] %v661
      %701 = vst [vmem:[%s380 + $0xe0] sm:$0xff] %v664
      %702 = vst [vmem:[%s380 + $0xe8] sm:$0xff] %v666
      %703 = vst [vmem:[%s380 + $0xf0] sm:$0xff] %v669
      %704 = vst [vmem:[%s380 + $0xf8] sm:$0xff] %v671
      %v705 = vadd.f32 %v594, %v596
      %v706 = vadd.f32 %v705, %v599
      %v707 = vadd.f32 %v706, %v601
      %v708 = vadd.f32 %v707, %v604
      %v709 = vadd.f32 %v708, %v606
      %v710 = vadd.f32 %v709, %v609
      %v711 = vadd.f32 %v710, %v611
      %v712 = vadd.f32 %v711, %v614
      %v713 = vadd.f32 %v712, %v616
      %v714 = vadd.f32 %v713, %v619
      %v715 = vadd.f32 %v714, %v621
      %v716 = vadd.f32 %v715, %v624
      %v717 = vadd.f32 %v716, %v626
      %v718 = vadd.f32 %v717, %v629
      %v719 = vadd.f32 %v718, %v631
      %v720 = vadd.f32 %v719, %v634
      %v721 = vadd.f32 %v720, %v636
      %v722 = vadd.f32 %v721, %v639
      %v723 = vadd.f32 %v722, %v641
      %v724 = vadd.f32 %v723, %v644
      %v725 = vadd.f32 %v724, %v646
      %v726 = vadd.f32 %v725, %v649
      %v727 = vadd.f32 %v726, %v651
      %v728 = vadd.f32 %v727, %v654
      %v729 = vadd.f32 %v728, %v656
      %v730 = vadd.f32 %v729, %v659
      %v731 = vadd.f32 %v730, %v661
      %v732 = vadd.f32 %v731, %v664
      %v733 = vadd.f32 %v732, %v666
      %v734 = vadd.f32 %v733, %v669
      %v735 = vadd.f32 %v734, %v671
      %v736 = vrot.slane %v735, 4
      %v737 = vadd.f32 %v735, %v736
      %v738 = vrot.slane %v737, 2
      %v739 = vadd.f32 %v737, %v738
      %v740 = vrot.slane %v739, 1
      %v741 = vadd.f32 %v739, %v740
      %742 = vst [vmem:[%s383] sm:$0x1] %v741
      %v743 = vmul.f32 %v594, %v594
      %v744 = vmul.f32 %v596, %v596
      %v745 = vmul.f32 %v599, %v599
      %v746 = vmul.f32 %v601, %v601
      %v747 = vmul.f32 %v604, %v604
      %v748 = vmul.f32 %v606, %v606
      %v749 = vmul.f32 %v609, %v609
      %v750 = vmul.f32 %v611, %v611
      %v751 = vmul.f32 %v614, %v614
      %v752 = vmul.f32 %v616, %v616
      %v753 = vmul.f32 %v619, %v619
      %v754 = vmul.f32 %v621, %v621
      %v755 = vmul.f32 %v624, %v624
      %v756 = vmul.f32 %v626, %v626
      %v757 = vmul.f32 %v629, %v629
      %v758 = vmul.f32 %v631, %v631
      %v759 = vmul.f32 %v634, %v634
      %v760 = vmul.f32 %v636, %v636
      %v761 = vmul.f32 %v639, %v639
      %v762 = vmul.f32 %v641, %v641
      %v763 = vmul.f32 %v644, %v644
      %v764 = vmul.f32 %v646, %v646
      %v765 = vmul.f32 %v649, %v649
      %v766 = vmul.f32 %v651, %v651
      %v767 = vmul.f32 %v654, %v654
      %v768 = vmul.f32 %v656, %v656
      %v769 = vmul.f32 %v659, %v659
      %v770 = vmul.f32 %v661, %v661
      %v771 = vmul.f32 %v664, %v664
      %v772 = vmul.f32 %v666, %v666
      %v773 = vmul.f32 %v669, %v669
      %v774 = vmul.f32 %v671, %v671
      %v775 = vadd.f32 %v743, %v744
      %v776 = vadd.f32 %v775, %v745
      %v777 = vadd.f32 %v776, %v746
      %v778 = vadd.f32 %v777, %v747
      %v779 = vadd.f32 %v778, %v748
      %v780 = vadd.f32 %v779, %v749
      %v781 = vadd.f32 %v780, %v750
      %v782 = vadd.f32 %v781, %v751
      %v783 = vadd.f32 %v782, %v752
      %v784 = vadd.f32 %v783, %v753
      %v785 = vadd.f32 %v784, %v754
      %v786 = vadd.f32 %v785, %v755
      %v787 = vadd.f32 %v786, %v756
      %v788 = vadd.f32 %v787, %v757
      %v789 = vadd.f32 %v788, %v758
      %v790 = vadd.f32 %v789, %v759
      %v791 = vadd.f32 %v790, %v760
      %v792 = vadd.f32 %v791, %v761
      %v793 = vadd.f32 %v792, %v762
      %v794 = vadd.f32 %v793, %v763
      %v795 = vadd.f32 %v794, %v764
      %v796 = vadd.f32 %v795, %v765
      %v797 = vadd.f32 %v796, %v766
      %v798 = vadd.f32 %v797, %v767
      %v799 = vadd.f32 %v798, %v768
      %v800 = vadd.f32 %v799, %v769
      %v801 = vadd.f32 %v800, %v770
      %v802 = vadd.f32 %v801, %v771
      %v803 = vadd.f32 %v802, %v772
      %v804 = vadd.f32 %v803, %v773
      %v805 = vadd.f32 %v804, %v774
      %v806 = vrot.slane %v805, 4
      %v807 = vadd.f32 %v805, %v806
      %v808 = vrot.slane %v807, 2
      %v809 = vadd.f32 %v807, %v808
      %v810 = vrot.slane %v809, 1
      %v811 = vadd.f32 %v809, %v810
      %812 = vst [vmem:[%s386] sm:$0x1] %v811
      %v813 = vld [vmem:[%s375] sm:$0xf]
      %v814 = vld [vmem:[%s375 + $0x4] sm:$0xf]
      %v815 = vld [vmem:[%s375 + $0x8] sm:$0xf]
      %v816 = vld [vmem:[%s375 + $0xc] sm:$0xf]
      %v817 = vld [vmem:[%s375 + $0x10] sm:$0xf]
      %v818 = vld [vmem:[%s375 + $0x14] sm:$0xf]
      %v819 = vld [vmem:[%s375 + $0x18] sm:$0xf]
      %v820 = vld [vmem:[%s375 + $0x1c] sm:$0xf]
      %v821 = vld [vmem:[%s375 + $0x20] sm:$0xf]
      %v822 = vld [vmem:[%s375 + $0x24] sm:$0xf]
      %v823 = vld [vmem:[%s375 + $0x28] sm:$0xf]
      %v824 = vld [vmem:[%s375 + $0x2c] sm:$0xf]
      %v825 = vld [vmem:[%s375 + $0x30] sm:$0xf]
      %v826 = vld [vmem:[%s375 + $0x34] sm:$0xf]
      %v827 = vld [vmem:[%s375 + $0x38] sm:$0xf]
      %v828 = vld [vmem:[%s375 + $0x3c] sm:$0xf]
      %v829 = vld [vmem:[%s375 + $0x40] sm:$0xf]
      %v830 = vld [vmem:[%s375 + $0x44] sm:$0xf]
      %v831 = vld [vmem:[%s375 + $0x48] sm:$0xf]
      %v832 = vld [vmem:[%s375 + $0x4c] sm:$0xf]
      %v833 = vld [vmem:[%s375 + $0x50] sm:$0xf]
      %v834 = vld [vmem:[%s375 + $0x54] sm:$0xf]
      %v835 = vld [vmem:[%s375 + $0x58] sm:$0xf]
      %v836 = vld [vmem:[%s375 + $0x5c] sm:$0xf]
      %v837 = vld [vmem:[%s375 + $0x60] sm:$0xf]
      %v838 = vld [vmem:[%s375 + $0x64] sm:$0xf]
      %v839 = vld [vmem:[%s375 + $0x68] sm:$0xf]
      %v840 = vld [vmem:[%s375 + $0x6c] sm:$0xf]
      %v841 = vld [vmem:[%s375 + $0x70] sm:$0xf]
      %v842 = vld [vmem:[%s375 + $0x74] sm:$0xf]
      %v843 = vld [vmem:[%s375 + $0x78] sm:$0xf]
      %v844 = vld [vmem:[%s375 + $0x7c] sm:$0xf]
      %v845 = vld [vmem:[%s3] sm:$0x3]
      %v878 = vunpack.c.l.b16 %v813
      %v879 = vunpack.c.l.b16 %v814
      %v880 = vunpack.c.l.b16 %v815
      %v881 = vunpack.c.l.b16 %v816
      %v882 = vunpack.c.l.b16 %v817
      %v883 = vunpack.c.l.b16 %v818
      %v884 = vunpack.c.l.b16 %v819
      %v885 = vunpack.c.l.b16 %v820
      %v886 = vunpack.c.l.b16 %v821
      %v887 = vunpack.c.l.b16 %v822
      %v888 = vunpack.c.l.b16 %v823
      %v889 = vunpack.c.l.b16 %v824
      %v890 = vunpack.c.l.b16 %v825
      %v891 = vunpack.c.l.b16 %v826
      %v892 = vunpack.c.l.b16 %v827
      %v893 = vunpack.c.l.b16 %v828
      %v894 = vunpack.c.l.b16 %v829
      %v895 = vunpack.c.l.b16 %v830
      %v896 = vunpack.c.l.b16 %v831
      %v897 = vunpack.c.l.b16 %v832
      %v898 = vunpack.c.l.b16 %v833
      %v899 = vunpack.c.l.b16 %v834
      %v900 = vunpack.c.l.b16 %v835
      %v901 = vunpack.c.l.b16 %v836
      %v902 = vunpack.c.l.b16 %v837
      %v903 = vunpack.c.l.b16 %v838
      %v904 = vunpack.c.l.b16 %v839
      %v905 = vunpack.c.l.b16 %v840
      %v906 = vunpack.c.l.b16 %v841
      %v907 = vunpack.c.l.b16 %v842
      %v908 = vunpack.c.l.b16 %v843
      %v909 = vunpack.c.l.b16 %v844
      %v910 = vpack.c.b16 %v879, %v878
      %v911 = vpack.c.b16 %v881, %v880
      %v912 = vpack.c.b16 %v883, %v882
      %v913 = vpack.c.b16 %v885, %v884
      %v914 = vpack.c.b16 %v887, %v886
      %v915 = vpack.c.b16 %v889, %v888
      %v916 = vpack.c.b16 %v891, %v890
      %v917 = vpack.c.b16 %v893, %v892
      %v918 = vpack.c.b16 %v895, %v894
      %v919 = vpack.c.b16 %v897, %v896
      %v920 = vpack.c.b16 %v899, %v898
      %v921 = vpack.c.b16 %v901, %v900
      %v922 = vpack.c.b16 %v903, %v902
      %v923 = vpack.c.b16 %v905, %v904
      %v924 = vpack.c.b16 %v907, %v906
      %v925 = vpack.c.b16 %v909, %v908
      %vm926 = vcmask 31744
      %v928 = vsel %vm926, %v910, 0
      %v931 = vsel %vm926, %v911, 0
      %v934 = vsel %vm926, %v912, 0
      %v937 = vsel %vm926, %v913, 0
      %v940 = vsel %vm926, %v914, 0
      %v943 = vsel %vm926, %v915, 0
      %v946 = vsel %vm926, %v916, 0
      %v949 = vsel %vm926, %v917, 0
      %v952 = vsel %vm926, %v918, 0
      %v955 = vsel %vm926, %v919, 0
      %v958 = vsel %vm926, %v920, 0
      %v961 = vsel %vm926, %v921, 0
      %v964 = vsel %vm926, %v922, 0
      %v967 = vsel %vm926, %v923, 0
      %v970 = vsel %vm926, %v924, 0
      %v973 = vsel %vm926, %v925, 0
      %v976 = vsel %vm580, %v845, 0
      %978 = vmatpush.bf16.msra.mxu0 0
      %979 = vmatpush.bf16.msra.mxu0 0
      %980 = vmatpush.bf16.msra.mxu0 0
      %981 = vmatpush.bf16.msra.mxu0 0
      %982 = vmatpush.bf16.msra.mxu0 0
      %983 = vmatpush.bf16.msra.mxu0 0
      %984 = vmatpush.bf16.msra.mxu0 0
      %985 = vmatpush.bf16.msra.mxu0 %v976
      %986 = vmatmul.bf16.gmra.mxu0 %v928
      %v987 = vpop.f32.mrf.mxu0
      %v988 = vadd.f32 0.0, %v987
      %v989 = vpop.f32.mrf.mxu0
      %v990 = vadd.f32 0.0, %v989
      %991 = vmatmul.bf16.gmra.mxu0 %v931
      %v992 = vpop.f32.mrf.mxu0
      %v993 = vadd.f32 0.0, %v992
      %v994 = vpop.f32.mrf.mxu0
      %v995 = vadd.f32 0.0, %v994
      %996 = vmatmul.bf16.gmra.mxu0 %v934
      %v997 = vpop.f32.mrf.mxu0
      %v998 = vadd.f32 0.0, %v997
      %v999 = vpop.f32.mrf.mxu0
      %v1000 = vadd.f32 0.0, %v999
      %1001 = vmatmul.bf16.gmra.mxu0 %v937
      %v1002 = vpop.f32.mrf.mxu0
      %v1003 = vadd.f32 0.0, %v1002
      %v1004 = vpop.f32.mrf.mxu0
      %v1005 = vadd.f32 0.0, %v1004
      %1006 = vmatmul.bf16.gmra.mxu0 %v940
      %v1007 = vpop.f32.mrf.mxu0
      %v1008 = vadd.f32 0.0, %v1007
      %v1009 = vpop.f32.mrf.mxu0
      %v1010 = vadd.f32 0.0, %v1009
      %1011 = vmatmul.bf16.gmra.mxu0 %v943
      %v1012 = vpop.f32.mrf.mxu0
      %v1013 = vadd.f32 0.0, %v1012
      %v1014 = vpop.f32.mrf.mxu0
      %v1015 = vadd.f32 0.0, %v1014
      %1016 = vmatmul.bf16.gmra.mxu0 %v946
      %v1017 = vpop.f32.mrf.mxu0
      %v1018 = vadd.f32 0.0, %v1017
      %v1019 = vpop.f32.mrf.mxu0
      %v1020 = vadd.f32 0.0, %v1019
      %1021 = vmatmul.bf16.gmra.mxu0 %v949
      %v1022 = vpop.f32.mrf.mxu0
      %v1023 = vadd.f32 0.0, %v1022
      %v1024 = vpop.f32.mrf.mxu0
      %v1025 = vadd.f32 0.0, %v1024
      %1026 = vmatmul.bf16.gmra.mxu0 %v952
      %v1027 = vpop.f32.mrf.mxu0
      %v1028 = vadd.f32 0.0, %v1027
      %v1029 = vpop.f32.mrf.mxu0
      %v1030 = vadd.f32 0.0, %v1029
      %1031 = vmatmul.bf16.gmra.mxu0 %v955
      %v1032 = vpop.f32.mrf.mxu0
      %v1033 = vadd.f32 0.0, %v1032
      %v1034 = vpop.f32.mrf.mxu0
      %v1035 = vadd.f32 0.0, %v1034
      %1036 = vmatmul.bf16.gmra.mxu0 %v958
      %v1037 = vpop.f32.mrf.mxu0
      %v1038 = vadd.f32 0.0, %v1037
      %v1039 = vpop.f32.mrf.mxu0
      %v1040 = vadd.f32 0.0, %v1039
      %1041 = vmatmul.bf16.gmra.mxu0 %v961
      %v1042 = vpop.f32.mrf.mxu0
      %v1043 = vadd.f32 0.0, %v1042
      %v1044 = vpop.f32.mrf.mxu0
      %v1045 = vadd.f32 0.0, %v1044
      %1046 = vmatmul.bf16.gmra.mxu0 %v964
      %v1047 = vpop.f32.mrf.mxu0
      %v1048 = vadd.f32 0.0, %v1047
      %v1049 = vpop.f32.mrf.mxu0
      %v1050 = vadd.f32 0.0, %v1049
      %1051 = vmatmul.bf16.gmra.mxu0 %v967
      %v1052 = vpop.f32.mrf.mxu0
      %v1053 = vadd.f32 0.0, %v1052
      %v1054 = vpop.f32.mrf.mxu0
      %v1055 = vadd.f32 0.0, %v1054
      %1056 = vmatmul.bf16.gmra.mxu0 %v970
      %v1057 = vpop.f32.mrf.mxu0
      %v1058 = vadd.f32 0.0, %v1057
      %v1059 = vpop.f32.mrf.mxu0
      %v1060 = vadd.f32 0.0, %v1059
      %1061 = vmatmul.bf16.gmra.mxu0 %v973
      %v1062 = vpop.f32.mrf.mxu0
      %v1063 = vadd.f32 0.0, %v1062
      %v1064 = vpop.f32.mrf.mxu0
      %v1065 = vadd.f32 0.0, %v1064
      %1066 = vdwg.mxu0
      %1067 = vst [vmem:[%s391] sm:$0xff] %v988
      %1068 = vst [vmem:[%s391 + $0x8] sm:$0xff] %v990
      %1069 = vst [vmem:[%s391 + $0x10] sm:$0xff] %v993
      %1070 = vst [vmem:[%s391 + $0x18] sm:$0xff] %v995
      %1071 = vst [vmem:[%s391 + $0x20] sm:$0xff] %v998
      %1072 = vst [vmem:[%s391 + $0x28] sm:$0xff] %v1000
      %1073 = vst [vmem:[%s391 + $0x30] sm:$0xff] %v1003
      %1074 = vst [vmem:[%s391 + $0x38] sm:$0xff] %v1005
      %1075 = vst [vmem:[%s391 + $0x40] sm:$0xff] %v1008
      %1076 = vst [vmem:[%s391 + $0x48] sm:$0xff] %v1010
      %1077 = vst [vmem:[%s391 + $0x50] sm:$0xff] %v1013
      %1078 = vst [vmem:[%s391 + $0x58] sm:$0xff] %v1015
      %1079 = vst [vmem:[%s391 + $0x60] sm:$0xff] %v1018
      %1080 = vst [vmem:[%s391 + $0x68] sm:$0xff] %v1020
      %1081 = vst [vmem:[%s391 + $0x70] sm:$0xff] %v1023
      %1082 = vst [vmem:[%s391 + $0x78] sm:$0xff] %v1025
      %1083 = vst [vmem:[%s391 + $0x80] sm:$0xff] %v1028
      %1084 = vst [vmem:[%s391 + $0x88] sm:$0xff] %v1030
      %1085 = vst [vmem:[%s391 + $0x90] sm:$0xff] %v1033
      %1086 = vst [vmem:[%s391 + $0x98] sm:$0xff] %v1035
      %1087 = vst [vmem:[%s391 + $0xa0] sm:$0xff] %v1038
      %1088 = vst [vmem:[%s391 + $0xa8] sm:$0xff] %v1040
      %1089 = vst [vmem:[%s391 + $0xb0] sm:$0xff] %v1043
      %1090 = vst [vmem:[%s391 + $0xb8] sm:$0xff] %v1045
      %1091 = vst [vmem:[%s391 + $0xc0] sm:$0xff] %v1048
      %1092 = vst [vmem:[%s391 + $0xc8] sm:$0xff] %v1050
      %1093 = vst [vmem:[%s391 + $0xd0] sm:$0xff] %v1053
      %1094 = vst [vmem:[%s391 + $0xd8] sm:$0xff] %v1055
      %1095 = vst [vmem:[%s391 + $0xe0] sm:$0xff] %v1058
      %1096 = vst [vmem:[%s391 + $0xe8] sm:$0xff] %v1060
      %1097 = vst [vmem:[%s391 + $0xf0] sm:$0xff] %v1063
      %1098 = vst [vmem:[%s391 + $0xf8] sm:$0xff] %v1065
      %v1099 = vadd.f32 %v988, %v990
      %v1100 = vadd.f32 %v1099, %v993
      %v1101 = vadd.f32 %v1100, %v995
      %v1102 = vadd.f32 %v1101, %v998
      %v1103 = vadd.f32 %v1102, %v1000
      %v1104 = vadd.f32 %v1103, %v1003
      %v1105 = vadd.f32 %v1104, %v1005
      %v1106 = vadd.f32 %v1105, %v1008
      %v1107 = vadd.f32 %v1106, %v1010
      %v1108 = vadd.f32 %v1107, %v1013
      %v1109 = vadd.f32 %v1108, %v1015
      %v1110 = vadd.f32 %v1109, %v1018
      %v1111 = vadd.f32 %v1110, %v1020
      %v1112 = vadd.f32 %v1111, %v1023
      %v1113 = vadd.f32 %v1112, %v1025
      %v1114 = vadd.f32 %v1113, %v1028
      %v1115 = vadd.f32 %v1114, %v1030
      %v1116 = vadd.f32 %v1115, %v1033
      %v1117 = vadd.f32 %v1116, %v1035
      %v1118 = vadd.f32 %v1117, %v1038
      %v1119 = vadd.f32 %v1118, %v1040
      %v1120 = vadd.f32 %v1119, %v1043
      %v1121 = vadd.f32 %v1120, %v1045
      %v1122 = vadd.f32 %v1121, %v1048
      %v1123 = vadd.f32 %v1122, %v1050
      %v1124 = vadd.f32 %v1123, %v1053
      %v1125 = vadd.f32 %v1124, %v1055
      %v1126 = vadd.f32 %v1125, %v1058
      %v1127 = vadd.f32 %v1126, %v1060
      %v1128 = vadd.f32 %v1127, %v1063
      %v1129 = vadd.f32 %v1128, %v1065
      %v1130 = vrot.slane %v1129, 4
      %v1131 = vadd.f32 %v1129, %v1130
      %v1132 = vrot.slane %v1131, 2
      %v1133 = vadd.f32 %v1131, %v1132
      %v1134 = vrot.slane %v1133, 1
      %v1135 = vadd.f32 %v1133, %v1134
      %1136 = vst [vmem:[%s394] sm:$0x1] %v1135
      %v1137 = vmul.f32 %v988, %v988
      %v1138 = vmul.f32 %v990, %v990
      %v1139 = vmul.f32 %v993, %v993
      %v1140 = vmul.f32 %v995, %v995
      %v1141 = vmul.f32 %v998, %v998
      %v1142 = vmul.f32 %v1000, %v1000
      %v1143 = vmul.f32 %v1003, %v1003
      %v1144 = vmul.f32 %v1005, %v1005
      %v1145 = vmul.f32 %v1008, %v1008
      %v1146 = vmul.f32 %v1010, %v1010
      %v1147 = vmul.f32 %v1013, %v1013
      %v1148 = vmul.f32 %v1015, %v1015
      %v1149 = vmul.f32 %v1018, %v1018
      %v1150 = vmul.f32 %v1020, %v1020
      %v1151 = vmul.f32 %v1023, %v1023
      %v1152 = vmul.f32 %v1025, %v1025
      %v1153 = vmul.f32 %v1028, %v1028
      %v1154 = vmul.f32 %v1030, %v1030
      %v1155 = vmul.f32 %v1033, %v1033
      %v1156 = vmul.f32 %v1035, %v1035
      %v1157 = vmul.f32 %v1038, %v1038
      %v1158 = vmul.f32 %v1040, %v1040
      %v1159 = vmul.f32 %v1043, %v1043
      %v1160 = vmul.f32 %v1045, %v1045
      %v1161 = vmul.f32 %v1048, %v1048
      %v1162 = vmul.f32 %v1050, %v1050
      %v1163 = vmul.f32 %v1053, %v1053
      %v1164 = vmul.f32 %v1055, %v1055
      %v1165 = vmul.f32 %v1058, %v1058
      %v1166 = vmul.f32 %v1060, %v1060
      %v1167 = vmul.f32 %v1063, %v1063
      %v1168 = vmul.f32 %v1065, %v1065
      %v1169 = vadd.f32 %v1137, %v1138
      %v1170 = vadd.f32 %v1169, %v1139
      %v1171 = vadd.f32 %v1170, %v1140
      %v1172 = vadd.f32 %v1171, %v1141
      %v1173 = vadd.f32 %v1172, %v1142
      %v1174 = vadd.f32 %v1173, %v1143
      %v1175 = vadd.f32 %v1174, %v1144
      %v1176 = vadd.f32 %v1175, %v1145
      %v1177 = vadd.f32 %v1176, %v1146
      %v1178 = vadd.f32 %v1177, %v1147
      %v1179 = vadd.f32 %v1178, %v1148
      %v1180 = vadd.f32 %v1179, %v1149
      %v1181 = vadd.f32 %v1180, %v1150
      %v1182 = vadd.f32 %v1181, %v1151
      %v1183 = vadd.f32 %v1182, %v1152
      %v1184 = vadd.f32 %v1183, %v1153
      %v1185 = vadd.f32 %v1184, %v1154
      %v1186 = vadd.f32 %v1185, %v1155
      %v1187 = vadd.f32 %v1186, %v1156
      %v1188 = vadd.f32 %v1187, %v1157
      %v1189 = vadd.f32 %v1188, %v1158
      %v1190 = vadd.f32 %v1189, %v1159
      %v1191 = vadd.f32 %v1190, %v1160
      %v1192 = vadd.f32 %v1191, %v1161
      %v1193 = vadd.f32 %v1192, %v1162
      %v1194 = vadd.f32 %v1193, %v1163
      %v1195 = vadd.f32 %v1194, %v1164
      %v1196 = vadd.f32 %v1195, %v1165
      %v1197 = vadd.f32 %v1196, %v1166
      %v1198 = vadd.f32 %v1197, %v1167
      %v1199 = vadd.f32 %v1198, %v1168
      %v1200 = vrot.slane %v1199, 4
      %v1201 = vadd.f32 %v1199, %v1200
      %v1202 = vrot.slane %v1201, 2
      %v1203 = vadd.f32 %v1201, %v1202
      %v1204 = vrot.slane %v1203, 1
      %v1205 = vadd.f32 %v1203, %v1204
      %1206 = vst [vmem:[%s397] sm:$0x1] %v1205
      %p1207 = scmp.lt.s32.totalorder %s21, 1
      %s1208 = scalar_select %p1207, %s21, 1
      %s1209 = smul.addr %s1208, 32
      %s1210 = smul.addr %s1209, 8
      %s1211 = scalar_lea.vmem %s4, %s1210
      %p1212 = scmp.lt.s32.totalorder %s21, 1
      %s1213 = scalar_select %p1212, %s21, 1
      %s1214 = scalar_lea.vmem %s5, %s1213
      %p1215 = scmp.lt.s32.totalorder %s21, 1
      %s1216 = scalar_select %p1215, %s21, 1
      %s1217 = scalar_lea.vmem %s6, %s1216
      %p1218 = scmp.lt.s32.totalorder %s21, 1
      %s1219 = scalar_select %p1218, %s21, 1
      %s1220 = smul.addr %s1219, 32
      %s1221 = smul.addr %s1220, 8
      %s1222 = scalar_lea.vmem %s7, %s1221
      %p1223 = scmp.lt.s32.totalorder %s21, 1
      %s1224 = scalar_select %p1223, %s21, 1
      %s1225 = scalar_lea.vmem %s8, %s1224
      %p1226 = scmp.lt.s32.totalorder %s21, 1
      %s1227 = scalar_select %p1226, %s21, 1
      %s1228 = scalar_lea.vmem %s9, %s1227
      // Predicated region
      $region37: #{resblock_forward.3} parent=35 // pred_check
        %p1229 = pneg %p133
      $region38: #{resblock_forward.3} parent=35 // pred_check_branch
        %1231 = sbr.rel (%p1229) target = $region40
      $region39: #{resblock_forward.3} parent=35 // pred_region
        _
      $region40: #{resblock_forward.3} parent=35 // pred_fallthru
        _
      // Predicated region
      $region41: #{resblock_forward.3} parent=35 // pred_check
        %p1232 = pneg %p159
      $region42: #{resblock_forward.3} parent=35 // pred_check_branch
        %1234 = sbr.rel (%p1232) target = $region44
      $region43: #{resblock_forward.3} parent=35 // pred_region
        _
      $region44: #{resblock_forward.3} parent=35 // pred_fallthru
        _
      // Predicated region
      $region45: #{resblock_forward.3} parent=35 // pred_check
        %p1235 = pneg %p185
      $region46: #{resblock_forward.3} parent=35 // pred_check_branch
        %1237 = sbr.rel (%p1235) target = $region48
      $region47: #{resblock_forward.3} parent=35 // pred_region
        _
      $region48: #{resblock_forward.3} parent=35 // pred_fallthru
        _
      // Predicated region
      $region49: #{resblock_forward.3} parent=35 // pred_check
        %p1238 = pneg %p211
      $region50: #{resblock_forward.3} parent=35 // pred_check_branch
        %1240 = sbr.rel (%p1238) target = $region52
      $region51: #{resblock_forward.3} parent=35 // pred_region
        _
      $region52: #{resblock_forward.3} parent=35 // pred_fallthru
        _
      // Predicated region
      $region53: #{resblock_forward.3} parent=35 // pred_check
        %p1241 = pneg %p237
      $region54: #{resblock_forward.3} parent=35 // pred_check_branch
        %1243 = sbr.rel (%p1241) target = $region56
      $region55: #{resblock_forward.3} parent=35 // pred_region
        _
      $region56: #{resblock_forward.3} parent=35 // pred_fallthru
        _
      // Predicated region
      $region57: #{resblock_forward.3} parent=35 // pred_check
        %p1244 = pneg %p263
      $region58: #{resblock_forward.3} parent=35 // pred_check_branch
        %1246 = sbr.rel (%p1244) target = $region60
      $region59: #{resblock_forward.3} parent=35 // pred_region
        _
      $region60: #{resblock_forward.3} parent=35 // pred_fallthru
        _
    $region36: #{resblock_forward.3} parent=5 // pred_fallthru
      _
    %p1247 = scmp.le.s32.totalorder 2, %s16
    // Predicated region
    $region61: #{resblock_forward.3} parent=5 // pred_check
      %p1248 = pneg %p1247
    $region62: #{resblock_forward.3} parent=5 // pred_check_branch
      %1250 = sbr.rel (%p1248) target = $region64
    $region63: #{resblock_forward.3} parent=5 // pred_region
      %s1251 = ssub.s32 %s16, 2
      // Predicated region
      $region65: #{resblock_forward.3} parent=63 // pred_check
        %p1252 = pneg %p139
      $region66: #{resblock_forward.3} parent=63 // pred_check_branch
        %1254 = sbr.rel (%p1252) target = $region68
      $region67: #{resblock_forward.3} parent=63 // pred_region
        %p1255 = scmp.lt.s32.totalorder %s22, 1
        %s1256 = scalar_select %p1255, %s22, 1
        %s1257 = smul.addr %s1256, 32
        %s1258 = smul.addr %s1257, 8
        %s1259 = scalar_lea.vmem %s4, %s1258
      $region68: #{resblock_forward.3} parent=63 // pred_fallthru
        _
      // Predicated region
      $region69: #{resblock_forward.3} parent=63 // pred_check
        %p1260 = pneg %p165
      $region70: #{resblock_forward.3} parent=63 // pred_check_branch
        %1262 = sbr.rel (%p1260) target = $region72
      $region71: #{resblock_forward.3} parent=63 // pred_region
        %p1263 = scmp.lt.s32.totalorder %s22, 1
        %s1264 = scalar_select %p1263, %s22, 1
        %s1265 = scalar_lea.vmem %s5, %s1264
      $region72: #{resblock_forward.3} parent=63 // pred_fallthru
        _
      // Predicated region
      $region73: #{resblock_forward.3} parent=63 // pred_check
        %p1266 = pneg %p191
      $region74: #{resblock_forward.3} parent=63 // pred_check_branch
        %1268 = sbr.rel (%p1266) target = $region76
      $region75: #{resblock_forward.3} parent=63 // pred_region
        %p1269 = scmp.lt.s32.totalorder %s22, 1
        %s1270 = scalar_select %p1269, %s22, 1
        %s1271 = scalar_lea.vmem %s6, %s1270
      $region76: #{resblock_forward.3} parent=63 // pred_fallthru
        _
      // Predicated region
      $region77: #{resblock_forward.3} parent=63 // pred_check
        %p1272 = pneg %p217
      $region78: #{resblock_forward.3} parent=63 // pred_check_branch
        %1274 = sbr.rel (%p1272) target = $region80
      $region79: #{resblock_forward.3} parent=63 // pred_region
        %p1275 = scmp.lt.s32.totalorder %s22, 1
        %s1276 = scalar_select %p1275, %s22, 1
        %s1277 = smul.addr %s1276, 32
        %s1278 = smul.addr %s1277, 8
        %s1279 = scalar_lea.vmem %s7, %s1278
      $region80: #{resblock_forward.3} parent=63 // pred_fallthru
        _
      // Predicated region
      $region81: #{resblock_forward.3} parent=63 // pred_check
        %p1280 = pneg %p243
      $region82: #{resblock_forward.3} parent=63 // pred_check_branch
        %1282 = sbr.rel (%p1280) target = $region84
      $region83: #{resblock_forward.3} parent=63 // pred_region
        %p1283 = scmp.lt.s32.totalorder %s22, 1
        %s1284 = scalar_select %p1283, %s22, 1
        %s1285 = scalar_lea.vmem %s8, %s1284
      $region84: #{resblock_forward.3} parent=63 // pred_fallthru
        _
      // Predicated region
      $region85: #{resblock_forward.3} parent=63 // pred_check
        %p1286 = pneg %p269
      $region86: #{resblock_forward.3} parent=63 // pred_check_branch
        %1288 = sbr.rel (%p1286) target = $region88
      $region87: #{resblock_forward.3} parent=63 // pred_region
        %p1289 = scmp.lt.s32.totalorder %s22, 1
        %s1290 = scalar_select %p1289, %s22, 1
        %s1291 = scalar_lea.vmem %s9, %s1290
      $region88: #{resblock_forward.3} parent=63 // pred_fallthru
        _
    $region64: #{resblock_forward.3} parent=5 // pred_fallthru
      _
  $region6: #{resblock_forward.3} parent=0 // loop_footer
    %s20 = sadd.s32 1, %s16
  $region7: #{resblock_forward.3} parent=0 // loop_footer_branch
    %15 = sbr.rel target = $region3
  $region8: #{resblock_forward.3} parent=0 // loop_exit
    _

// kernel: resblock_forward.4
$region0: #{resblock_forward.4}
  #allocation0 [shape = 'u32[]', space=smem, size = 0x4, offset = 0x4, fixed_abs, tag = 'smem constant byte address 0x4 - core index']
  #allocation1 [shape = 'u32[72,128]{1,0:T(1,128)}', space=vmem, size = 0x9000, scoped, tag = 'internal scratch']
  #allocation2 [shape = 'f32[18,18,128]{2,1,0:T(8,128)}', space=vmem, size = 0x36000, scoped, tag = 'scratch operand']
  %s0 = inlined_call_operand.vmem [shape: f32[2,256,128], index: 0, kind: input, shape index: {}]
  %s1 = inlined_call_operand.vmem [shape: f32[1,128], index: 1, kind: input, shape index: {}]
  %s2 = inlined_call_operand.vmem [shape: f32[1,128], index: 2, kind: input, shape index: {}]
  %s3 = inlined_call_operand.vmem [shape: bf16[1152,128], index: 3, kind: input, shape index: {}]
  %s4 = inlined_call_operand.vmem [shape: f32[2,256,128], index: 4, kind: output, shape index: {0}]
  %s5 = inlined_call_operand.vmem [shape: f32[2,1,128], index: 5, kind: output, shape index: {1}]
  %s6 = inlined_call_operand.vmem [shape: f32[2,1,128], index: 6, kind: output, shape index: {2}]
  %7 = xla_tuple %s4, %s5, %s6
  %s8 = sld [smem:[#allocation0]]
  $region65: #{resblock_forward.4} parent=0
    _
  %s10 = ssub.s32 1, %s8
  %s11 = scalar_select 0, %s10, %s8
  loop: start=0, step=1, limit=4
  $region2: #{resblock_forward.4} parent=0 // loop_pre_header
    _
  $region3: #{resblock_forward.4} parent=0 // loop_header
    %s13 = sphi 0, %s17
    %p14 = scmp.ge.s32.totalorder %s13, 4
    %s23 = sphi 0, %s25
    %s26 = sphi 0, %s23
    %s27 = sphi 0, %s26
    %s43 = sphi 0, %s27
    %s47 = sphi 0, %s47
    %s49 = sphi 0, %s47
    %s50 = sphi 0, %s49
    %s64 = sphi 0, %s50
    %s68 = sphi 0, %s68
    %s70 = sphi 0, %s68
    %s71 = sphi 0, %s70
    %s85 = sphi 0, %s71
    %s89 = sphi 0, %s89
    %s91 = sphi 0, %s89
    %s92 = sphi 0, %s91
    %s106 = sphi 0, %s92
    %s112 = sphi 0, %s114
    %s115 = sphi 0, %s112
    %s116 = sphi 0, %s115
    %s132 = sphi 0, %s116
    %s138 = sphi 0, %s140
    %s141 = sphi 0, %s138
    %s142 = sphi 0, %s141
    %s158 = sphi 0, %s142
    %s164 = sphi 0, %s166
    %s167 = sphi 0, %s164
    %s168 = sphi 0, %s167
    %s184 = sphi 0, %s168
  $region4: #{resblock_forward.4} parent=0 // loop_header_branch
    %16 = sbr.rel (%p14) target = $region8
  $region5: #{resblock_forward.4} parent=0 // loop_body
    %s18 = ssub.s32 %s13, 1
    %s19 = ssub.s32 %s13, 2
    %s20 = sadd.s32 %s13, 1
    %s21 = ssub.s32 %s13, %s20
    %p22 = scmp.eq.s32.totalorder %s21, 0
    %s24 = sadd.s32 %s23, 1
    %s25 = scalar_select %p22, %s23, %s24
    %p28 = pneg %p22
    %p29 = scmp.eq.s32.totalorder %s13, 1
    %p30 = por %p28, %p29
    %p31 = scmp.ne.s32.totalorder %s23, %s26
    %p32 = scmp.eq.s32.totalorder %s13, 0
    %p33 = por %p31, %p32
    %p34 = scmp.ne.s32.totalorder %s23, %s26
    %p35 = scmp.eq.s32.totalorder %s18, 1
    %p36 = por %p34, %p35
    %p37 = scmp.ne.s32.totalorder %s26, %s27
    %p38 = scmp.eq.s32.totalorder %s18, 0
    %p39 = por %p37, %p38
    %p40 = scmp.ne.s32.totalorder %s26, %s27
    %p41 = scmp.eq.s32.totalorder %s19, 1
    %p42 = por %p40, %p41
    %p44 = scmp.ne.s32.totalorder %s27, %s43
    %p45 = scmp.eq.s32.totalorder %s19, 0
    %p46 = por %p44, %p45
    %s48 = sadd.s32 %s47, 1
    %p51 = scmp.eq.s32.totalorder %s13, 1
    %p52 = scmp.ne.s32.totalorder %s47, %s49
    %p53 = scmp.eq.s32.totalorder %s13, 0
    %p54 = por %p52, %p53
    %p55 = scmp.ne.s32.totalorder %s47, %s49
    %p56 = scmp.eq.s32.totalorder %s18, 1
    %p57 = por %p55, %p56
    %p58 = scmp.ne.s32.totalorder %s49, %s50
    %p59 = scmp.eq.s32.totalorder %s18, 0
    %p60 = por %p58, %p59
    %p61 = scmp.ne.s32.totalorder %s49, %s50
    %p62 = scmp.eq.s32.totalorder %s19, 1
    %p63 = por %p61, %p62
    %p65 = scmp.ne.s32.totalorder %s50, %s64
    %p66 = scmp.eq.s32.totalorder %s19, 0
    %p67 = por %p65, %p66
    %s69 = sadd.s32 %s68, 1
    %p72 = scmp.eq.s32.totalorder %s13, 1
    %p73 = scmp.ne.s32.totalorder %s68, %s70
    %p74 = scmp.eq.s32.totalorder %s13, 0
    %p75 = por %p73, %p74
    %p76 = scmp.ne.s32.totalorder %s68, %s70
    %p77 = scmp.eq.s32.totalorder %s18, 1
    %p78 = por %p76, %p77
    %p79 = scmp.ne.s32.totalorder %s70, %s71
    %p80 = scmp.eq.s32.totalorder %s18, 0
    %p81 = por %p79, %p80
    %p82 = scmp.ne.s32.totalorder %s70, %s71
    %p83 = scmp.eq.s32.totalorder %s19, 1
    %p84 = por %p82, %p83
    %p86 = scmp.ne.s32.totalorder %s71, %s85
    %p87 = scmp.eq.s32.totalorder %s19, 0
    %p88 = por %p86, %p87
    %s90 = sadd.s32 %s89, 1
    %p93 = scmp.eq.s32.totalorder %s13, 1
    %p94 = scmp.ne.s32.totalorder %s89, %s91
    %p95 = scmp.eq.s32.totalorder %s13, 0
    %p96 = por %p94, %p95
    %p97 = scmp.ne.s32.totalorder %s89, %s91
    %p98 = scmp.eq.s32.totalorder %s18, 1
    %p99 = por %p97, %p98
    %p100 = scmp.ne.s32.totalorder %s91, %s92
    %p101 = scmp.eq.s32.totalorder %s18, 0
    %p102 = por %p100, %p101
    %p103 = scmp.ne.s32.totalorder %s91, %s92
    %p104 = scmp.eq.s32.totalorder %s19, 1
    %p105 = por %p103, %p104
    %p107 = scmp.ne.s32.totalorder %s92, %s106
    %p108 = scmp.eq.s32.totalorder %s19, 0
    %p109 = por %p107, %p108
    %s110 = ssub.s32 %s13, %s20
    %p111 = scmp.eq.s32.totalorder %s110, 0
    %s113 = sadd.s32 %s112, 1
    %s114 = scalar_select %p111, %s112, %s113
    %p117 = pneg %p111
    %p118 = scmp.eq.s32.totalorder %s13, 1
    %p119 = por %p117, %p118
    %p120 = scmp.ne.s32.totalorder %s112, %s115
    %p121 = scmp.eq.s32.totalorder %s13, 0
    %p122 = por %p120, %p121
    %p123 = scmp.ne.s32.totalorder %s112, %s115
    %p124 = scmp.eq.s32.totalorder %s18, 1
    %p125 = por %p123, %p124
    %p126 = scmp.ne.s32.totalorder %s115, %s116
    %p127 = scmp.eq.s32.totalorder %s18, 0
    %p128 = por %p126, %p127
    %p129 = scmp.ne.s32.totalorder %s115, %s116
    %p130 = scmp.eq.s32.totalorder %s19, 1
    %p131 = por %p129, %p130
    %p133 = scmp.ne.s32.totalorder %s116, %s132
    %p134 = scmp.eq.s32.totalorder %s19, 0
    %p135 = por %p133, %p134
    %s136 = ssub.s32 %s13, %s20
    %p137 = scmp.eq.s32.totalorder %s136, 0
    %s139 = sadd.s32 %s138, 1
    %s140 = scalar_select %p137, %s138, %s139
    %p143 = pneg %p137
    %p144 = scmp.eq.s32.totalorder %s13, 1
    %p145 = por %p143, %p144
    %p146 = scmp.ne.s32.totalorder %s138, %s141
    %p147 = scmp.eq.s32.totalorder %s13, 0
    %p148 = por %p146, %p147
    %p149 = scmp.ne.s32.totalorder %s138, %s141
    %p150 = scmp.eq.s32.totalorder %s18, 1
    %p151 = por %p149, %p150
    %p152 = scmp.ne.s32.totalorder %s141, %s142
    %p153 = scmp.eq.s32.totalorder %s18, 0
    %p154 = por %p152, %p153
    %p155 = scmp.ne.s32.totalorder %s141, %s142
    %p156 = scmp.eq.s32.totalorder %s19, 1
    %p157 = por %p155, %p156
    %p159 = scmp.ne.s32.totalorder %s142, %s158
    %p160 = scmp.eq.s32.totalorder %s19, 0
    %p161 = por %p159, %p160
    %s162 = ssub.s32 %s13, %s20
    %p163 = scmp.eq.s32.totalorder %s162, 0
    %s165 = sadd.s32 %s164, 1
    %s166 = scalar_select %p163, %s164, %s165
    %p169 = pneg %p163
    %p170 = scmp.eq.s32.totalorder %s13, 1
    %p171 = por %p169, %p170
    %p172 = scmp.ne.s32.totalorder %s164, %s167
    %p173 = scmp.eq.s32.totalorder %s13, 0
    %p174 = por %p172, %p173
    %p175 = scmp.ne.s32.totalorder %s164, %s167
    %p176 = scmp.eq.s32.totalorder %s18, 1
    %p177 = por %p175, %p176
    %p178 = scmp.ne.s32.totalorder %s167, %s168
    %p179 = scmp.eq.s32.totalorder %s18, 0
    %p180 = por %p178, %p179
    %p181 = scmp.ne.s32.totalorder %s167, %s168
    %p182 = scmp.eq.s32.totalorder %s19, 1
    %p183 = por %p181, %p182
    %p185 = scmp.ne.s32.totalorder %s168, %s184
    %p186 = scmp.eq.s32.totalorder %s19, 0
    %p187 = por %p185, %p186
    %p188 = scmp.le.s32.totalorder 1, %s13
    %p189 = scmp.lt.s32.totalorder %s13, 3
    %p190 = pnand %p188, %p189
    %p191 = pneg %p190
    // Predicated region
    $region9: #{resblock_forward.4} parent=5 // pred_check
      _
    $region10: #{resblock_forward.4} parent=5 // pred_check_branch
      %193 = sbr.rel (%p190) target = $region12
    $region11: #{resblock_forward.4} parent=5 // pred_region
      %s194 = ssub.s32 %s13, 1
      // Predicated region
      $region13: #{resblock_forward.4} parent=11 // pred_check
        %p195 = pneg %p60
      $region14: #{resblock_forward.4} parent=11 // pred_check_branch
        %197 = sbr.rel (%p195) target = $region16
      $region15: #{resblock_forward.4} parent=11 // pred_region
        _
      $region16: #{resblock_forward.4} parent=11 // pred_fallthru
        _
      // Predicated region
      $region17: #{resblock_forward.4} parent=11 // pred_check
        %p198 = pneg %p81
      $region18: #{resblock_forward.4} parent=11 // pred_check_branch
        %200 = sbr.rel (%p198) target = $region20
      $region19: #{resblock_forward.4} parent=11 // pred_region
        _
      $region20: #{resblock_forward.4} parent=11 // pred_fallthru
        _
      // Predicated region
      $region21: #{resblock_forward.4} parent=11 // pred_check
        %p201 = pneg %p102
      $region22: #{resblock_forward.4} parent=11 // pred_check_branch
        %203 = sbr.rel (%p201) target = $region24
      $region23: #{resblock_forward.4} parent=11 // pred_region
        _
      $region24: #{resblock_forward.4} parent=11 // pred_fallthru
        _
    $region12: #{resblock_forward.4} parent=5 // pred_fallthru
      _
    %p204 = scmp.lt.s32.totalorder %s13, 2
    // Predicated region
    $region25: #{resblock_forward.4} parent=5 // pred_check
      %p205 = pneg %p204
    $region26: #{resblock_forward.4} parent=5 // pred_check_branch
      %207 = sbr.rel (%p205) target = $region28
    $region27: #{resblock_forward.4} parent=5 // pred_region
      // Predicated region
      $region29: #{resblock_forward.4} parent=27 // pred_check
        %p208 = pneg %p33
      $region30: #{resblock_forward.4} parent=27 // pred_check_branch
        %210 = sbr.rel (%p208) target = $region32
      $region31: #{resblock_forward.4} parent=27 // pred_region
        %p211 = scmp.lt.s32.totalorder %s13, 1
        %s212 = scalar_select %p211, %s13, 1
        %s213 = smul.addr %s212, 32
        %s214 = smul.addr %s213, 8
        %s215 = scalar_lea.vmem %s0, %s214
      $region32: #{resblock_forward.4} parent=27 // pred_fallthru
        _
    $region28: #{resblock_forward.4} parent=5 // pred_fallthru
      _
    %p216 = scmp.le.s32.totalorder 1, %s13
    %p217 = scmp.lt.s32.totalorder %s13, 3
    %p218 = pnand %p216, %p217
    %p219 = pneg %p218
    // Predicated region
    $region33: #{resblock_forward.4} parent=5 // pred_check
      _
    $region34: #{resblock_forward.4} parent=5 // pred_check_branch
      %221 = sbr.rel (%p218) target = $region36
    $region35: #{resblock_forward.4} parent=5 // pred_region
      %s222 = ssub.s32 %s13, 1
      %p223 = scmp.lt.s32.totalorder %s18, 1
      %s224 = scalar_select %p223, %s18, 1
      %s225 = smul.addr %s224, 32
      %s226 = smul.addr %s225, 8
      %s227 = scalar_lea.vmem %s0, %s226
      %p228 = pneg %p39
      %p229 = pneg %p36
      %p230 = pneg %p60
      %p231 = pneg %p57
      %p232 = pneg %p81
      %p233 = pneg %p78
      %p234 = pneg %p102
      %p235 = pneg %p99
      %p236 = pneg %p128
      %p237 = pneg %p125
      %p238 = scmp.lt.s32.totalorder %s18, 1
      %s239 = scalar_select %p238, %s18, 1
      %s240 = smul.addr %s239, 32
      %s241 = smul.addr %s240, 8
      %s242 = scalar_lea.vmem %s4, %s241
      %p243 = pneg %p154
      %p244 = pneg %p151
      %p245 = scmp.lt.s32.totalorder %s18, 1
      %s246 = scalar_select %p245, %s18, 1
      %s247 = scalar_lea.vmem %s5, %s246
      %p248 = pneg %p180
      %p249 = pneg %p177
      %p250 = scmp.lt.s32.totalorder %s18, 1
      %s251 = scalar_select %p250, %s18, 1
      %s252 = scalar_lea.vmem %s6, %s251
      %p253 = scmp.lt.s32.totalorder %s18, 1
      %s254 = scalar_select %p253, %s18, 1
      %s255 = smul.addr %s254, 32
      %s256 = smul.addr %s255, 8
      %s257 = scalar_lea.vmem %s0, %s256
      %p258 = scmp.lt.s32.totalorder %s18, 1
      %s259 = scalar_select %p258, %s18, 1
      %s260 = smul.addr %s259, 32
      %s261 = smul.addr %s260, 8
      %s262 = scalar_lea.vmem %s4, %s261
      %p263 = scmp.lt.s32.totalorder %s18, 1
      %s264 = scalar_select %p263, %s18, 1
      %s265 = scalar_lea.vmem %s5, %s264
      %p266 = scmp.lt.s32.totalorder %s18, 1
      %s267 = scalar_select %p266, %s18, 1
      %s268 = scalar_lea.vmem %s6, %s267
      %v269 = vld [vmem:[%s257] sm:$0xff]
      %v270 = vld [vmem:[%s257 + $0x8] sm:$0xff]
      %v271 = vld [vmem:[%s257 + $0x10] sm:$0xff]
      %v272 = vld [vmem:[%s257 + $0x18] sm:$0xff]
      %v273 = vld [vmem:[%s257 + $0x20] sm:$0xff]
      %v274 = vld [vmem:[%s257 + $0x28] sm:$0xff]
      %v275 = vld [vmem:[%s257 + $0x30] sm:$0xff]
      %v276 = vld [vmem:[%s257 + $0x38] sm:$0xff]
      %v277 = vld [vmem:[%s257 + $0x40] sm:$0xff]
      %v278 = vld [vmem:[%s257 + $0x48] sm:$0xff]
      %v279 = vld [vmem:[%s257 + $0x50] sm:$0xff]
      %v280 = vld [vmem:[%s257 + $0x58] sm:$0xff]
      %v281 = vld [vmem:[%s257 + $0x60] sm:$0xff]
      %v282 = vld [vmem:[%s257 + $0x68] sm:$0xff]
      %v283 = vld [vmem:[%s257 + $0x70] sm:$0xff]
      %v284 = vld [vmem:[%s257 + $0x78] sm:$0xff]
      %v285 = vld [vmem:[%s257 + $0x80] sm:$0xff]
      %v286 = vld [vmem:[%s257 + $0x88] sm:$0xff]
      %v287 = vld [vmem:[%s257 + $0x90] sm:$0xff]
      %v288 = vld [vmem:[%s257 + $0x98] sm:$0xff]
      %v289 = vld [vmem:[%s257 + $0xa0] sm:$0xff]
      %v290 = vld [vmem:[%s257 + $0xa8] sm:$0xff]
      %v291 = vld [vmem:[%s257 + $0xb0] sm:$0xff]
      %v292 = vld [vmem:[%s257 + $0xb8] sm:$0xff]
      %v293 = vld [vmem:[%s257 + $0xc0] sm:$0xff]
      %v294 = vld [vmem:[%s257 + $0xc8] sm:$0xff]
      %v295 = vld [vmem:[%s257 + $0xd0] sm:$0xff]
      %v296 = vld [vmem:[%s257 + $0xd8] sm:$0xff]
      %v297 = vld [vmem:[%s257 + $0xe0] sm:$0xff]
      %v298 = vld [vmem:[%s257 + $0xe8] sm:$0xff]
      %v299 = vld [vmem:[%s257 + $0xf0] sm:$0xff]
      %v300 = vld [vmem:[%s257 + $0xf8] sm:$0xff]
      %v301 = vld [vmem:[%s1] sm:$0x1]
      %v303 = vperm.slane %v301, 0
      %v305 = vmul.f32 %v269, %v303
      %v306 = vmul.f32 %v270, %v303
      %v307 = vmul.f32 %v271, %v303
      %v308 = vmul.f32 %v272, %v303
      %v309 = vmul.f32 %v273, %v303
      %v310 = vmul.f32 %v274, %v303
      %v311 = vmul.f32 %v275, %v303
      %v312 = vmul.f32 %v276, %v303
      %v313 = vmul.f32 %v277, %v303
      %v314 = vmul.f32 %v278, %v303
      %v315 = vmul.f32 %v279, %v303
      %v316 = vmul.f32 %v280, %v303
      %v317 = vmul.f32 %v281, %v303
      %v318 = vmul.f32 %v282, %v303
      %v319 = vmul.f32 %v283, %v303
      %v320 = vmul.f32 %v284, %v303
      %v321 = vmul.f32 %v285, %v303
      %v322 = vmul.f32 %v286, %v303
      %v323 = vmul.f32 %v287, %v303
      %v324 = vmul.f32 %v288, %v303
      %v325 = vmul.f32 %v289, %v303
      %v326 = vmul.f32 %v290, %v303
      %v327 = vmul.f32 %v291, %v303
      %v328 = vmul.f32 %v292, %v303
      %v329 = vmul.f32 %v293, %v303
      %v330 = vmul.f32 %v294, %v303
      %v331 = vmul.f32 %v295, %v303
      %v332 = vmul.f32 %v296, %v303
      %v333 = vmul.f32 %v297, %v303
      %v334 = vmul.f32 %v298, %v303
      %v335 = vmul.f32 %v299, %v303
      %v336 = vmul.f32 %v300, %v303
      %v337 = vld [vmem:[%s2] sm:$0x1]
      %v339 = vperm.slane %v337, 0
      %v341 = vadd.f32 %v305, %v339
      %v342 = vadd.f32 %v306, %v339
      %v343 = vadd.f32 %v307, %v339
      %v344 = vadd.f32 %v308, %v339
      %v345 = vadd.f32 %v309, %v339
      %v346 = vadd.f32 %v310, %v339
      %v347 = vadd.f32 %v311, %v339
      %v348 = vadd.f32 %v312, %v339
      %v349 = vadd.f32 %v313, %v339
      %v350 = vadd.f32 %v314, %v339
      %v351 = vadd.f32 %v315, %v339
      %v352 = vadd.f32 %v316, %v339
      %v353 = vadd.f32 %v317, %v339
      %v354 = vadd.f32 %v318, %v339
      %v355 = vadd.f32 %v319, %v339
      %v356 = vadd.f32 %v320, %v339
      %v357 = vadd.f32 %v321, %v339
      %v358 = vadd.f32 %v322, %v339
      %v359 = vadd.f32 %v323, %v339
      %v360 = vadd.f32 %v324, %v339
      %v361 = vadd.f32 %v325, %v339
      %v362 = vadd.f32 %v326, %v339
      %v363 = vadd.f32 %v327, %v339
      %v364 = vadd.f32 %v328, %v339
      %v365 = vadd.f32 %v329, %v339
      %v366 = vadd.f32 %v330, %v339
      %v367 = vadd.f32 %v331, %v339
      %v368 = vadd.f32 %v332, %v339
      %v369 = vadd.f32 %v333, %v339
      %v370 = vadd.f32 %v334, %v339
      %v371 = vadd.f32 %v335, %v339
      %v372 = vadd.f32 %v336, %v339
      %v373 = vmax.f32 %v341, 0.0
      %v374 = vmax.f32 %v342, 0.0
      %v375 = vmax.f32 %v343, 0.0
      %v376 = vmax.f32 %v344, 0.0
      %v377 = vmax.f32 %v345, 0.0
      %v378 = vmax.f32 %v346, 0.0
      %v379 = vmax.f32 %v347, 0.0
      %v380 = vmax.f32 %v348, 0.0
      %v381 = vmax.f32 %v349, 0.0
      %v382 = vmax.f32 %v350, 0.0
      %v383 = vmax.f32 %v351, 0.0
      %v384 = vmax.f32 %v352, 0.0
      %v385 = vmax.f32 %v353, 0.0
      %v386 = vmax.f32 %v354, 0.0
      %v387 = vmax.f32 %v355, 0.0
      %v388 = vmax.f32 %v356, 0.0
      %v389 = vmax.f32 %v357, 0.0
      %v390 = vmax.f32 %v358, 0.0
      %v391 = vmax.f32 %v359, 0.0
      %v392 = vmax.f32 %v360, 0.0
      %v393 = vmax.f32 %v361, 0.0
      %v394 = vmax.f32 %v362, 0.0
      %v395 = vmax.f32 %v363, 0.0
      %v396 = vmax.f32 %v364, 0.0
      %v397 = vmax.f32 %v365, 0.0
      %v398 = vmax.f32 %v366, 0.0
      %v399 = vmax.f32 %v367, 0.0
      %v400 = vmax.f32 %v368, 0.0
      %v401 = vmax.f32 %v369, 0.0
      %v402 = vmax.f32 %v370, 0.0
      %v403 = vmax.f32 %v371, 0.0
      %v404 = vmax.f32 %v372, 0.0
      %405 = vst [vmem:[#allocation2] sm:$0xff] 0.0
      %406 = vst [vmem:[#allocation2 + $0x8] sm:$0xff] 0.0
      %407 = vst [vmem:[#allocation2 + $0x10] sm:$0x3] 0.0
      %s408 = scalar_lea.vmem [#allocation2], 408
      %409 = vst [vmem:[%s408] sm:$0xff] 0.0
      %410 = vst [vmem:[%s408 + $0x8] sm:$0xff] 0.0
      %411 = vst [vmem:[%s408 + $0x10] sm:$0x3] 0.0
      %s412 = scalar_lea.vmem [#allocation2], 24
      %413 = vst [vmem:[%s412] sm:$0x1] 0.0
      %414 = vst [vmem:[%s412 + $0x18] sm:$0x1] 0.0
      %415 = vst [vmem:[%s412 + $0x30] sm:$0x1] 0.0
      %416 = vst [vmem:[%s412 + $0x48] sm:$0x1] 0.0
      %417 = vst [vmem:[%s412 + $0x60] sm:$0x1] 0.0
      %418 = vst [vmem:[%s412 + $0x78] sm:$0x1] 0.0
      %419 = vst [vmem:[%s412 + $0x90] sm:$0x1] 0.0
      %420 = vst [vmem:[%s412 + $0xa8] sm:$0x1] 0.0
      %421 = vst [vmem:[%s412 + $0xc0] sm:$0x1] 0.0
      %422 = vst [vmem:[%s412 + $0xd8] sm:$0x1] 0.0
      %423 = vst [vmem:[%s412 + $0xf0] sm:$0x1] 0.0
      %424 = vst [vmem:[%s412 + $0x108] sm:$0x1] 0.0
      %425 = vst [vmem:[%s412 + $0x120] sm:$0x1] 0.0
      %426 = vst [vmem:[%s412 + $0x138] sm:$0x1] 0.0
      %427 = vst [vmem:[%s412 + $0x150] sm:$0x1] 0.0
      %428 = vst [vmem:[%s412 + $0x168] sm:$0x1] 0.0
      %429 = vst [vmem:[%s412 + $0x11] sm:$0x1] 0.0
      %430 = vst [vmem:[%s412 + $0x29] sm:$0x1] 0.0
      %431 = vst [vmem:[%s412 + $0x41] sm:$0x1] 0.0
      %432 = vst [vmem:[%s412 + $0x59] sm:$0x1] 0.0
      %433 = vst [vmem:[%s412 + $0x71] sm:$0x1] 0.0
      %434 = vst [vmem:[%s412 + $0x89] sm:$0x1] 0.0
      %435 = vst [vmem:[%s412 + $0xa1] sm:$0x1] 0.0
      %436 = vst [vmem:[%s412 + $0xb9] sm:$0x1] 0.0
      %437 = vst [vmem:[%s412 + $0xd1] sm:$0x1] 0.0
      %438 = vst [vmem:[%s412 + $0xe9] sm:$0x1] 0.0
      %439 = vst [vmem:[%s412 + $0x101] sm:$0x1] 0.0
      %440 = vst [vmem:[%s412 + $0x119] sm:$0x1] 0.0
      %441 = vst [vmem:[%s412 + $0x131] sm:$0x1] 0.0
      %442 = vst [vmem:[%s412 + $0x149] sm:$0x1] 0.0
      %443 = vst [vmem:[%s412 + $0x161] sm:$0x1] 0.0
      %444 = vst [vmem:[%s412 + $0x179] sm:$0x1] 0.0
      %445 = vst [vmem:[%s412 + $0x1] sm:$0xff] %v373
      %446 = vst [vmem:[%s412 + $0x9] sm:$0xff] %v374
      %447 = vst [vmem:[%s412 + $0x19] sm:$0xff] %v375
      %448 = vst [vmem:[%s412 + $0x21] sm:$0xff] %v376
      %449 = vst [vmem:[%s412 + $0x31] sm:$0xff] %v377
      %450 = vst [vmem:[%s412 + $0x39] sm:$0xff] %v378
      %451 = vst [vmem:[%s412 + $0x49] sm:$0xff] %v379
      %452 = vst [vmem:[%s412 + $0x51] sm:$0xff] %v380
      %453 = vst [vmem:[%s412 + $0x61] sm:$0xff] %v381
      %454 = vst [vmem:[%s412 + $0x69] sm:$0xff] %v382
      %455 = vst [vmem:[%s412 + $0x79] sm:$0xff] %v383
      %456 = vst [vmem:[%s412 + $0x81] sm:$0xff] %v384
      %457 = vst [vmem:[%s412 + $0x91] sm:$0xff] %v385
      %458 = vst [vmem:[%s412 + $0x99] sm:$0xff] %v386
      %459 = vst [vmem:[%s412 + $0xa9] sm:$0xff] %v387
      %460 = vst [vmem:[%s412 + $0xb1] sm:$0xff] %v388
      %461 = vst [vmem:[%s412 + $0xc1] sm:$0xff] %v389
      %462 = vst [vmem:[%s412 + $0xc9] sm:$0xff] %v390
      %463 = vst [vmem:[%s412 + $0xd9] sm:$0xff] %v391
      %464 = vst [vmem:[%s412 + $0xe1] sm:$0xff] %v392
      %465 = vst [vmem:[%s412 + $0xf1] sm:$0xff] %v393
      %466 = vst [vmem:[%s412 + $0xf9] sm:$0xff] %v394
      %467 = vst [vmem:[%s412 + $0x109] sm:$0xff] %v395
      %468 = vst [vmem:[%s412 + $0x111] sm:$0xff] %v396
      %469 = vst [vmem:[%s412 + $0x121] sm:$0xff] %v397
      %470 = vst [vmem:[%s412 + $0x129] sm:$0xff] %v398
      %471 = vst [vmem:[%s412 + $0x139] sm:$0xff] %v399
      %472 = vst [vmem:[%s412 + $0x141] sm:$0xff] %v400
      %473 = vst [vmem:[%s412 + $0x151] sm:$0xff] %v401
      %474 = vst [vmem:[%s412 + $0x159] sm:$0xff] %v402
      %475 = vst [vmem:[%s412 + $0x169] sm:$0xff] %v403
      %476 = vst [vmem:[%s412 + $0x171] sm:$0xff] %v404
      %v477 = vld [vmem:[#allocation2] sm:$0xff]
      %v478 = vld [vmem:[#allocation2 + $0x8] sm:$0xff]
      %v479 = vld [vmem:[#allocation2 + $0x18] sm:$0xff]
      %v480 = vld [vmem:[#allocation2 + $0x20] sm:$0xff]
      %v481 = vld [vmem:[#allocation2 + $0x30] sm:$0xff]
      %v482 = vld [vmem:[#allocation2 + $0x38] sm:$0xff]
      %v483 = vld [vmem:[#allocation2 + $0x48] sm:$0xff]
      %v484 = vld [vmem:[#allocation2 + $0x50] sm:$0xff]
      %v485 = vld [vmem:[#allocation2 + $0x60] sm:$0xff]
      %v486 = vld [vmem:[#allocation2 + $0x68] sm:$0xff]
      %v487 = vld [vmem:[#allocation2 + $0x78] sm:$0xff]
      %v488 = vld [vmem:[#allocation2 + $0x80] sm:$0xff]
      %v489 = vld [vmem:[#allocation2 + $0x90] sm:$0xff]
      %v490 = vld [vmem:[#allocation2 + $0x98] sm:$0xff]
      %v491 = vld [vmem:[#allocation2 + $0xa8] sm:$0xff]
      %v492 = vld [vmem:[#allocation2 + $0xb0] sm:$0xff]
      %v493 = vld [vmem:[#allocation2 + $0xc0] sm:$0xff]
      %v494 = vld [vmem:[#allocation2 + $0xc8] sm:$0xff]
      %v495 = vld [vmem:[#allocation2 + $0xd8] sm:$0xff]
      %v496 = vld [vmem:[#allocation2 + $0xe0] sm:$0xff]
      %v497 = vld [vmem:[#allocation2 + $0xf0] sm:$0xff]
      %v498 = vld [vmem:[#allocation2 + $0xf8] sm:$0xff]
      %v499 = vld [vmem:[#allocation2 + $0x108] sm:$0xff]
      %v500 = vld [vmem:[#allocation2 + $0x110] sm:$0xff]
      %v501 = vld [vmem:[#allocation2 + $0x120] sm:$0xff]
      %v502 = vld [vmem:[#allocation2 + $0x128] sm:$0xff]
      %v503 = vld [vmem:[#allocation2 + $0x138] sm:$0xff]
      %v504 = vld [vmem:[#allocation2 + $0x140] sm:$0xff]
      %v505 = vld [vmem:[#allocation2 + $0x150] sm:$0xff]
      %v506 = vld [vmem:[#allocation2 + $0x158] sm:$0xff]
      %v507 = vld [vmem:[#allocation2 + $0x168] sm:$0xff]
      %v508 = vld [vmem:[#allocation2 + $0x170] sm:$0xff]
      %v509 = vpack.c.bf16 %v477, %v477
      %v510 = vpack.c.bf16 %v478, %v478
      %v511 = vpack.c.bf16 %v479, %v479
      %v512 = vpack.c.bf16 %v480, %v480
      %v513 = vpack.c.bf16 %v481, %v481
      %v514 = vpack.c.bf16 %v482, %v482
      %v515 = vpack.c.bf16 %v483, %v483
      %v516 = vpack.c.bf16 %v484, %v484
      %v517 = vpack.c.bf16 %v485, %v485
      %v518 = vpack.c.bf16 %v486, %v486
      %v519 = vpack.c.bf16 %v487, %v487
      %v520 = vpack.c.bf16 %v488, %v488
      %v521 = vpack.c.bf16 %v489, %v489
      %v522 = vpack.c.bf16 %v490, %v490
      %v523 = vpack.c.bf16 %v491, %v491
      %v524 = vpack.c.bf16 %v492, %v492
      %v525 = vpack.c.bf16 %v493, %v493
      %v526 = vpack.c.bf16 %v494, %v494
      %v527 = vpack.c.bf16 %v495, %v495
      %v528 = vpack.c.bf16 %v496, %v496
      %v529 = vpack.c.bf16 %v497, %v497
      %v530 = vpack.c.bf16 %v498, %v498
      %v531 = vpack.c.bf16 %v499, %v499
      %v532 = vpack.c.bf16 %v500, %v500
      %v533 = vpack.c.bf16 %v501, %v501
      %v534 = vpack.c.bf16 %v502, %v502
      %v535 = vpack.c.bf16 %v503, %v503
      %v536 = vpack.c.bf16 %v504, %v504
      %v537 = vpack.c.bf16 %v505, %v505
      %v538 = vpack.c.bf16 %v506, %v506
      %v539 = vpack.c.bf16 %v507, %v507
      %v540 = vpack.c.bf16 %v508, %v508
      %v541 = vld [vmem:[#allocation2 + $0x1] sm:$0xff]
      %v542 = vld [vmem:[#allocation2 + $0x9] sm:$0xff]
      %v543 = vld [vmem:[#allocation2 + $0x19] sm:$0xff]
      %v544 = vld [vmem:[#allocation2 + $0x21] sm:$0xff]
      %v545 = vld [vmem:[#allocation2 + $0x31] sm:$0xff]
      %v546 = vld [vmem:[#allocation2 + $0x39] sm:$0xff]
      %v547 = vld [vmem:[#allocation2 + $0x49] sm:$0xff]
      %v548 = vld [vmem:[#allocation2 + $0x51] sm:$0xff]
      %v549 = vld [vmem:[#allocation2 + $0x61] sm:$0xff]
      %v550 = vld [vmem:[#allocation2 + $0x69] sm:$0xff]
      %v551 = vld [vmem:[#allocation2 + $0x79] sm:$0xff]
      %v552 = vld [vmem:[#allocation2 + $0x81] sm:$0xff]
      %v553 = vld [vmem:[#allocation2 + $0x91] sm:$0xff]
      %v554 = vld [vmem:[#allocation2 + $0x99] sm:$0xff]
      %v555 = vld [vmem:[#allocation2 + $0xa9] sm:$0xff]
      %v556 = vld [vmem:[#allocation2 + $0xb1] sm:$0xff]
      %v557 = vld [vmem:[#allocation2 + $0xc1] sm:$0xff]
      %v558 = vld [vmem:[#allocation2 + $0xc9] sm:$0xff]
      %v559 = vld [vmem:[#allocation2 + $0xd9] sm:$0xff]
      %v560 = vld [vmem:[#allocation2 + $0xe1] sm:$0xff]
      %v561 = vld [vmem:[#allocation2 + $0xf1] sm:$0xff]
      %v562 = vld [vmem:[#allocation2 + $0xf9] sm:$0xff]
      %v563 = vld [vmem:[#allocation2 + $0x109] sm:$0xff]
      %v564 = vld [vmem:[#allocation2 + $0x111] sm:$0xff]
      %v565 = vld [vmem:[#allocation2 + $0x121] sm:$0xff]
      %v566 = vld [vmem:[#allocation2 + $0x129] sm:$0xff]
      %v567 = vld [vmem:[#allocation2 + $0x139] sm:$0xff]
      %v568 = vld [vmem:[#allocation2 + $0x141] sm:$0xff]
      %v569 = vld [vmem:[#allocation2 + $0x151] sm:$0xff]
      %v570 = vld [vmem:[#allocation2 + $0x159] sm:$0xff]
      %v571 = vld [vmem:[#allocation2 + $0x169] sm:$0xff]
      %v572 = vld [vmem:[#allocation2 + $0x171] sm:$0xff]
      %v573 = vpack.c.bf16 %v541, %v541
      %v574 = vpack.c.bf16 %v542, %v542
      %v575 = vpack.c.bf16 %v543, %v543
      %v576 = vpack.c.bf16 %v544, %v544
      %v577 = vpack.c.bf16 %v545, %v545
      %v578 = vpack.c.bf16 %v546, %v546
      %v579 = vpack.c.bf16 %v547, %v547
      %v580 = vpack.c.bf16 %v548, %v548
      %v581 = vpack.c.bf16 %v549, %v549
      %v582 = vpack.c.bf16 %v550, %v550
      %v583 = vpack.c.bf16 %v551, %v551
      %v584 = vpack.c.bf16 %v552, %v552
      %v585 = vpack.c.bf16 %v553, %v553
      %v586 = vpack.c.bf16 %v554, %v554
      %v587 = vpack.c.bf16 %v555, %v555
      %v588 = vpack.c.bf16 %v556, %v556
      %v589 = vpack.c.bf16 %v557, %v557
      %v590 = vpack.c.bf16 %v558, %v558
      %v591 = vpack.c.bf16 %v559, %v559
      %v592 = vpack.c.bf16 %v560, %v560
      %v593 = vpack.c.bf16 %v561, %v561
      %v594 = vpack.c.bf16 %v562, %v562
      %v595 = vpack.c.bf16 %v563, %v563
      %v596 = vpack.c.bf16 %v564, %v564
      %v597 = vpack.c.bf16 %v565, %v565
      %v598 = vpack.c.bf16 %v566, %v566
      %v599 = vpack.c.bf16 %v567, %v567
      %v600 = vpack.c.bf16 %v568, %v568
      %v601 = vpack.c.bf16 %v569, %v569
      %v602 = vpack.c.bf16 %v570, %v570
      %v603 = vpack.c.bf16 %v571, %v571
      %v604 = vpack.c.bf16 %v572, %v572
      %v605 = vld [vmem:[#allocation2 + $0x2] sm:$0xff]
      %v606 = vld [vmem:[#allocation2 + $0xa] sm:$0xff]
      %v607 = vld [vmem:[#allocation2 + $0x1a] sm:$0xff]
      %v608 = vld [vmem:[#allocation2 + $0x22] sm:$0xff]
      %v609 = vld [vmem:[#allocation2 + $0x32] sm:$0xff]
      %v610 = vld [vmem:[#allocation2 + $0x3a] sm:$0xff]
      %v611 = vld [vmem:[#allocation2 + $0x4a] sm:$0xff]
      %v612 = vld [vmem:[#allocation2 + $0x52] sm:$0xff]
      %v613 = vld [vmem:[#allocation2 + $0x62] sm:$0xff]
      %v614 = vld [vmem:[#allocation2 + $0x6a] sm:$0xff]
      %v615 = vld [vmem:[#allocation2 + $0x7a] sm:$0xff]
      %v616 = vld [vmem:[#allocation2 + $0x82] sm:$0xff]
      %v617 = vld [vmem:[#allocation2 + $0x92] sm:$0xff]
      %v618 = vld [vmem:[#allocation2 + $0x9a] sm:$0xff]
      %v619 = vld [vmem:[#allocation2 + $0xaa] sm:$0xff]
      %v620 = vld [vmem:[#allocation2 + $0xb2] sm:$0xff]
      %v621 = vld [vmem:[#allocation2 + $0xc2] sm:$0xff]
      %v622 = vld [vmem:[#allocation2 + $0xca] sm:$0xff]
      %v623 = vld [vmem:[#allocation2 + $0xda] sm:$0xff]
      %v624 = vld [vmem:[#allocation2 + $0xe2] sm:$0xff]
      %v625 = vld [vmem:[#allocation2 + $0xf2] sm:$0xff]
      %v626 = vld [vmem:[#allocation2 + $0xfa] sm:$0xff]
      %v627 = vld [vmem:[#allocation2 + $0x10a] sm:$0xff]
      %v628 = vld [vmem:[#allocation2 + $0x112] sm:$0xff]
      %v629 = vld [vmem:[#allocation2 + $0x122] sm:$0xff]
      %v630 = vld [vmem:[#allocation2 + $0x12a] sm:$0xff]
      %v631 = vld [vmem:[#allocation2 + $0x13a] sm:$0xff]
      %v632 = vld [vmem:[#allocation2 + $0x142] sm:$0xff]
      %v633 = vld [vmem:[#allocation2 + $0x152] sm:$0xff]
      %v634 = vld [vmem:[#allocation2 + $0x15a] sm:$0xff]
      %v635 = vld [vmem:[#allocation2 + $0x16a] sm:$0xff]
      %v636 = vld [vmem:[#allocation2 + $0x172] sm:$0xff]
      %v637 = vpack.c.bf16 %v605, %v605
      %v638 = vpack.c.bf16 %v606, %v606
      %v639 = vpack.c.bf16 %v607, %v607
      %v640 = vpack.c.bf16 %v608, %v608
      %v641 = vpack.c.bf16 %v609, %v609
      %v642 = vpack.c.bf16 %v610, %v610
      %v643 = vpack.c.bf16 %v611, %v611
      %v644 = vpack.c.bf16 %v612, %v612
      %v645 = vpack.c.bf16 %v613, %v613
      %v646 = vpack.c.bf16 %v614, %v614
      %v647 = vpack.c.bf16 %v615, %v615
      %v648 = vpack.c.bf16 %v616, %v616
      %v649 = vpack.c.bf16 %v617, %v617
      %v650 = vpack.c.bf16 %v618, %v618
      %v651 = vpack.c.bf16 %v619, %v619
      %v652 = vpack.c.bf16 %v620, %v620
      %v653 = vpack.c.bf16 %v621, %v621
      %v654 = vpack.c.bf16 %v622, %v622
      %v655 = vpack.c.bf16 %v623, %v623
      %v656 = vpack.c.bf16 %v624, %v624
      %v657 = vpack.c.bf16 %v625, %v625
      %v658 = vpack.c.bf16 %v626, %v626
      %v659 = vpack.c.bf16 %v627, %v627
      %v660 = vpack.c.bf16 %v628, %v628
      %v661 = vpack.c.bf16 %v629, %v629
      %v662 = vpack.c.bf16 %v630, %v630
      %v663 = vpack.c.bf16 %v631, %v631
      %v664 = vpack.c.bf16 %v632, %v632
      %v665 = vpack.c.bf16 %v633, %v633
      %v666 = vpack.c.bf16 %v634, %v634
      %v667 = vpack.c.bf16 %v635, %v635
      %v668 = vpack.c.bf16 %v636, %v636
      %v669 = vld [vmem:[%s412] sm:$0xff]
      %v670 = vld [vmem:[%s412 + $0x8] sm:$0xff]
      %v671 = vld [vmem:[%s412 + $0x18] sm:$0xff]
      %v672 = vld [vmem:[%s412 + $0x20] sm:$0xff]
      %v673 = vld [vmem:[%s412 + $0x30] sm:$0xff]
      %v674 = vld [vmem:[%s412 + $0x38] sm:$0xff]
      %v675 = vld [vmem:[%s412 + $0x48] sm:$0xff]
      %v676 = vld [vmem:[%s412 + $0x50] sm:$0xff]
      %v677 = vld [vmem:[%s412 + $0x60] sm:$0xff]
      %v678 = vld [vmem:[%s412 + $0x68] sm:$0xff]
      %v679 = vld [vmem:[%s412 + $0x78] sm:$0xff]
      %v680 = vld [vmem:[%s412 + $0x80] sm:$0xff]
      %v681 = vld [vmem:[%s412 + $0x90] sm:$0xff]
      %v682 = vld [vmem:[%s412 + $0x98] sm:$0xff]
      %v683 = vld [vmem:[%s412 + $0xa8] sm:$0xff]
      %v684 = vld [vmem:[%s412 + $0xb0] sm:$0xff]
      %v685 = vld [vmem:[%s412 + $0xc0] sm:$0xff]
      %v686 = vld [vmem:[%s412 + $0xc8] sm:$0xff]
      %v687 = vld [vmem:[%s412 + $0xd8] sm:$0xff]
      %v688 = vld [vmem:[%s412 + $0xe0] sm:$0xff]
      %v689 = vld [vmem:[%s412 + $0xf0] sm:$0xff]
      %v690 = vld [vmem:[%s412 + $0xf8] sm:$0xff]
      %v691 = vld [vmem:[%s412 + $0x108] sm:$0xff]
      %v692 = vld [vmem:[%s412 + $0x110] sm:$0xff]
      %v693 = vld [vmem:[%s412 + $0x120] sm:$0xff]
      %v694 = vld [vmem:[%s412 + $0x128] sm:$0xff]
      %v695 = vld [vmem:[%s412 + $0x138] sm:$0xff]
      %v696 = vld [vmem:[%s412 + $0x140] sm:$0xff]
      %v697 = vld [vmem:[%s412 + $0x150] sm:$0xff]
      %v698 = vld [vmem:[%s412 + $0x158] sm:$0xff]
      %v699 = vld [vmem:[%s412 + $0x168] sm:$0xff]
      %v700 = vld [vmem:[%s412 + $0x170] sm:$0xff]
      %v701 = vpack.c.bf16 %v669, %v669
      %v702 = vpack.c.bf16 %v670, %v670
      %v703 = vpack.c.bf16 %v671, %v671
      %v704 = vpack.c.bf16 %v672, %v672
      %v705 = vpack.c.bf16 %v673, %v673
      %v706 = vpack.c.bf16 %v674, %v674
      %v707 = vpack.c.bf16 %v675, %v675
      %v708 = vpack.c.bf16 %v676, %v676
      %v709 = vpack.c.bf16 %v677, %v677
      %v710 = vpack.c.bf16 %v678, %v678
      %v711 = vpack.c.bf16 %v679, %v679
      %v712 = vpack.c.bf16 %v680, %v680
      %v713 = vpack.c.bf16 %v681, %v681
      %v714 = vpack.c.bf16 %v682, %v682
      %v715 = vpack.c.bf16 %v683, %v683
      %v716 = vpack.c.bf16 %v684, %v684
      %v717 = vpack.c.bf16 %v685, %v685
      %v718 = vpack.c.bf16 %v686, %v686
      %v719 = vpack.c.bf16 %v687, %v687
      %v720 = vpack.c.bf16 %v688, %v688
      %v721 = vpack.c.bf16 %v689, %v689
      %v722 = vpack.c.bf16 %v690, %v690
      %v723 = vpack.c.bf16 %v691, %v691
      %v724 = vpack.c.bf16 %v692, %v692
      %v725 = vpack.c.bf16 %v693, %v693
      %v726 = vpack.c.bf16 %v694, %v694
      %v727 = vpack.c.bf16 %v695, %v695
      %v728 = vpack.c.bf16 %v696, %v696
      %v729 = vpack.c.bf16 %v697, %v697
      %v730 = vpack.c.bf16 %v698, %v698
      %v731 = vpack.c.bf16 %v699, %v699
      %v732 = vpack.c.bf16 %v700, %v700
      %v733 = vld [vmem:[%s412 + $0x1] sm:$0xff]
      %v734 = vld [vmem:[%s412 + $0x9] sm:$0xff]
      %v735 = vld [vmem:[%s412 + $0x19] sm:$0xff]
      %v736 = vld [vmem:[%s412 + $0x21] sm:$0xff]
      %v737 = vld [vmem:[%s412 + $0x31] sm:$0xff]
      %v738 = vld [vmem:[%s412 + $0x39] sm:$0xff]
      %v739 = vld [vmem:[%s412 + $0x49] sm:$0xff]
      %v740 = vld [vmem:[%s412 + $0x51] sm:$0xff]
      %v741 = vld [vmem:[%s412 + $0x61] sm:$0xff]
      %v742 = vld [vmem:[%s412 + $0x69] sm:$0xff]
      %v743 = vld [vmem:[%s412 + $0x79] sm:$0xff]
      %v744 = vld [vmem:[%s412 + $0x81] sm:$0xff]
      %v745 = vld [vmem:[%s412 + $0x91] sm:$0xff]
      %v746 = vld [vmem:[%s412 + $0x99] sm:$0xff]
      %v747 = vld [vmem:[%s412 + $0xa9] sm:$0xff]
      %v748 = vld [vmem:[%s412 + $0xb1] sm:$0xff]
      %v749 = vld [vmem:[%s412 + $0xc1] sm:$0xff]
      %v750 = vld [vmem:[%s412 + $0xc9] sm:$0xff]
      %v751 = vld [vmem:[%s412 + $0xd9] sm:$0xff]
      %v752 = vld [vmem:[%s412 + $0xe1] sm:$0xff]
      %v753 = vld [vmem:[%s412 + $0xf1] sm:$0xff]
      %v754 = vld [vmem:[%s412 + $0xf9] sm:$0xff]
      %v755 = vld [vmem:[%s412 + $0x109] sm:$0xff]
      %v756 = vld [vmem:[%s412 + $0x111] sm:$0xff]
      %v757 = vld [vmem:[%s412 + $0x121] sm:$0xff]
      %v758 = vld [vmem:[%s412 + $0x129] sm:$0xff]
      %v759 = vld [vmem:[%s412 + $0x139] sm:$0xff]
      %v760 = vld [vmem:[%s412 + $0x141] sm:$0xff]
      %v761 = vld [vmem:[%s412 + $0x151] sm:$0xff]
      %v762 = vld [vmem:[%s412 + $0x159] sm:$0xff]
      %v763 = vld [vmem:[%s412 + $0x169] sm:$0xff]
      %v764 = vld [vmem:[%s412 + $0x171] sm:$0xff]
      %v765 = vpack.c.bf16 %v733, %v733
      %v766 = vpack.c.bf16 %v734, %v734
      %v767 = vpack.c.bf16 %v735, %v735
      %v768 = vpack.c.bf16 %v736, %v736
      %v769 = vpack.c.bf16 %v737, %v737
      %v770 = vpack.c.bf16 %v738, %v738
      %v771 = vpack.c.bf16 %v739, %v739
      %v772 = vpack.c.bf16 %v740, %v740
      %v773 = vpack.c.bf16 %v741, %v741
      %v774 = vpack.c.bf16 %v742, %v742
      %v775 = vpack.c.bf16 %v743, %v743
      %v776 = vpack.c.bf16 %v744, %v744
      %v777 = vpack.c.bf16 %v745, %v745
      %v778 = vpack.c.bf16 %v746, %v746
      %v779 = vpack.c.bf16 %v747, %v747
      %v780 = vpack.c.bf16 %v748, %v748
      %v781 = vpack.c.bf16 %v749, %v749
      %v782 = vpack.c.bf16 %v750, %v750
      %v783 = vpack.c.bf16 %v751, %v751
      %v784 = vpack.c.bf16 %v752, %v752
      %v785 = vpack.c.bf16 %v753, %v753
      %v786 = vpack.c.bf16 %v754, %v754
      %v787 = vpack.c.bf16 %v755, %v755
      %v788 = vpack.c.bf16 %v756, %v756
      %v789 = vpack.c.bf16 %v757, %v757
      %v790 = vpack.c.bf16 %v758, %v758
      %v791 = vpack.c.bf16 %v759, %v759
      %v792 = vpack.c.bf16 %v760, %v760
      %v793 = vpack.c.bf16 %v761, %v761
      %v794 = vpack.c.bf16 %v762, %v762
      %v795 = vpack.c.bf16 %v763, %v763
      %v796 = vpack.c.bf16 %v764, %v764
      %v797 = vld [vmem:[%s412 + $0x2] sm:$0xff]
      %v798 = vld [vmem:[%s412 + $0xa] sm:$0xff]
      %v799 = vld [vmem:[%s412 + $0x1a] sm:$0xff]
      %v800 = vld [vmem:[%s412 + $0x22] sm:$0xff]
      %v801 = vld [vmem:[%s412 + $0x32] sm:$0xff]
      %v802 = vld [vmem:[%s412 + $0x3a] sm:$0xff]
      %v803 = vld [vmem:[%s412 + $0x4a] sm:$0xff]
      %v804 = vld [vmem:[%s412 + $0x52] sm:$0xff]
      %v805 = vld [vmem:[%s412 + $0x62] sm:$0xff]
      %v806 = vld [vmem:[%s412 + $0x6a] sm:$0xff]
      %v807 = vld [vmem:[%s412 + $0x7a] sm:$0xff]
      %v808 = vld [vmem:[%s412 + $0x82] sm:$0xff]
      %v809 = vld [vmem:[%s412 + $0x92] sm:$0xff]
      %v810 = vld [vmem:[%s412 + $0x9a] sm:$0xff]
      %v811 = vld [vmem:[%s412 + $0xaa] sm:$0xff]
      %v812 = vld [vmem:[%s412 + $0xb2] sm:$0xff]
      %v813 = vld [vmem:[%s412 + $0xc2] sm:$0xff]
      %v814 = vld [vmem:[%s412 + $0xca] sm:$0xff]
      %v815 = vld [vmem:[%s412 + $0xda] sm:$0xff]
      %v816 = vld [vmem:[%s412 + $0xe2] sm:$0xff]
      %v817 = vld [vmem:[%s412 + $0xf2] sm:$0xff]
      %v818 = vld [vmem:[%s412 + $0xfa] sm:$0xff]
      %v819 = vld [vmem:[%s412 + $0x10a] sm:$0xff]
      %v820 = vld [vmem:[%s412 + $0x112] sm:$0xff]
      %v821 = vld [vmem:[%s412 + $0x122] sm:$0xff]
      %v822 = vld [vmem:[%s412 + $0x12a] sm:$0xff]
      %v823 = vld [vmem:[%s412 + $0x13a] sm:$0xff]
      %v824 = vld [vmem:[%s412 + $0x142] sm:$0xff]
      %v825 = vld [vmem:[%s412 + $0x152] sm:$0xff]
      %v826 = vld [vmem:[%s412 + $0x15a] sm:$0xff]
      %v827 = vld [vmem:[%s412 + $0x16a] sm:$0xff]
      %v828 = vld [vmem:[%s412 + $0x172] sm:$0xff]
      %v829 = vpack.c.bf16 %v797, %v797
      %v830 = vpack.c.bf16 %v798, %v798
      %v831 = vpack.c.bf16 %v799, %v799
      %v832 = vpack.c.bf16 %v800, %v800
      %v833 = vpack.c.bf16 %v801, %v801
      %v834 = vpack.c.bf16 %v802, %v802
      %v835 = vpack.c.bf16 %v803, %v803
      %v836 = vpack.c.bf16 %v804, %v804
      %v837 = vpack.c.bf16 %v805, %v805
      %v838 = vpack.c.bf16 %v806, %v806
      %v839 = vpack.c.bf16 %v807, %v807
      %v840 = vpack.c.bf16 %v808, %v808
      %v841 = vpack.c.bf16 %v809, %v809
      %v842 = vpack.c.bf16 %v810, %v810
      %v843 = vpack.c.bf16 %v811, %v811
      %v844 = vpack.c.bf16 %v812, %v812
      %v845 = vpack.c.bf16 %v813, %v813
      %v846 = vpack.c.bf16 %v814, %v814
      %v847 = vpack.c.bf16 %v815, %v815
      %v848 = vpack.c.bf16 %v816, %v816
      %v849 = vpack.c.bf16 %v817, %v817
      %v850 = vpack.c.bf16 %v818, %v818
      %v851 = vpack.c.bf16 %v819, %v819
      %v852 = vpack.c.bf16 %v820, %v820
      %v853 = vpack.c.bf16 %v821, %v821
      %v854 = vpack.c.bf16 %v822, %v822
      %v855 = vpack.c.bf16 %v823, %v823
      %v856 = vpack.c.bf16 %v824, %v824
      %v857 = vpack.c.bf16 %v825, %v825
      %v858 = vpack.c.bf16 %v826, %v826
      %v859 = vpack.c.bf16 %v827, %v827
      %v860 = vpack.c.bf16 %v828, %v828
      %s861 = scalar_lea.vmem [#allocation2], 48
      %v862 = vld [vmem:[%s861] sm:$0xff]
      %v863 = vld [vmem:[%s861 + $0x8] sm:$0xff]
      %v864 = vld [vmem:[%s861 + $0x18] sm:$0xff]
      %v865 = vld [vmem:[%s861 + $0x20] sm:$0xff]
      %v866 = vld [vmem:[%s861 + $0x30] sm:$0xff]
      %v867 = vld [vmem:[%s861 + $0x38] sm:$0xff]
      %v868 = vld [vmem:[%s861 + $0x48] sm:$0xff]
      %v869 = vld [vmem:[%s861 + $0x50] sm:$0xff]
      %v870 = vld [vmem:[%s861 + $0x60] sm:$0xff]
      %v871 = vld [vmem:[%s861 + $0x68] sm:$0xff]
      %v872 = vld [vmem:[%s861 + $0x78] sm:$0xff]
      %v873 = vld [vmem:[%s861 + $0x80] sm:$0xff]
      %v874 = vld [vmem:[%s861 + $0x90] sm:$0xff]
      %v875 = vld [vmem:[%s861 + $0x98] sm:$0xff]
      %v876 = vld [vmem:[%s861 + $0xa8] sm:$0xff]
      %v877 = vld [vmem:[%s861 + $0xb0] sm:$0xff]
      %v878 = vld [vmem:[%s861 + $0xc0] sm:$0xff]
      %v879 = vld [vmem:[%s861 + $0xc8] sm:$0xff]
      %v880 = vld [vmem:[%s861 + $0xd8] sm:$0xff]
      %v881 = vld [vmem:[%s861 + $0xe0] sm:$0xff]
      %v882 = vld [vmem:[%s861 + $0xf0] sm:$0xff]
      %v883 = vld [vmem:[%s861 + $0xf8] sm:$0xff]
      %v884 = vld [vmem:[%s861 + $0x108] sm:$0xff]
      %v885 = vld [vmem:[%s861 + $0x110] sm:$0xff]
      %v886 = vld [vmem:[%s861 + $0x120] sm:$0xff]
      %v887 = vld [vmem:[%s861 + $0x128] sm:$0xff]
      %v888 = vld [vmem:[%s861 + $0x138] sm:$0xff]
      %v889 = vld [vmem:[%s861 + $0x140] sm:$0xff]
      %v890 = vld [vmem:[%s861 + $0x150] sm:$0xff]
      %v891 = vld [vmem:[%s861 + $0x158] sm:$0xff]
      %v892 = vld [vmem:[%s861 + $0x168] sm:$0xff]
      %v893 = vld [vmem:[%s861 + $0x170] sm:$0xff]
      %v894 = vpack.c.bf16 %v862, %v862
      %v895 = vpack.c.bf16 %v863, %v863
      %v896 = vpack.c.bf16 %v864, %v864
      %v897 = vpack.c.bf16 %v865, %v865
      %v898 = vpack.c.bf16 %v866, %v866
      %v899 = vpack.c.bf16 %v867, %v867
      %v900 = vpack.c.bf16 %v868, %v868
      %v901 = vpack.c.bf16 %v869, %v869
      %v902 = vpack.c.bf16 %v870, %v870
      %v903 = vpack.c.bf16 %v871, %v871
      %v904 = vpack.c.bf16 %v872, %v872
      %v905 = vpack.c.bf16 %v873, %v873
      %v906 = vpack.c.bf16 %v874, %v874
      %v907 = vpack.c.bf16 %v875, %v875
      %v908 = vpack.c.bf16 %v876, %v876
      %v909 = vpack.c.bf16 %v877, %v877
      %v910 = vpack.c.bf16 %v878, %v878
      %v911 = vpack.c.bf16 %v879, %v879
      %v912 = vpack.c.bf16 %v880, %v880
      %v913 = vpack.c.bf16 %v881, %v881
      %v914 = vpack.c.bf16 %v882, %v882
      %v915 = vpack.c.bf16 %v883, %v883
      %v916 = vpack.c.bf16 %v884, %v884
      %v917 = vpack.c.bf16 %v885, %v885
      %v918 = vpack.c.bf16 %v886, %v886
      %v919 = vpack.c.bf16 %v887, %v887
      %v920 = vpack.c.bf16 %v888, %v888
      %v921 = vpack.c.bf16 %v889, %v889
      %v922 = vpack.c.bf16 %v890, %v890
      %v923 = vpack.c.bf16 %v891, %v891
      %v924 = vpack.c.bf16 %v892, %v892
      %v925 = vpack.c.bf16 %v893, %v893
      %v926 = vld [vmem:[%s861 + $0x1] sm:$0xff]
      %v927 = vld [vmem:[%s861 + $0x9] sm:$0xff]
      %v928 = vld [vmem:[%s861 + $0x19] sm:$0xff]
      %v929 = vld [vmem:[%s861 + $0x21] sm:$0xff]
      %v930 = vld [vmem:[%s861 + $0x31] sm:$0xff]
      %v931 = vld [vmem:[%s861 + $0x39] sm:$0xff]
      %v932 = vld [vmem:[%s861 + $0x49] sm:$0xff]
      %v933 = vld [vmem:[%s861 + $0x51] sm:$0xff]
      %v934 = vld [vmem:[%s861 + $0x61] sm:$0xff]
      %v935 = vld [vmem:[%s861 + $0x69] sm:$0xff]
      %v936 = vld [vmem:[%s861 + $0x79] sm:$0xff]
      %v937 = vld [vmem:[%s861 + $0x81] sm:$0xff]
      %v938 = vld [vmem:[%s861 + $0x91] sm:$0xff]
      %v939 = vld [vmem:[%s861 + $0x99] sm:$0xff]
      %v940 = vld [vmem:[%s861 + $0xa9] sm:$0xff]
      %v941 = vld [vmem:[%s861 + $0xb1] sm:$0xff]
      %v942 = vld [vmem:[%s861 + $0xc1] sm:$0xff]
      %v943 = vld [vmem:[%s861 + $0xc9] sm:$0xff]
      %v944 = vld [vmem:[%s861 + $0xd9] sm:$0xff]
      %v945 = vld [vmem:[%s861 + $0xe1] sm:$0xff]
      %v946 = vld [vmem:[%s861 + $0xf1] sm:$0xff]
      %v947 = vld [vmem:[%s861 + $0xf9] sm:$0xff]
      %v948 = vld [vmem:[%s861 + $0x109] sm:$0xff]
      %v949 = vld [vmem:[%s861 + $0x111] sm:$0xff]
      %v950 = vld [vmem:[%s861 + $0x121] sm:$0xff]
      %v951 = vld [vmem:[%s861 + $0x129] sm:$0xff]
      %v952 = vld [vmem:[%s861 + $0x139] sm:$0xff]
      %v953 = vld [vmem:[%s861 + $0x141] sm:$0xff]
      %v954 = vld [vmem:[%s861 + $0x151] sm:$0xff]
      %v955 = vld [vmem:[%s861 + $0x159] sm:$0xff]
      %v956 = vld [vmem:[%s861 + $0x169] sm:$0xff]
      %v957 = vld [vmem:[%s861 + $0x171] sm:$0xff]
      %v958 = vpack.c.bf16 %v926, %v926
      %v959 = vpack.c.bf16 %v927, %v927
      %v960 = vpack.c.bf16 %v928, %v928
      %v961 = vpack.c.bf16 %v929, %v929
      %v962 = vpack.c.bf16 %v930, %v930
      %v963 = vpack.c.bf16 %v931, %v931
      %v964 = vpack.c.bf16 %v932, %v932
      %v965 = vpack.c.bf16 %v933, %v933
      %v966 = vpack.c.bf16 %v934, %v934
      %v967 = vpack.c.bf16 %v935, %v935
      %v968 = vpack.c.bf16 %v936, %v936
      %v969 = vpack.c.bf16 %v937, %v937
      %v970 = vpack.c.bf16 %v938, %v938
      %v971 = vpack.c.bf16 %v939, %v939
      %v972 = vpack.c.bf16 %v940, %v940
      %v973 = vpack.c.bf16 %v941, %v941
      %v974 = vpack.c.bf16 %v942, %v942
      %v975 = vpack.c.bf16 %v943, %v943
      %v976 = vpack.c.bf16 %v944, %v944
      %v977 = vpack.c.bf16 %v945, %v945
      %v978 = vpack.c.bf16 %v946, %v946
      %v979 = vpack.c.bf16 %v947, %v947
      %v980 = vpack.c.bf16 %v948, %v948
      %v981 = vpack.c.bf16 %v949, %v949
      %v982 = vpack.c.bf16 %v950, %v950
      %v983 = vpack.c.bf16 %v951, %v951
      %v984 = vpack.c.bf16 %v952, %v952
      %v985 = vpack.c.bf16 %v953, %v953
      %v986 = vpack.c.bf16 %v954, %v954
      %v987 = vpack.c.bf16 %v955, %v955
      %v988 = vpack.c.bf16 %v956, %v956
      %v989 = vpack.c.bf16 %v957, %v957
      %v990 = vld [vmem:[%s861 + $0x2] sm:$0xff]
      %v991 = vld [vmem:[%s861 + $0xa] sm:$0xff]
      %v992 = vld [vmem:[%s861 + $0x1a] sm:$0xff]
      %v993 = vld [vmem:[%s861 + $0x22] sm:$0xff]
      %v994 = vld [vmem:[%s861 + $0x32] sm:$0xff]
      %v995 = vld [vmem:[%s861 + $0x3a] sm:$0xff]
      %v996 = vld [vmem:[%s861 + $0x4a] sm:$0xff]
      %v997 = vld [vmem:[%s861 + $0x52] sm:$0xff]
      %v998 = vld [vmem:[%s861 + $0x62] sm:$0xff]
      %v999 = vld [vmem:[%s861 + $0x6a] sm:$0xff]
      %v1000 = vld [vmem:[%s861 + $0x7a] sm:$0xff]
      %v1001 = vld [vmem:[%s861 + $0x82] sm:$0xff]
      %v1002 = vld [vmem:[%s861 + $0x92] sm:$0xff]
      %v1003 = vld [vmem:[%s861 + $0x9a] sm:$0xff]
      %v1004 = vld [vmem:[%s861 + $0xaa] sm:$0xff]
      %v1005 = vld [vmem:[%s861 + $0xb2] sm:$0xff]
      %v1006 = vld [vmem:[%s861 + $0xc2] sm:$0xff]
      %v1007 = vld [vmem:[%s861 + $0xca] sm:$0xff]
      %v1008 = vld [vmem:[%s861 + $0xda] sm:$0xff]
      %v1009 = vld [vmem:[%s861 + $0xe2] sm:$0xff]
      %v1010 = vld [vmem:[%s861 + $0xf2] sm:$0xff]
      %v1011 = vld [vmem:[%s861 + $0xfa] sm:$0xff]
      %v1012 = vld [vmem:[%s861 + $0x10a] sm:$0xff]
      %v1013 = vld [vmem:[%s861 + $0x112] sm:$0xff]
      %v1014 = vld [vmem:[%s861 + $0x122] sm:$0xff]
      %v1015 = vld [vmem:[%s861 + $0x12a] sm:$0xff]
      %v1016 = vld [vmem:[%s861 + $0x13a] sm:$0xff]
      %v1017 = vld [vmem:[%s861 + $0x142] sm:$0xff]
      %v1018 = vld [vmem:[%s861 + $0x152] sm:$0xff]
      %v1019 = vld [vmem:[%s861 + $0x15a] sm:$0xff]
      %v1020 = vld [vmem:[%s861 + $0x16a] sm:$0xff]
      %v1021 = vld [vmem:[%s861 + $0x172] sm:$0xff]
      %v1022 = vpack.c.bf16 %v990, %v990
      %v1023 = vpack.c.bf16 %v991, %v991
      %v1024 = vpack.c.bf16 %v992, %v992
      %v1025 = vpack.c.bf16 %v993, %v993
      %v1026 = vpack.c.bf16 %v994, %v994
      %v1027 = vpack.c.bf16 %v995, %v995
      %v1028 = vpack.c.bf16 %v996, %v996
      %v1029 = vpack.c.bf16 %v997, %v997
      %v1030 = vpack.c.bf16 %v998, %v998
      %v1031 = vpack.c.bf16 %v999, %v999
      %v1032 = vpack.c.bf16 %v1000, %v1000
      %v1033 = vpack.c.bf16 %v1001, %v1001
      %v1034 = vpack.c.bf16 %v1002, %v1002
      %v1035 = vpack.c.bf16 %v1003, %v1003
      %v1036 = vpack.c.bf16 %v1004, %v1004
      %v1037 = vpack.c.bf16 %v1005, %v1005
      %v1038 = vpack.c.bf16 %v1006, %v1006
      %v1039 = vpack.c.bf16 %v1007, %v1007
      %v1040 = vpack.c.bf16 %v1008, %v1008
      %v1041 = vpack.c.bf16 %v1009, %v1009
      %v1042 = vpack.c.bf16 %v1010, %v1010
      %v1043 = vpack.c.bf16 %v1011, %v1011
      %v1044 = vpack.c.bf16 %v1012, %v1012
      %v1045 = vpack.c.bf16 %v1013, %v1013
      %v1046 = vpack.c.bf16 %v1014, %v1014
      %v1047 = vpack.c.bf16 %v1015, %v1015
      %v1048 = vpack.c.bf16 %v1016, %v1016
      %v1049 = vpack.c.bf16 %v1017, %v1017
      %v1050 = vpack.c.bf16 %v1018, %v1018
      %v1051 = vpack.c.bf16 %v1019, %v1019
      %v1052 = vpack.c.bf16 %v1020, %v1020
      %v1053 = vpack.c.bf16 %v1021, %v1021
      %v1086 = vunpack.c.l.b16 %v509
      %v1087 = vunpack.c.l.b16 %v510
      %v1088 = vunpack.c.l.b16 %v511
      %v1089 = vunpack.c.l.b16 %v512
      %v1090 = vunpack.c.l.b16 %v513
      %v1091 = vunpack.c.l.b16 %v514
      %v1092 = vunpack.c.l.b16 %v515
      %v1093 = vunpack.c.l.b16 %v516
      %v1094 = vunpack.c.l.b16 %v517
      %v1095 = vunpack.c.l.b16 %v518
      %v1096 = vunpack.c.l.b16 %v519
      %v1097 = vunpack.c.l.b16 %v520
      %v1098 = vunpack.c.l.b16 %v521
      %v1099 = vunpack.c.l.b16 %v522
      %v1100 = vunpack.c.l.b16 %v523
      %v1101 = vunpack.c.l.b16 %v524
      %v1102 = vunpack.c.l.b16 %v525
      %v1103 = vunpack.c.l.b16 %v526
      %v1104 = vunpack.c.l.b16 %v527
      %v1105 = vunpack.c.l.b16 %v528
      %v1106 = vunpack.c.l.b16 %v529
      %v1107 = vunpack.c.l.b16 %v530
      %v1108 = vunpack.c.l.b16 %v531
      %v1109 = vunpack.c.l.b16 %v532
      %v1110 = vunpack.c.l.b16 %v533
      %v1111 = vunpack.c.l.b16 %v534
      %v1112 = vunpack.c.l.b16 %v535
      %v1113 = vunpack.c.l.b16 %v536
      %v1114 = vunpack.c.l.b16 %v537
      %v1115 = vunpack.c.l.b16 %v538
      %v1116 = vunpack.c.l.b16 %v539
      %v1117 = vunpack.c.l.b16 %v540
      %v1118 = vpack.c.b16 %v1087, %v1086
      %v1119 = vpack.c.b16 %v1089, %v1088
      %v1120 = vpack.c.b16 %v1091, %v1090
      %v1121 = vpack.c.b16 %v1093, %v1092
      %v1122 = vpack.c.b16 %v1095, %v1094
      %v1123 = vpack.c.b16 %v1097, %v1096
      %v1124 = vpack.c.b16 %v1099, %v1098
      %v1125 = vpack.c.b16 %v1101, %v1100
      %v1126 = vpack.c.b16 %v1103, %v1102
      %v1127 = vpack.c.b16 %v1105, %v1104
      %v1128 = vpack.c.b16 %v1107, %v1106
      %v1129 = vpack.c.b16 %v1109, %v1108
      %v1130 = vpack.c.b16 %v1111, %v1110
      %v1131 = vpack.c.b16 %v1113, %v1112
      %v1132 = vpack.c.b16 %v1115, %v1114
      %v1133 = vpack.c.b16 %v1117, %v1116
      %v1182 = vunpack.c.l.b16 %v573
      %v1183 = vunpack.c.l.b16 %v574
      %v1184 = vunpack.c.l.b16 %v575
      %v1185 = vunpack.c.l.b16 %v576
      %v1186 = vunpack.c.l.b16 %v577
      %v1187 = vunpack.c.l.b16 %v578
      %v1188 = vunpack.c.l.b16 %v579
      %v1189 = vunpack.c.l.b16 %v580
      %v1190 = vunpack.c.l.b16 %v581
      %v1191 = vunpack.c.l.b16 %v582
      %v1192 = vunpack.c.l.b16 %v583
      %v1193 = vunpack.c.l.b16 %v584
      %v1194 = vunpack.c.l.b16 %v585
      %v1195 = vunpack.c.l.b16 %v586
      %v1196 = vunpack.c.l.b16 %v587
      %v1197 = vunpack.c.l.b16 %v588
      %v1198 = vunpack.c.l.b16 %v589
      %v1199 = vunpack.c.l.b16 %v590
      %v1200 = vunpack.c.l.b16 %v591
      %v1201 = vunpack.c.l.b16 %v592
      %v1202 = vunpack.c.l.b16 %v593
      %v1203 = vunpack.c.l.b16 %v594
      %v1204 = vunpack.c.l.b16 %v595
      %v1205 = vunpack.c.l.b16 %v596
      %v1206 = vunpack.c.l.b16 %v597
      %v1207 = vunpack.c.l.b16 %v598
      %v1208 = vunpack.c.l.b16 %v599
      %v1209 = vunpack.c.l.b16 %v600
      %v1210 = vunpack.c.l.b16 %v601
      %v1211 = vunpack.c.l.b16 %v602
      %v1212 = vunpack.c.l.b16 %v603
      %v1213 = vunpack.c.l.b16 %v604
      %v1214 = vpack.c.b16 %v1183, %v1182
      %v1215 = vpack.c.b16 %v1185, %v1184
      %v1216 = vpack.c.b16 %v1187, %v1186
      %v1217 = vpack.c.b16 %v1189, %v1188
      %v1218 = vpack.c.b16 %v1191, %v1190
      %v1219 = vpack.c.b16 %v1193, %v1192
      %v1220 = vpack.c.b16 %v1195, %v1194
      %v1221 = vpack.c.b16 %v1197, %v1196
      %v1222 = vpack.c.b16 %v1199, %v1198
      %v1223 = vpack.c.b16 %v1201, %v1200
      %v1224 = vpack.c.b16 %v1203, %v1202
      %v1225 = vpack.c.b16 %v1205, %v1204
      %v1226 = vpack.c.b16 %v1207, %v1206
      %v1227 = vpack.c.b16 %v1209, %v1208
      %v1228 = vpack.c.b16 %v1211, %v1210
      %v1229 = vpack.c.b16 %v1213, %v1212
      %v1278 = vunpack.c.l.b16 %v637
      %v1279 = vunpack.c.l.b16 %v638
      %v1280 = vunpack.c.l.b16 %v639
      %v1281 = vunpack.c.l.b16 %v640
      %v1282 = vunpack.c.l.b16 %v641
      %v1283 = vunpack.c.l.b16 %v642
      %v1284 = vunpack.c.l.b16 %v643
      %v1285 = vunpack.c.l.b16 %v644
      %v1286 = vunpack.c.l.b16 %v645
      %v1287 = vunpack.c.l.b16 %v646
      %v1288 = vunpack.c.l.b16 %v647
      %v1289 = vunpack.c.l.b16 %v648
      %v1290 = vunpack.c.l.b16 %v649
      %v1291 = vunpack.c.l.b16 %v650
      %v1292 = vunpack.c.l.b16 %v651
      %v1293 = vunpack.c.l.b16 %v652
      %v1294 = vunpack.c.l.b16 %v653
      %v1295 = vunpack.c.l.b16 %v654
      %v1296 = vunpack.c.l.b16 %v655
      %v1297 = vunpack.c.l.b16 %v656
      %v1298 = vunpack.c.l.b16 %v657
      %v1299 = vunpack.c.l.b16 %v658
      %v1300 = vunpack.c.l.b16 %v659
      %v1301 = vunpack.c.l.b16 %v660
      %v1302 = vunpack.c.l.b16 %v661
      %v1303 = vunpack.c.l.b16 %v662
      %v1304 = vunpack.c.l.b16 %v663
      %v1305 = vunpack.c.l.b16 %v664
      %v1306 = vunpack.c.l.b16 %v665
      %v1307 = vunpack.c.l.b16 %v666
      %v1308 = vunpack.c.l.b16 %v667
      %v1309 = vunpack.c.l.b16 %v668
      %v1310 = vpack.c.b16 %v1279, %v1278
      %v1311 = vpack.c.b16 %v1281, %v1280
      %v1312 = vpack.c.b16 %v1283, %v1282
      %v1313 = vpack.c.b16 %v1285, %v1284
      %v1314 = vpack.c.b16 %v1287, %v1286
      %v1315 = vpack.c.b16 %v1289, %v1288
      %v1316 = vpack.c.b16 %v1291, %v1290
      %v1317 = vpack.c.b16 %v1293, %v1292
      %v1318 = vpack.c.b16 %v1295, %v1294
      %v1319 = vpack.c.b16 %v1297, %v1296
      %v1320 = vpack.c.b16 %v1299, %v1298
      %v1321 = vpack.c.b16 %v1301, %v1300
      %v1322 = vpack.c.b16 %v1303, %v1302
      %v1323 = vpack.c.b16 %v1305, %v1304
      %v1324 = vpack.c.b16 %v1307, %v1306
      %v1325 = vpack.c.b16 %v1309, %v1308
      %v1374 = vunpack.c.l.b16 %v701
      %v1375 = vunpack.c.l.b16 %v702
      %v1376 = vunpack.c.l.b16 %v703
      %v1377 = vunpack.c.l.b16 %v704
      %v1378 = vunpack.c.l.b16 %v705
      %v1379 = vunpack.c.l.b16 %v706
      %v1380 = vunpack.c.l.b16 %v707
      %v1381 = vunpack.c.l.b16 %v708
      %v1382 = vunpack.c.l.b16 %v709
      %v1383 = vunpack.c.l.b16 %v710
      %v1384 = vunpack.c.l.b16 %v711
      %v1385 = vunpack.c.l.b16 %v712
      %v1386 = vunpack.c.l.b16 %v713
      %v1387 = vunpack.c.l.b16 %v714
      %v1388 = vunpack.c.l.b16 %v715
      %v1389 = vunpack.c.l.b16 %v716
      %v1390 = vunpack.c.l.b16 %v717
      %v1391 = vunpack.c.l.b16 %v718
      %v1392 = vunpack.c.l.b16 %v719
      %v1393 = vunpack.c.l.b16 %v720
      %v1394 = vunpack.c.l.b16 %v721
      %v1395 = vunpack.c.l.b16 %v722
      %v1396 = vunpack.c.l.b16 %v723
      %v1397 = vunpack.c.l.b16 %v724
      %v1398 = vunpack.c.l.b16 %v725
      %v1399 = vunpack.c.l.b16 %v726
      %v1400 = vunpack.c.l.b16 %v727
      %v1401 = vunpack.c.l.b16 %v728
      %v1402 = vunpack.c.l.b16 %v729
      %v1403 = vunpack.c.l.b16 %v730
      %v1404 = vunpack.c.l.b16 %v731
      %v1405 = vunpack.c.l.b16 %v732
      %v1406 = vpack.c.b16 %v1375, %v1374
      %v1407 = vpack.c.b16 %v1377, %v1376
      %v1408 = vpack.c.b16 %v1379, %v1378
      %v1409 = vpack.c.b16 %v1381, %v1380
      %v1410 = vpack.c.b16 %v1383, %v1382
      %v1411 = vpack.c.b16 %v1385, %v1384
      %v1412 = vpack.c.b16 %v1387, %v1386
      %v1413 = vpack.c.b16 %v1389, %v1388
      %v1414 = vpack.c.b16 %v1391, %v1390
      %v1415 = vpack.c.b16 %v1393, %v1392
      %v1416 = vpack.c.b16 %v1395, %v1394
      %v1417 = vpack.c.b16 %v1397, %v1396
      %v1418 = vpack.c.b16 %v1399, %v1398
      %v1419 = vpack.c.b16 %v1401, %v1400
      %v1420 = vpack.c.b16 %v1403, %v1402
      %v1421 = vpack.c.b16 %v1405, %v1404
      %v1470 = vunpack.c.l.b16 %v765
      %v1471 = vunpack.c.l.b16 %v766
      %v1472 = vunpack.c.l.b16 %v767
      %v1473 = vunpack.c.l.b16 %v768
      %v1474 = vunpack.c.l.b16 %v769
      %v1475 = vunpack.c.l.b16 %v770
      %v1476 = vunpack.c.l.b16 %v771
      %v1477 = vunpack.c.l.b16 %v772
      %v1478 = vunpack.c.l.b16 %v773
      %v1479 = vunpack.c.l.b16 %v774
      %v1480 = vunpack.c.l.b16 %v775
      %v1481 = vunpack.c.l.b16 %v776
      %v1482 = vunpack.c.l.b16 %v777
      %v1483 = vunpack.c.l.b16 %v778
      %v1484 = vunpack.c.l.b16 %v779
      %v1485 = vunpack.c.l.b16 %v780
      %v1486 = vunpack.c.l.b16 %v781
      %v1487 = vunpack.c.l.b16 %v782
      %v1488 = vunpack.c.l.b16 %v783
      %v1489 = vunpack.c.l.b16 %v784
      %v1490 = vunpack.c.l.b16 %v785
      %v1491 = vunpack.c.l.b16 %v786
      %v1492 = vunpack.c.l.b16 %v787
      %v1493 = vunpack.c.l.b16 %v788
      %v1494 = vunpack.c.l.b16 %v789
      %v1495 = vunpack.c.l.b16 %v790
      %v1496 = vunpack.c.l.b16 %v791
      %v1497 = vunpack.c.l.b16 %v792
      %v1498 = vunpack.c.l.b16 %v793
      %v1499 = vunpack.c.l.b16 %v794
      %v1500 = vunpack.c.l.b16 %v795
      %v1501 = vunpack.c.l.b16 %v796
      %v1502 = vpack.c.b16 %v1471, %v1470
      %v1503 = vpack.c.b16 %v1473, %v1472
      %v1504 = vpack.c.b16 %v1475, %v1474
      %v1505 = vpack.c.b16 %v1477, %v1476
      %v1506 = vpack.c.b16 %v1479, %v1478
      %v1507 = vpack.c.b16 %v1481, %v1480
      %v1508 = vpack.c.b16 %v1483, %v1482
      %v1509 = vpack.c.b16 %v1485, %v1484
      %v1510 = vpack.c.b16 %v1487, %v1486
      %v1511 = vpack.c.b16 %v1489, %v1488
      %v1512 = vpack.c.b16 %v1491, %v1490
      %v1513 = vpack.c.b16 %v1493, %v1492
      %v1514 = vpack.c.b16 %v1495, %v1494
      %v1515 = vpack.c.b16 %v1497, %v1496
      %v1516 = vpack.c.b16 %v1499, %v1498
      %v1517 = vpack.c.b16 %v1501, %v1500
      %v1566 = vunpack.c.l.b16 %v829
      %v1567 = vunpack.c.l.b16 %v830
      %v1568 = vunpack.c.l.b16 %v831
      %v1569 = vunpack.c.l.b16 %v832
      %v1570 = vunpack.c.l.b16 %v833
      %v1571 = vunpack.c.l.b16 %v834
      %v1572 = vunpack.c.l.b16 %v835
      %v1573 = vunpack.c.l.b16 %v836
      %v1574 = vunpack.c.l.b16 %v837
      %v1575 = vunpack.c.l.b16 %v838
      %v1576 = vunpack.c.l.b16 %v839
      %v1577 = vunpack.c.l.b16 %v840
      %v1578 = vunpack.c.l.b16 %v841
      %v1579 = vunpack.c.l.b16 %v842
      %v1580 = vunpack.c.l.b16 %v843
      %v1581 = vunpack.c.l.b16 %v844
      %v1582 = vunpack.c.l.b16 %v845
      %v1583 = vunpack.c.l.b16 %v846
      %v1584 = vunpack.c.l.b16 %v847
      %v1585 = vunpack.c.l.b16 %v848
      %v1586 = vunpack.c.l.b16 %v849
      %v1587 = vunpack.c.l.b16 %v850
      %v1588 = vunpack.c.l.b16 %v851
      %v1589 = vunpack.c.l.b16 %v852
      %v1590 = vunpack.c.l.b16 %v853
      %v1591 = vunpack.c.l.b16 %v854
      %v1592 = vunpack.c.l.b16 %v855
      %v1593 = vunpack.c.l.b16 %v856
      %v1594 = vunpack.c.l.b16 %v857
      %v1595 = vunpack.c.l.b16 %v858
      %v1596 = vunpack.c.l.b16 %v859
      %v1597 = vunpack.c.l.b16 %v860
      %v1598 = vpack.c.b16 %v1567, %v1566
      %v1599 = vpack.c.b16 %v1569, %v1568
      %v1600 = vpack.c.b16 %v1571, %v1570
      %v1601 = vpack.c.b16 %v1573, %v1572
      %v1602 = vpack.c.b16 %v1575, %v1574
      %v1603 = vpack.c.b16 %v1577, %v1576
      %v1604 = vpack.c.b16 %v1579, %v1578
      %v1605 = vpack.c.b16 %v1581, %v1580
      %v1606 = vpack.c.b16 %v1583, %v1582
      %v1607 = vpack.c.b16 %v1585, %v1584
      %v1608 = vpack.c.b16 %v1587, %v1586
      %v1609 = vpack.c.b16 %v1589, %v1588
      %v1610 = vpack.c.b16 %v1591, %v1590
      %v1611 = vpack.c.b16 %v1593, %v1592
      %v1612 = vpack.c.b16 %v1595, %v1594
      %v1613 = vpack.c.b16 %v1597, %v1596
      %v1662 = vunpack.c.l.b16 %v894
      %v1663 = vunpack.c.l.b16 %v895
      %v1664 = vunpack.c.l.b16 %v896
      %v1665 = vunpack.c.l.b16 %v897
      %v1666 = vunpack.c.l.b16 %v898
      %v1667 = vunpack.c.l.b16 %v899
      %v1668 = vunpack.c.l.b16 %v900
      %v1669 = vunpack.c.l.b16 %v901
      %v1670 = vunpack.c.l.b16 %v902
      %v1671 = vunpack.c.l.b16 %v903
      %v1672 = vunpack.c.l.b16 %v904
      %v1673 = vunpack.c.l.b16 %v905
      %v1674 = vunpack.c.l.b16 %v906
      %v1675 = vunpack.c.l.b16 %v907
      %v1676 = vunpack.c.l.b16 %v908
      %v1677 = vunpack.c.l.b16 %v909
      %v1678 = vunpack.c.l.b16 %v910
      %v1679 = vunpack.c.l.b16 %v911
      %v1680 = vunpack.c.l.b16 %v912
      %v1681 = vunpack.c.l.b16 %v913
      %v1682 = vunpack.c.l.b16 %v914
      %v1683 = vunpack.c.l.b16 %v915
      %v1684 = vunpack.c.l.b16 %v916
      %v1685 = vunpack.c.l.b16 %v917
      %v1686 = vunpack.c.l.b16 %v918
      %v1687 = vunpack.c.l.b16 %v919
      %v1688 = vunpack.c.l.b16 %v920
      %v1689 = vunpack.c.l.b16 %v921
      %v1690 = vunpack.c.l.b16 %v922
      %v1691 = vunpack.c.l.b16 %v923
      %v1692 = vunpack.c.l.b16 %v924
      %v1693 = vunpack.c.l.b16 %v925
      %v1694 = vpack.c.b16 %v1663, %v1662
      %v1695 = vpack.c.b16 %v1665, %v1664
      %v1696 = vpack.c.b16 %v1667, %v1666
      %v1697 = vpack.c.b16 %v1669, %v1668
      %v1698 = vpack.c.b16 %v1671, %v1670
      %v1699 = vpack.c.b16 %v1673, %v1672
      %v1700 = vpack.c.b16 %v1675, %v1674
      %v1701 = vpack.c.b16 %v1677, %v1676
      %v1702 = vpack.c.b16 %v1679, %v1678
      %v1703 = vpack.c.b16 %v1681, %v1680
      %v1704 = vpack.c.b16 %v1683, %v1682
      %v1705 = vpack.c.b16 %v1685, %v1684
      %v1706 = vpack.c.b16 %v1687, %v1686
      %v1707 = vpack.c.b16 %v1689, %v1688
      %v1708 = vpack.c.b16 %v1691, %v1690
      %v1709 = vpack.c.b16 %v1693, %v1692
      %v1758 = vunpack.c.l.b16 %v958
      %v1759 = vunpack.c.l.b16 %v959
      %v1760 = vunpack.c.l.b16 %v960
      %v1761 = vunpack.c.l.b16 %v961
      %v1762 = vunpack.c.l.b16 %v962
      %v1763 = vunpack.c.l.b16 %v963
      %v1764 = vunpack.c.l.b16 %v964
      %v1765 = vunpack.c.l.b16 %v965
      %v1766 = vunpack.c.l.b16 %v966
      %v1767 = vunpack.c.l.b16 %v967
      %v1768 = vunpack.c.l.b16 %v968
      %v1769 = vunpack.c.l.b16 %v969
      %v1770 = vunpack.c.l.b16 %v970
      %v1771 = vunpack.c.l.b16 %v971
      %v1772 = vunpack.c.l.b16 %v972
      %v1773 = vunpack.c.l.b16 %v973
      %v1774 = vunpack.c.l.b16 %v974
      %v1775 = vunpack.c.l.b16 %v975
      %v1776 = vunpack.c.l.b16 %v976
      %v1777 = vunpack.c.l.b16 %v977
      %v1778 = vunpack.c.l.b16 %v978
      %v1779 = vunpack.c.l.b16 %v979
      %v1780 = vunpack.c.l.b16 %v980
      %v1781 = vunpack.c.l.b16 %v981
      %v1782 = vunpack.c.l.b16 %v982
      %v1783 = vunpack.c.l.b16 %v983
      %v1784 = vunpack.c.l.b16 %v984
      %v1785 = vunpack.c.l.b16 %v985
      %v1786 = vunpack.c.l.b16 %v986
      %v1787 = vunpack.c.l.b16 %v987
      %v1788 = vunpack.c.l.b16 %v988
      %v1789 = vunpack.c.l.b16 %v989
      %v1790 = vpack.c.b16 %v1759, %v1758
      %v1791 = vpack.c.b16 %v1761, %v1760
      %v1792 = vpack.c.b16 %v1763, %v1762
      %v1793 = vpack.c.b16 %v1765, %v1764
      %v1794 = vpack.c.b16 %v1767, %v1766
      %v1795 = vpack.c.b16 %v1769, %v1768
      %v1796 = vpack.c.b16 %v1771, %v1770
      %v1797 = vpack.c.b16 %v1773, %v1772
      %v1798 = vpack.c.b16 %v1775, %v1774
      %v1799 = vpack.c.b16 %v1777, %v1776
      %v1800 = vpack.c.b16 %v1779, %v1778
      %v1801 = vpack.c.b16 %v1781, %v1780
      %v1802 = vpack.c.b16 %v1783, %v1782
      %v1803 = vpack.c.b16 %v1785, %v1784
      %v1804 = vpack.c.b16 %v1787, %v1786
      %v1805 = vpack.c.b16 %v1789, %v1788
      %v1854 = vunpack.c.l.b16 %v1022
      %v1855 = vunpack.c.l.b16 %v1023
      %v1856 = vunpack.c.l.b16 %v1024
      %v1857 = vunpack.c.l.b16 %v1025
      %v1858 = vunpack.c.l.b16 %v1026
      %v1859 = vunpack.c.l.b16 %v1027
      %v1860 = vunpack.c.l.b16 %v1028
      %v1861 = vunpack.c.l.b16 %v1029
      %v1862 = vunpack.c.l.b16 %v1030
      %v1863 = vunpack.c.l.b16 %v1031
      %v1864 = vunpack.c.l.b16 %v1032
      %v1865 = vunpack.c.l.b16 %v1033
      %v1866 = vunpack.c.l.b16 %v1034
      %v1867 = vunpack.c.l.b16 %v1035
      %v1868 = vunpack.c.l.b16 %v1036
      %v1869 = vunpack.c.l.b16 %v1037
      %v1870 = vunpack.c.l.b16 %v1038
      %v1871 = vunpack.c.l.b16 %v1039
      %v1872 = vunpack.c.l.b16 %v1040
      %v1873 = vunpack.c.l.b16 %v1041
      %v1874 = vunpack.c.l.b16 %v1042
      %v1875 = vunpack.c.l.b16 %v1043
      %v1876 = vunpack.c.l.b16 %v1044
      %v1877 = vunpack.c.l.b16 %v1045
      %v1878 = vunpack.c.l.b16 %v1046
      %v1879 = vunpack.c.l.b16 %v1047
      %v1880 = vunpack.c.l.b16 %v1048
      %v1881 = vunpack.c.l.b16 %v1049
      %v1882 = vunpack.c.l.b16 %v1050
      %v1883 = vunpack.c.l.b16 %v1051
      %v1884 = vunpack.c.l.b16 %v1052
      %v1885 = vunpack.c.l.b16 %v1053
      %v1886 = vpack.c.b16 %v1855, %v1854
      %v1887 = vpack.c.b16 %v1857, %v1856
      %v1888 = vpack.c.b16 %v1859, %v1858
      %v1889 = vpack.c.b16 %v1861, %v1860
      %v1890 = vpack.c.b16 %v1863, %v1862
      %v1891 = vpack.c.b16 %v1865, %v1864
      %v1892 = vpack.c.b16 %v1867, %v1866
      %v1893 = vpack.c.b16 %v1869, %v1868
      %v1894 = vpack.c.b16 %v1871, %v1870
      %v1895 = vpack.c.b16 %v1873, %v1872
      %v1896 = vpack.c.b16 %v1875, %v1874
      %v1897 = vpack.c.b16 %v1877, %v1876
      %v1898 = vpack.c.b16 %v1879, %v1878
      %v1899 = vpack.c.b16 %v1881, %v1880
      %v1900 = vpack.c.b16 %v1883, %v1882
      %v1901 = vpack.c.b16 %v1885, %v1884
      %v1918 = vld [vmem:[%s3] sm:$0xf]
      %v1919 = vld [vmem:[%s3 + $0x4] sm:$0xf]
      %v1920 = vld [vmem:[%s3 + $0x8] sm:$0xf]
      %v1921 = vld [vmem:[%s3 + $0xc] sm:$0xf]
      %v1922 = vld [vmem:[%s3 + $0x10] sm:$0xf]
      %v1923 = vld [vmem:[%s3 + $0x14] sm:$0xf]
      %v1924 = vld [vmem:[%s3 + $0x18] sm:$0xf]
      %v1925 = vld [vmem:[%s3 + $0x1c] sm:$0xf]
      %v1926 = vld [vmem:[%s3 + $0x20] sm:$0xf]
      %v1927 = vld [vmem:[%s3 + $0x24] sm:$0xf]
      %v1928 = vld [vmem:[%s3 + $0x28] sm:$0xf]
      %v1929 = vld [vmem:[%s3 + $0x2c] sm:$0xf]
      %v1930 = vld [vmem:[%s3 + $0x30] sm:$0xf]
      %v1931 = vld [vmem:[%s3 + $0x34] sm:$0xf]
      %v1932 = vld [vmem:[%s3 + $0x38] sm:$0xf]
      %v1933 = vld [vmem:[%s3 + $0x3c] sm:$0xf]
      %v1934 = vld [vmem:[%s3 + $0x40] sm:$0xf]
      %v1935 = vld [vmem:[%s3 + $0x44] sm:$0xf]
      %v1936 = vld [vmem:[%s3 + $0x48] sm:$0xf]
      %v1937 = vld [vmem:[%s3 + $0x4c] sm:$0xf]
      %v1938 = vld [vmem:[%s3 + $0x50] sm:$0xf]
      %v1939 = vld [vmem:[%s3 + $0x54] sm:$0xf]
      %v1940 = vld [vmem:[%s3 + $0x58] sm:$0xf]
      %v1941 = vld [vmem:[%s3 + $0x5c] sm:$0xf]
      %v1942 = vld [vmem:[%s3 + $0x60] sm:$0xf]
      %v1943 = vld [vmem:[%s3 + $0x64] sm:$0xf]
      %v1944 = vld [vmem:[%s3 + $0x68] sm:$0xf]
      %v1945 = vld [vmem:[%s3 + $0x6c] sm:$0xf]
      %v1946 = vld [vmem:[%s3 + $0x70] sm:$0xf]
      %v1947 = vld [vmem:[%s3 + $0x74] sm:$0xf]
      %v1948 = vld [vmem:[%s3 + $0x78] sm:$0xf]
      %v1949 = vld [vmem:[%s3 + $0x7c] sm:$0xf]
      %v1950 = vld [vmem:[%s3 + $0x80] sm:$0xf]
      %v1951 = vld [vmem:[%s3 + $0x84] sm:$0xf]
      %v1952 = vld [vmem:[%s3 + $0x88] sm:$0xf]
      %v1953 = vld [vmem:[%s3 + $0x8c] sm:$0xf]
      %v1954 = vld [vmem:[%s3 + $0x90] sm:$0xf]
      %v1955 = vld [vmem:[%s3 + $0x94] sm:$0xf]
      %v1956 = vld [vmem:[%s3 + $0x98] sm:$0xf]
      %v1957 = vld [vmem:[%s3 + $0x9c] sm:$0xf]
      %v1958 = vld [vmem:[%s3 + $0xa0] sm:$0xf]
      %v1959 = vld [vmem:[%s3 + $0xa4] sm:$0xf]
      %v1960 = vld [vmem:[%s3 + $0xa8] sm:$0xf]
      %v1961 = vld [vmem:[%s3 + $0xac] sm:$0xf]
      %v1962 = vld [vmem:[%s3 + $0xb0] sm:$0xf]
      %v1963 = vld [vmem:[%s3 + $0xb4] sm:$0xf]
      %v1964 = vld [vmem:[%s3 + $0xb8] sm:$0xf]
      %v1965 = vld [vmem:[%s3 + $0xbc] sm:$0xf]
      %v1966 = vld [vmem:[%s3 + $0xc0] sm:$0xf]
      %v1967 = vld [vmem:[%s3 + $0xc4] sm:$0xf]
      %v1968 = vld [vmem:[%s3 + $0xc8] sm:$0xf]
      %v1969 = vld [vmem:[%s3 + $0xcc] sm:$0xf]
      %v1970 = vld [vmem:[%s3 + $0xd0] sm:$0xf]
      %v1971 = vld [vmem:[%s3 + $0xd4] sm:$0xf]
      %v1972 = vld [vmem:[%s3 + $0xd8] sm:$0xf]
      %v1973 = vld [vmem:[%s3 + $0xdc] sm:$0xf]
      %v1974 = vld [vmem:[%s3 + $0xe0] sm:$0xf]
      %v1975 = vld [vmem:[%s3 + $0xe4] sm:$0xf]
      %v1976 = vld [vmem:[%s3 + $0xe8] sm:$0xf]
      %v1977 = vld [vmem:[%s3 + $0xec] sm:$0xf]
      %v1978 = vld [vmem:[%s3 + $0xf0] sm:$0xf]
      %v1979 = vld [vmem:[%s3 + $0xf4] sm:$0xf]
      %v1980 = vld [vmem:[%s3 + $0xf8] sm:$0xf]
      %v1981 = vld [vmem:[%s3 + $0xfc] sm:$0xf]
      %v1982 = vld [vmem:[%s3 + $0x100] sm:$0xf]
      %v1983 = vld [vmem:[%s3 + $0x104] sm:$0xf]
      %v1984 = vld [vmem:[%s3 + $0x108] sm:$0xf]
      %v1985 = vld [vmem:[%s3 + $0x10c] sm:$0xf]
      %v1986 = vld [vmem:[%s3 + $0x110] sm:$0xf]
      %v1987 = vld [vmem:[%s3 + $0x114] sm:$0xf]
      %v1988 = vld [vmem:[%s3 + $0x118] sm:$0xf]
      %v1989 = vld [vmem:[%s3 + $0x11c] sm:$0xf]
      %v1990 = vld [vmem:[%s3 + $0x120] sm:$0xf]
      %v1991 = vld [vmem:[%s3 + $0x124] sm:$0xf]
      %v1992 = vld [vmem:[%s3 + $0x128] sm:$0xf]
      %v1993 = vld [vmem:[%s3 + $0x12c] sm:$0xf]
      %v1994 = vld [vmem:[%s3 + $0x130] sm:$0xf]
      %v1995 = vld [vmem:[%s3 + $0x134] sm:$0xf]
      %v1996 = vld [vmem:[%s3 + $0x138] sm:$0xf]
      %v1997 = vld [vmem:[%s3 + $0x13c] sm:$0xf]
      %v1998 = vld [vmem:[%s3 + $0x140] sm:$0xf]
      %v1999 = vld [vmem:[%s3 + $0x144] sm:$0xf]
      %v2000 = vld [vmem:[%s3 + $0x148] sm:$0xf]
      %v2001 = vld [vmem:[%s3 + $0x14c] sm:$0xf]
      %v2002 = vld [vmem:[%s3 + $0x150] sm:$0xf]
      %v2003 = vld [vmem:[%s3 + $0x154] sm:$0xf]
      %v2004 = vld [vmem:[%s3 + $0x158] sm:$0xf]
      %v2005 = vld [vmem:[%s3 + $0x15c] sm:$0xf]
      %v2006 = vld [vmem:[%s3 + $0x160] sm:$0xf]
      %v2007 = vld [vmem:[%s3 + $0x164] sm:$0xf]
      %v2008 = vld [vmem:[%s3 + $0x168] sm:$0xf]
      %v2009 = vld [vmem:[%s3 + $0x16c] sm:$0xf]
      %v2010 = vld [vmem:[%s3 + $0x170] sm:$0xf]
      %v2011 = vld [vmem:[%s3 + $0x174] sm:$0xf]
      %v2012 = vld [vmem:[%s3 + $0x178] sm:$0xf]
      %v2013 = vld [vmem:[%s3 + $0x17c] sm:$0xf]
      %v2014 = vld [vmem:[%s3 + $0x180] sm:$0xf]
      %v2015 = vld [vmem:[%s3 + $0x184] sm:$0xf]
      %v2016 = vld [vmem:[%s3 + $0x188] sm:$0xf]
      %v2017 = vld [vmem:[%s3 + $0x18c] sm:$0xf]
      %v2018 = vld [vmem:[%s3 + $0x190] sm:$0xf]
      %v2019 = vld [vmem:[%s3 + $0x194] sm:$0xf]
      %v2020 = vld [vmem:[%s3 + $0x198] sm:$0xf]
      %v2021 = vld [vmem:[%s3 + $0x19c] sm:$0xf]
      %v2022 = vld [vmem:[%s3 + $0x1a0] sm:$0xf]
      %v2023 = vld [vmem:[%s3 + $0x1a4] sm:$0xf]
      %v2024 = vld [vmem:[%s3 + $0x1a8] sm:$0xf]
      %v2025 = vld [vmem:[%s3 + $0x1ac] sm:$0xf]
      %v2026 = vld [vmem:[%s3 + $0x1b0] sm:$0xf]
      %v2027 = vld [vmem:[%s3 + $0x1b4] sm:$0xf]
      %v2028 = vld [vmem:[%s3 + $0x1b8] sm:$0xf]
      %v2029 = vld [vmem:[%s3 + $0x1bc] sm:$0xf]
      %v2030 = vld [vmem:[%s3 + $0x1c0] sm:$0xf]
      %v2031 = vld [vmem:[%s3 + $0x1c4] sm:$0xf]
      %v2032 = vld [vmem:[%s3 + $0x1c8] sm:$0xf]
      %v2033 = vld [vmem:[%s3 + $0x1cc] sm:$0xf]
      %v2034 = vld [vmem:[%s3 + $0x1d0] sm:$0xf]
      %v2035 = vld [vmem:[%s3 + $0x1d4] sm:$0xf]
      %v2036 = vld [vmem:[%s3 + $0x1d8] sm:$0xf]
      %v2037 = vld [vmem:[%s3 + $0x1dc] sm:$0xf]
      %v2038 = vld [vmem:[%s3 + $0x1e0] sm:$0xf]
      %v2039 = vld [vmem:[%s3 + $0x1e4] sm:$0xf]
      %v2040 = vld [vmem:[%s3 + $0x1e8] sm:$0xf]
      %v2041 = vld [vmem:[%s3 + $0x1ec] sm:$0xf]
      %v2042 = vld [vmem:[%s3 + $0x1f0] sm:$0xf]
      %v2043 = vld [vmem:[%s3 + $0x1f4] sm:$0xf]
      %v2044 = vld [vmem:[%s3 + $0x1f8] sm:$0xf]
      %v2045 = vld [vmem:[%s3 + $0x1fc] sm:$0xf]
      %v2046 = vld [vmem:[%s3 + $0x200] sm:$0xf]
      %v2047 = vld [vmem:[%s3 + $0x204] sm:$0xf]
      %v2048 = vld [vmem:[%s3 + $0x208] sm:$0xf]
      %v2049 = vld [vmem:[%s3 + $0x20c] sm:$0xf]
      %v2050 = vld [vmem:[%s3 + $0x210] sm:$0xf]
      %v2051 = vld [vmem:[%s3 + $0x214] sm:$0xf]
      %v2052 = vld [vmem:[%s3 + $0x218] sm:$0xf]
      %v2053 = vld [vmem:[%s3 + $0x21c] sm:$0xf]
      %v2054 = vld [vmem:[%s3 + $0x220] sm:$0xf]
      %v2055 = vld [vmem:[%s3 + $0x224] sm:$0xf]
      %v2056 = vld [vmem:[%s3 + $0x228] sm:$0xf]
      %v2057 = vld [vmem:[%s3 + $0x22c] sm:$0xf]
      %v2058 = vld [vmem:[%s3 + $0x230] sm:$0xf]
      %v2059 = vld [vmem:[%s3 + $0x234] sm:$0xf]
      %v2060 = vld [vmem:[%s3 + $0x238] sm:$0xf]
      %v2061 = vld [vmem:[%s3 + $0x23c] sm:$0xf]
      %v2206 = vunpack.c.l.b16 %v1918
      %v2207 = vunpack.c.l.b16 %v1919
      %v2208 = vunpack.c.l.b16 %v1920
      %v2209 = vunpack.c.l.b16 %v1921
      %v2210 = vunpack.c.l.b16 %v1922
      %v2211 = vunpack.c.l.b16 %v1923
      %v2212 = vunpack.c.l.b16 %v1924
      %v2213 = vunpack.c.l.b16 %v1925
      %v2214 = vunpack.c.l.b16 %v1926
      %v2215 = vunpack.c.l.b16 %v1927
      %v2216 = vunpack.c.l.b16 %v1928
      %v2217 = vunpack.c.l.b16 %v1929
      %v2218 = vunpack.c.l.b16 %v1930
      %v2219 = vunpack.c.l.b16 %v1931
      %v2220 = vunpack.c.l.b16 %v1932
      %v2221 = vunpack.c.l.b16 %v1933
      %v2222 = vunpack.c.l.b16 %v1934
      %v2223 = vunpack.c.l.b16 %v1935
      %v2224 = vunpack.c.l.b16 %v1936
      %v2225 = vunpack.c.l.b16 %v1937
      %v2226 = vunpack.c.l.b16 %v1938
      %v2227 = vunpack.c.l.b16 %v1939
      %v2228 = vunpack.c.l.b16 %v1940
      %v2229 = vunpack.c.l.b16 %v1941
      %v2230 = vunpack.c.l.b16 %v1942
      %v2231 = vunpack.c.l.b16 %v1943
      %v2232 = vunpack.c.l.b16 %v1944
      %v2233 = vunpack.c.l.b16 %v1945
      %v2234 = vunpack.c.l.b16 %v1946
      %v2235 = vunpack.c.l.b16 %v1947
      %v2236 = vunpack.c.l.b16 %v1948
      %v2237 = vunpack.c.l.b16 %v1949
      %v2238 = vunpack.c.l.b16 %v1950
      %v2239 = vunpack.c.l.b16 %v1951
      %v2240 = vunpack.c.l.b16 %v1952
      %v2241 = vunpack.c.l.b16 %v1953
      %v2242 = vunpack.c.l.b16 %v1954
      %v2243 = vunpack.c.l.b16 %v1955
      %v2244 = vunpack.c.l.b16 %v1956
      %v2245 = vunpack.c.l.b16 %v1957
      %v2246 = vunpack.c.l.b16 %v1958
      %v2247 = vunpack.c.l.b16 %v1959
      %v2248 = vunpack.c.l.b16 %v1960
      %v2249 = vunpack.c.l.b16 %v1961
      %v2250 = vunpack.c.l.b16 %v1962
      %v2251 = vunpack.c.l.b16 %v1963
      %v2252 = vunpack.c.l.b16 %v1964
      %v2253 = vunpack.c.l.b16 %v1965
      %v2254 = vunpack.c.l.b16 %v1966
      %v2255 = vunpack.c.l.b16 %v1967
      %v2256 = vunpack.c.l.b16 %v1968
      %v2257 = vunpack.c.l.b16 %v1969
      %v2258 = vunpack.c.l.b16 %v1970
      %v2259 = vunpack.c.l.b16 %v1971
      %v2260 = vunpack.c.l.b16 %v1972
      %v2261 = vunpack.c.l.b16 %v1973
      %v2262 = vunpack.c.l.b16 %v1974
      %v2263 = vunpack.c.l.b16 %v1975
      %v2264 = vunpack.c.l.b16 %v1976
      %v2265 = vunpack.c.l.b16 %v1977
      %v2266 = vunpack.c.l.b16 %v1978
      %v2267 = vunpack.c.l.b16 %v1979
      %v2268 = vunpack.c.l.b16 %v1980
      %v2269 = vunpack.c.l.b16 %v1981
      %v2270 = vunpack.c.l.b16 %v1982
      %v2271 = vunpack.c.l.b16 %v1983
      %v2272 = vunpack.c.l.b16 %v1984
      %v2273 = vunpack.c.l.b16 %v1985
      %v2274 = vunpack.c.l.b16 %v1986
      %v2275 = vunpack.c.l.b16 %v1987
      %v2276 = vunpack.c.l.b16 %v1988
      %v2277 = vunpack.c.l.b16 %v1989
      %v2278 = vunpack.c.l.b16 %v1990
      %v2279 = vunpack.c.l.b16 %v1991
      %v2280 = vunpack.c.l.b16 %v1992
      %v2281 = vunpack.c.l.b16 %v1993
      %v2282 = vunpack.c.l.b16 %v1994
      %v2283 = vunpack.c.l.b16 %v1995
      %v2284 = vunpack.c.l.b16 %v1996
      %v2285 = vunpack.c.l.b16 %v1997
      %v2286 = vunpack.c.l.b16 %v1998
      %v2287 = vunpack.c.l.b16 %v1999
      %v2288 = vunpack.c.l.b16 %v2000
      %v2289 = vunpack.c.l.b16 %v2001
      %v2290 = vunpack.c.l.b16 %v2002
      %v2291 = vunpack.c.l.b16 %v2003
      %v2292 = vunpack.c.l.b16 %v2004
      %v2293 = vunpack.c.l.b16 %v2005
      %v2294 = vunpack.c.l.b16 %v2006
      %v2295 = vunpack.c.l.b16 %v2007
      %v2296 = vunpack.c.l.b16 %v2008
      %v2297 = vunpack.c.l.b16 %v2009
      %v2298 = vunpack.c.l.b16 %v2010
      %v2299 = vunpack.c.l.b16 %v2011
      %v2300 = vunpack.c.l.b16 %v2012
      %v2301 = vunpack.c.l.b16 %v2013
      %v2302 = vunpack.c.l.b16 %v2014
      %v2303 = vunpack.c.l.b16 %v2015
      %v2304 = vunpack.c.l.b16 %v2016
      %v2305 = vunpack.c.l.b16 %v2017
      %v2306 = vunpack.c.l.b16 %v2018
      %v2307 = vunpack.c.l.b16 %v2019
      %v2308 = vunpack.c.l.b16 %v2020
      %v2309 = vunpack.c.l.b16 %v2021
      %v2310 = vunpack.c.l.b16 %v2022
      %v2311 = vunpack.c.l.b16 %v2023
      %v2312 = vunpack.c.l.b16 %v2024
      %v2313 = vunpack.c.l.b16 %v2025
      %v2314 = vunpack.c.l.b16 %v2026
      %v2315 = vunpack.c.l.b16 %v2027
      %v2316 = vunpack.c.l.b16 %v2028
      %v2317 = vunpack.c.l.b16 %v2029
      %v2318 = vunpack.c.l.b16 %v2030
      %v2319 = vunpack.c.l.b16 %v2031
      %v2320 = vunpack.c.l.b16 %v2032
      %v2321 = vunpack.c.l.b16 %v2033
      %v2322 = vunpack.c.l.b16 %v2034
      %v2323 = vunpack.c.l.b16 %v2035
      %v2324 = vunpack.c.l.b16 %v2036
      %v2325 = vunpack.c.l.b16 %v2037
      %v2326 = vunpack.c.l.b16 %v2038
      %v2327 = vunpack.c.l.b16 %v2039
      %v2328 = vunpack.c.l.b16 %v2040
      %v2329 = vunpack.c.l.b16 %v2041
      %v2330 = vunpack.c.l.b16 %v2042
      %v2331 = vunpack.c.l.b16 %v2043
      %v2332 = vunpack.c.l.b16 %v2044
      %v2333 = vunpack.c.l.b16 %v2045
      %v2334 = vunpack.c.l.b16 %v2046
      %v2335 = vunpack.c.l.b16 %v2047
      %v2336 = vunpack.c.l.b16 %v2048
      %v2337 = vunpack.c.l.b16 %v2049
      %v2338 = vunpack.c.l.b16 %v2050
      %v2339 = vunpack.c.l.b16 %v2051
      %v2340 = vunpack.c.l.b16 %v2052
      %v2341 = vunpack.c.l.b16 %v2053
      %v2342 = vunpack.c.l.b16 %v2054
      %v2343 = vunpack.c.l.b16 %v2055
      %v2344 = vunpack.c.l.b16 %v2056
      %v2345 = vunpack.c.l.b16 %v2057
      %v2346 = vunpack.c.l.b16 %v2058
      %v2347 = vunpack.c.l.b16 %v2059
      %v2348 = vunpack.c.l.b16 %v2060
      %v2349 = vunpack.c.l.b16 %v2061
      %v2350 = vpack.c.b16 %v2207, %v2206
      %v2351 = vpack.c.b16 %v2209, %v2208
      %v2352 = vpack.c.b16 %v2211, %v2210
      %v2353 = vpack.c.b16 %v2213, %v2212
      %v2354 = vpack.c.b16 %v2215, %v2214
      %v2355 = vpack.c.b16 %v2217, %v2216
      %v2356 = vpack.c.b16 %v2219, %v2218
      %v2357 = vpack.c.b16 %v2221, %v2220
      %v2358 = vpack.c.b16 %v2223, %v2222
      %v2359 = vpack.c.b16 %v2225, %v2224
      %v2360 = vpack.c.b16 %v2227, %v2226
      %v2361 = vpack.c.b16 %v2229, %v2228
      %v2362 = vpack.c.b16 %v2231, %v2230
      %v2363 = vpack.c.b16 %v2233, %v2232
      %v2364 = vpack.c.b16 %v2235, %v2234
      %v2365 = vpack.c.b16 %v2237, %v2236
      %v2366 = vpack.c.b16 %v2239, %v2238
      %v2367 = vpack.c.b16 %v2241, %v2240
      %v2368 = vpack.c.b16 %v2243, %v2242
      %v2369 = vpack.c.b16 %v2245, %v2244
      %v2370 = vpack.c.b16 %v2247, %v2246
      %v2371 = vpack.c.b16 %v2249, %v2248
      %v2372 = vpack.c.b16 %v2251, %v2250
      %v2373 = vpack.c.b16 %v2253, %v2252
      %v2374 = vpack.c.b16 %v2255, %v2254
      %v2375 = vpack.c.b16 %v2257, %v2256
      %v2376 = vpack.c.b16 %v2259, %v2258
      %v2377 = vpack.c.b16 %v2261, %v2260
      %v2378 = vpack.c.b16 %v2263, %v2262
      %v2379 = vpack.c.b16 %v2265, %v2264
      %v2380 = vpack.c.b16 %v2267, %v2266
      %v2381 = vpack.c.b16 %v2269, %v2268
      %v2382 = vpack.c.b16 %v2271, %v2270
      %v2383 = vpack.c.b16 %v2273, %v2272
      %v2384 = vpack.c.b16 %v2275, %v2274
      %v2385 = vpack.c.b16 %v2277, %v2276
      %v2386 = vpack.c.b16 %v2279, %v2278
      %v2387 = vpack.c.b16 %v2281, %v2280
      %v2388 = vpack.c.b16 %v2283, %v2282
      %v2389 = vpack.c.b16 %v2285, %v2284
      %v2390 = vpack.c.b16 %v2287, %v2286
      %v2391 = vpack.c.b16 %v2289, %v2288
      %v2392 = vpack.c.b16 %v2291, %v2290
      %v2393 = vpack.c.b16 %v2293, %v2292
      %v2394 = vpack.c.b16 %v2295, %v2294
      %v2395 = vpack.c.b16 %v2297, %v2296
      %v2396 = vpack.c.b16 %v2299, %v2298
      %v2397 = vpack.c.b16 %v2301, %v2300
      %v2398 = vpack.c.b16 %v2303, %v2302
      %v2399 = vpack.c.b16 %v2305, %v2304
      %v2400 = vpack.c.b16 %v2307, %v2306
      %v2401 = vpack.c.b16 %v2309, %v2308
      %v2402 = vpack.c.b16 %v2311, %v2310
      %v2403 = vpack.c.b16 %v2313, %v2312
      %v2404 = vpack.c.b16 %v2315, %v2314
      %v2405 = vpack.c.b16 %v2317, %v2316
      %v2406 = vpack.c.b16 %v2319, %v2318
      %v2407 = vpack.c.b16 %v2321, %v2320
      %v2408 = vpack.c.b16 %v2323, %v2322
      %v2409 = vpack.c.b16 %v2325, %v2324
      %v2410 = vpack.c.b16 %v2327, %v2326
      %v2411 = vpack.c.b16 %v2329, %v2328
      %v2412 = vpack.c.b16 %v2331, %v2330
      %v2413 = vpack.c.b16 %v2333, %v2332
      %v2414 = vpack.c.b16 %v2335, %v2334
      %v2415 = vpack.c.b16 %v2337, %v2336
      %v2416 = vpack.c.b16 %v2339, %v2338
      %v2417 = vpack.c.b16 %v2341, %v2340
      %v2418 = vpack.c.b16 %v2343, %v2342
      %v2419 = vpack.c.b16 %v2345, %v2344
      %v2420 = vpack.c.b16 %v2347, %v2346
      %v2421 = vpack.c.b16 %v2349, %v2348
      %2494 = vmatpush.bf16.msra.mxu0 %v2357
      %2495 = vmatpush.bf16.msra.mxu0 %v2356
      %2496 = vmatpush.bf16.msra.mxu0 %v2355
      %2497 = vmatpush.bf16.msra.mxu0 %v2354
      %2498 = vmatpush.bf16.msra.mxu0 %v2353
      %2499 = vmatpush.bf16.msra.mxu0 %v2352
      %2500 = vmatpush.bf16.msra.mxu0 %v2351
      %2501 = vmatpush.bf16.msra.mxu0 %v2350
      %2502 = vmatmul.bf16.gmra.mxu0 %v1118
      %v2503 = vpop.f32.mrf.mxu0
      %v2504 = vadd.f32 0.0, %v2503
      %v2505 = vpop.f32.mrf.mxu0
      %v2506 = vadd.f32 0.0, %v2505
      %2507 = vmatmul.bf16.gmra.mxu0 %v1119
      %v2508 = vpop.f32.mrf.mxu0
      %v2509 = vadd.f32 0.0, %v2508
      %v2510 = vpop.f32.mrf.mxu0
      %v2511 = vadd.f32 0.0, %v2510
      %2512 = vmatmul.bf16.gmra.mxu0 %v1120
      %v2513 = vpop.f32.mrf.mxu0
      %v2514 = vadd.f32 0.0, %v2513
      %v2515 = vpop.f32.mrf.mxu0
      %v2516 = vadd.f32 0.0, %v2515
      %2517 = vmatmul.bf16.gmra.mxu0 %v1121
      %v2518 = vpop.f32.mrf.mxu0
      %v2519 = vadd.f32 0.0, %v2518
      %v2520 = vpop.f32.mrf.mxu0
      %v2521 = vadd.f32 0.0, %v2520
      %2522 = vmatmul.bf16.gmra.mxu0 %v1122
      %v2523 = vpop.f32.mrf.mxu0
      %v2524 = vadd.f32 0.0, %v2523
      %v2525 = vpop.f32.mrf.mxu0
      %v2526 = vadd.f32 0.0, %v2525
      %2527 = vmatmul.bf16.gmra.mxu0 %v1123
      %v2528 = vpop.f32.mrf.mxu0
      %v2529 = vadd.f32 0.0, %v2528
      %v2530 = vpop.f32.mrf.mxu0
      %v2531 = vadd.f32 0.0, %v2530
      %2532 = vmatmul.bf16.gmra.mxu0 %v1124
      %v2533 = vpop.f32.mrf.mxu0
      %v2534 = vadd.f32 0.0, %v2533
      %v2535 = vpop.f32.mrf.mxu0
      %v2536 = vadd.f32 0.0, %v2535
      %2537 = vmatmul.bf16.gmra.mxu0 %v1125
      %v2538 = vpop.f32.mrf.mxu0
      %v2539 = vadd.f32 0.0, %v2538
      %v2540 = vpop.f32.mrf.mxu0
      %v2541 = vadd.f32 0.0, %v2540
      %2542 = vmatmul.bf16.gmra.mxu0 %v1126
      %v2543 = vpop.f32.mrf.mxu0
      %v2544 = vadd.f32 0.0, %v2543
      %v2545 = vpop.f32.mrf.mxu0
      %v2546 = vadd.f32 0.0, %v2545
      %2547 = vmatmul.bf16.gmra.mxu0 %v1127
      %v2548 = vpop.f32.mrf.mxu0
      %v2549 = vadd.f32 0.0, %v2548
      %v2550 = vpop.f32.mrf.mxu0
      %v2551 = vadd.f32 0.0, %v2550
      %2552 = vmatmul.bf16.gmra.mxu0 %v1128
      %v2553 = vpop.f32.mrf.mxu0
      %v2554 = vadd.f32 0.0, %v2553
      %v2555 = vpop.f32.mrf.mxu0
      %v2556 = vadd.f32 0.0, %v2555
      %2557 = vmatmul.bf16.gmra.mxu0 %v1129
      %v2558 = vpop.f32.mrf.mxu0
      %v2559 = vadd.f32 0.0, %v2558
      %v2560 = vpop.f32.mrf.mxu0
      %v2561 = vadd.f32 0.0, %v2560
      %2562 = vmatmul.bf16.gmra.mxu0 %v1130
      %v2563 = vpop.f32.mrf.mxu0
      %v2564 = vadd.f32 0.0, %v2563
      %v2565 = vpop.f32.mrf.mxu0
      %v2566 = vadd.f32 0.0, %v2565
      %2567 = vmatmul.bf16.gmra.mxu0 %v1131
      %v2568 = vpop.f32.mrf.mxu0
      %v2569 = vadd.f32 0.0, %v2568
      %v2570 = vpop.f32.mrf.mxu0
      %v2571 = vadd.f32 0.0, %v2570
      %2572 = vmatmul.bf16.gmra.mxu0 %v1132
      %v2573 = vpop.f32.mrf.mxu0
      %v2574 = vadd.f32 0.0, %v2573
      %v2575 = vpop.f32.mrf.mxu0
      %v2576 = vadd.f32 0.0, %v2575
      %2577 = vmatmul.bf16.gmra.mxu0 %v1133
      %v2578 = vpop.f32.mrf.mxu0
      %v2579 = vadd.f32 0.0, %v2578
      %v2580 = vpop.f32.mrf.mxu0
      %v2581 = vadd.f32 0.0, %v2580
      %2582 = vdwg.mxu0
      %2583 = vmatpush.bf16.msra.mxu0 %v2365
      %2584 = vmatpush.bf16.msra.mxu0 %v2364
      %2585 = vmatpush.bf16.msra.mxu0 %v2363
      %2586 = vmatpush.bf16.msra.mxu0 %v2362
      %2587 = vmatpush.bf16.msra.mxu0 %v2361
      %2588 = vmatpush.bf16.msra.mxu0 %v2360
      %2589 = vmatpush.bf16.msra.mxu0 %v2359
      %2590 = vmatpush.bf16.msra.mxu0 %v2358
      %2591 = vmatmul.bf16.gmra.mxu0 %v1214
      %v2592 = vpop.f32.mrf.mxu0
      %v2593 = vadd.f32 %v2504, %v2592
      %v2594 = vpop.f32.mrf.mxu0
      %v2595 = vadd.f32 %v2506, %v2594
      %2596 = vmatmul.bf16.gmra.mxu0 %v1215
      %v2597 = vpop.f32.mrf.mxu0
      %v2598 = vadd.f32 %v2509, %v2597
      %v2599 = vpop.f32.mrf.mxu0
      %v2600 = vadd.f32 %v2511, %v2599
      %2601 = vmatmul.bf16.gmra.mxu0 %v1216
      %v2602 = vpop.f32.mrf.mxu0
      %v2603 = vadd.f32 %v2514, %v2602
      %v2604 = vpop.f32.mrf.mxu0
      %v2605 = vadd.f32 %v2516, %v2604
      %2606 = vmatmul.bf16.gmra.mxu0 %v1217
      %v2607 = vpop.f32.mrf.mxu0
      %v2608 = vadd.f32 %v2519, %v2607
      %v2609 = vpop.f32.mrf.mxu0
      %v2610 = vadd.f32 %v2521, %v2609
      %2611 = vmatmul.bf16.gmra.mxu0 %v1218
      %v2612 = vpop.f32.mrf.mxu0
      %v2613 = vadd.f32 %v2524, %v2612
      %v2614 = vpop.f32.mrf.mxu0
      %v2615 = vadd.f32 %v2526, %v2614
      %2616 = vmatmul.bf16.gmra.mxu0 %v1219
      %v2617 = vpop.f32.mrf.mxu0
      %v2618 = vadd.f32 %v2529, %v2617
      %v2619 = vpop.f32.mrf.mxu0
      %v2620 = vadd.f32 %v2531, %v2619
      %2621 = vmatmul.bf16.gmra.mxu0 %v1220
      %v2622 = vpop.f32.mrf.mxu0
      %v2623 = vadd.f32 %v2534, %v2622
      %v2624 = vpop.f32.mrf.mxu0
      %v2625 = vadd.f32 %v2536, %v2624
      %2626 = vmatmul.bf16.gmra.mxu0 %v1221
      %v2627 = vpop.f32.mrf.mxu0
      %v2628 = vadd.f32 %v2539, %v2627
      %v2629 = vpop.f32.mrf.mxu0
      %v2630 = vadd.f32 %v2541, %v2629
      %2631 = vmatmul.bf16.gmra.mxu0 %v1222
      %v2632 = vpop.f32.mrf.mxu0
      %v2633 = vadd.f32 %v2544, %v2632
      %v2634 = vpop.f32.mrf.mxu0
      %v2635 = vadd.f32 %v2546, %v2634
      %2636 = vmatmul.bf16.gmra.mxu0 %v1223
      %v2637 = vpop.f32.mrf.mxu0
      %v2638 = vadd.f32 %v2549, %v2637
      %v2639 = vpop.f32.mrf.mxu0
      %v2640 = vadd.f32 %v2551, %v2639
      %2641 = vmatmul.bf16.gmra.mxu0 %v1224
      %v2642 = vpop.f32.mrf.mxu0
      %v2643 = vadd.f32 %v2554, %v2642
      %v2644 = vpop.f32.mrf.mxu0
      %v2645 = vadd.f32 %v2556, %v2644
      %2646 = vmatmul.bf16.gmra.mxu0 %v1225
      %v2647 = vpop.f32.mrf.mxu0
      %v2648 = vadd.f32 %v2559, %v2647
      %v2649 = vpop.f32.mrf.mxu0
      %v2650 = vadd.f32 %v2561, %v2649
      %2651 = vmatmul.bf16.gmra.mxu0 %v1226
      %v2652 = vpop.f32.mrf.mxu0
      %v2653 = vadd.f32 %v2564, %v2652
      %v2654 = vpop.f32.mrf.mxu0
      %v2655 = vadd.f32 %v2566, %v2654
      %2656 = vmatmul.bf16.gmra.mxu0 %v1227
      %v2657 = vpop.f32.mrf.mxu0
      %v2658 = vadd.f32 %v2569, %v2657
      %v2659 = vpop.f32.mrf.mxu0
      %v2660 = vadd.f32 %v2571, %v2659
      %2661 = vmatmul.bf16.gmra.mxu0 %v1228
      %v2662 = vpop.f32.mrf.mxu0
      %v2663 = vadd.f32 %v2574, %v2662
      %v2664 = vpop.f32.mrf.mxu0
      %v2665 = vadd.f32 %v2576, %v2664
      %2666 = vmatmul.bf16.gmra.mxu0 %v1229
      %v2667 = vpop.f32.mrf.mxu0
      %v2668 = vadd.f32 %v2579, %v2667
      %v2669 = vpop.f32.mrf.mxu0
      %v2670 = vadd.f32 %v2581, %v2669
      %2671 = vdwg.mxu0
      %2672 = vmatpush.bf16.msra.mxu0 %v2373
      %2673 = vmatpush.bf16.msra.mxu0 %v2372
      %2674 = vmatpush.bf16.msra.mxu0 %v2371
      %2675 = vmatpush.bf16.msra.mxu0 %v2370
      %2676 = vmatpush.bf16.msra.mxu0 %v2369
      %2677 = vmatpush.bf16.msra.mxu0 %v2368
      %2678 = vmatpush.bf16.msra.mxu0 %v2367
      %2679 = vmatpush.bf16.msra.mxu0 %v2366
      %2680 = vmatmul.bf16.gmra.mxu0 %v1310
      %v2681 = vpop.f32.mrf.mxu0
      %v2682 = vadd.f32 %v2593, %v2681
      %v2683 = vpop.f32.mrf.mxu0
      %v2684 = vadd.f32 %v2595, %v2683
      %2685 = vmatmul.bf16.gmra.mxu0 %v1311
      %v2686 = vpop.f32.mrf.mxu0
      %v2687 = vadd.f32 %v2598, %v2686
      %v2688 = vpop.f32.mrf.mxu0
      %v2689 = vadd.f32 %v2600, %v2688
      %2690 = vmatmul.bf16.gmra.mxu0 %v1312
      %v2691 = vpop.f32.mrf.mxu0
      %v2692 = vadd.f32 %v2603, %v2691
      %v2693 = vpop.f32.mrf.mxu0
      %v2694 = vadd.f32 %v2605, %v2693
      %2695 = vmatmul.bf16.gmra.mxu0 %v1313
      %v2696 = vpop.f32.mrf.mxu0
      %v2697 = vadd.f32 %v2608, %v2696
      %v2698 = vpop.f32.mrf.mxu0
      %v2699 = vadd.f32 %v2610, %v2698
      %2700 = vmatmul.bf16.gmra.mxu0 %v1314
      %v2701 = vpop.f32.mrf.mxu0
      %v2702 = vadd.f32 %v2613, %v2701
      %v2703 = vpop.f32.mrf.mxu0
      %v2704 = vadd.f32 %v2615, %v2703
      %2705 = vmatmul.bf16.gmra.mxu0 %v1315
      %v2706 = vpop.f32.mrf.mxu0
      %v2707 = vadd.f32 %v2618, %v2706
      %v2708 = vpop.f32.mrf.mxu0
      %v2709 = vadd.f32 %v2620, %v2708
      %2710 = vmatmul.bf16.gmra.mxu0 %v1316
      %v2711 = vpop.f32.mrf.mxu0
      %v2712 = vadd.f32 %v2623, %v2711
      %v2713 = vpop.f32.mrf.mxu0
      %v2714 = vadd.f32 %v2625, %v2713
      %2715 = vmatmul.bf16.gmra.mxu0 %v1317
      %v2716 = vpop.f32.mrf.mxu0
      %v2717 = vadd.f32 %v2628, %v2716
      %v2718 = vpop.f32.mrf.mxu0
      %v2719 = vadd.f32 %v2630, %v2718
      %2720 = vmatmul.bf16.gmra.mxu0 %v1318
      %v2721 = vpop.f32.mrf.mxu0
      %v2722 = vadd.f32 %v2633, %v2721
      %v2723 = vpop.f32.mrf.mxu0
      %v2724 = vadd.f32 %v2635, %v2723
      %2725 = vmatmul.bf16.gmra.mxu0 %v1319
      %v2726 = vpop.f32.mrf.mxu0
      %v2727 = vadd.f32 %v2638, %v2726
      %v2728 = vpop.f32.mrf.mxu0
      %v2729 = vadd.f32 %v2640, %v2728
      %2730 = vmatmul.bf16.gmra.mxu0 %v1320
      %v2731 = vpop.f32.mrf.mxu0
      %v2732 = vadd.f32 %v2643, %v2731
      %v2733 = vpop.f32.mrf.mxu0
      %v2734 = vadd.f32 %v2645, %v2733
      %2735 = vmatmul.bf16.gmra.mxu0 %v1321
      %v2736 = vpop.f32.mrf.mxu0
      %v2737 = vadd.f32 %v2648, %v2736
      %v2738 = vpop.f32.mrf.mxu0
      %v2739 = vadd.f32 %v2650, %v2738
      %2740 = vmatmul.bf16.gmra.mxu0 %v1322
      %v2741 = vpop.f32.mrf.mxu0
      %v2742 = vadd.f32 %v2653, %v2741
      %v2743 = vpop.f32.mrf.mxu0
      %v2744 = vadd.f32 %v2655, %v2743
      %2745 = vmatmul.bf16.gmra.mxu0 %v1323
      %v2746 = vpop.f32.mrf.mxu0
      %v2747 = vadd.f32 %v2658, %v2746
      %v2748 = vpop.f32.mrf.mxu0
      %v2749 = vadd.f32 %v2660, %v2748
      %2750 = vmatmul.bf16.gmra.mxu0 %v1324
      %v2751 = vpop.f32.mrf.mxu0
      %v2752 = vadd.f32 %v2663, %v2751
      %v2753 = vpop.f32.mrf.mxu0
      %v2754 = vadd.f32 %v2665, %v2753
      %2755 = vmatmul.bf16.gmra.mxu0 %v1325
      %v2756 = vpop.f32.mrf.mxu0
      %v2757 = vadd.f32 %v2668, %v2756
      %v2758 = vpop.f32.mrf.mxu0
      %v2759 = vadd.f32 %v2670, %v2758
      %2760 = vdwg.mxu0
      %2761 = vmatpush.bf16.msra.mxu0 %v2381
      %2762 = vmatpush.bf16.msra.mxu0 %v2380
      %2763 = vmatpush.bf16.msra.mxu0 %v2379
      %2764 = vmatpush.bf16.msra.mxu0 %v2378
      %2765 = vmatpush.bf16.msra.mxu0 %v2377
      %2766 = vmatpush.bf16.msra.mxu0 %v2376
      %2767 = vmatpush.bf16.msra.mxu0 %v2375
      %2768 = vmatpush.bf16.msra.mxu0 %v2374
      %2769 = vmatmul.bf16.gmra.mxu0 %v1406
      %v2770 = vpop.f32.mrf.mxu0
      %v2771 = vadd.f32 %v2682, %v2770
      %v2772 = vpop.f32.mrf.mxu0
      %v2773 = vadd.f32 %v2684, %v2772
      %2774 = vmatmul.bf16.gmra.mxu0 %v1407
      %v2775 = vpop.f32.mrf.mxu0
      %v2776 = vadd.f32 %v2687, %v2775
      %v2777 = vpop.f32.mrf.mxu0
      %v2778 = vadd.f32 %v2689, %v2777
      %2779 = vmatmul.bf16.gmra.mxu0 %v1408
      %v2780 = vpop.f32.mrf.mxu0
      %v2781 = vadd.f32 %v2692, %v2780
      %v2782 = vpop.f32.mrf.mxu0
      %v2783 = vadd.f32 %v2694, %v2782
      %2784 = vmatmul.bf16.gmra.mxu0 %v1409
      %v2785 = vpop.f32.mrf.mxu0
      %v2786 = vadd.f32 %v2697, %v2785
      %v2787 = vpop.f32.mrf.mxu0
      %v2788 = vadd.f32 %v2699, %v2787
      %2789 = vmatmul.bf16.gmra.mxu0 %v1410
      %v2790 = vpop.f32.mrf.mxu0
      %v2791 = vadd.f32 %v2702, %v2790
      %v2792 = vpop.f32.mrf.mxu0
      %v2793 = vadd.f32 %v2704, %v2792
      %2794 = vmatmul.bf16.gmra.mxu0 %v1411
      %v2795 = vpop.f32.mrf.mxu0
      %v2796 = vadd.f32 %v2707, %v2795
      %v2797 = vpop.f32.mrf.mxu0
      %v2798 = vadd.f32 %v2709, %v2797
      %2799 = vmatmul.bf16.gmra.mxu0 %v1412
      %v2800 = vpop.f32.mrf.mxu0
      %v2801 = vadd.f32 %v2712, %v2800
      %v2802 = vpop.f32.mrf.mxu0
      %v2803 = vadd.f32 %v2714, %v2802
      %2804 = vmatmul.bf16.gmra.mxu0 %v1413
      %v2805 = vpop.f32.mrf.mxu0
      %v2806 = vadd.f32 %v2717, %v2805
      %v2807 = vpop.f32.mrf.mxu0
      %v2808 = vadd.f32 %v2719, %v2807
      %2809 = vmatmul.bf16.gmra.mxu0 %v1414
      %v2810 = vpop.f32.mrf.mxu0
      %v2811 = vadd.f32 %v2722, %v2810
      %v2812 = vpop.f32.mrf.mxu0
      %v2813 = vadd.f32 %v2724, %v2812
      %2814 = vmatmul.bf16.gmra.mxu0 %v1415
      %v2815 = vpop.f32.mrf.mxu0
      %v2816 = vadd.f32 %v2727, %v2815
      %v2817 = vpop.f32.mrf.mxu0
      %v2818 = vadd.f32 %v2729, %v2817
      %2819 = vmatmul.bf16.gmra.mxu0 %v1416
      %v2820 = vpop.f32.mrf.mxu0
      %v2821 = vadd.f32 %v2732, %v2820
      %v2822 = vpop.f32.mrf.mxu0
      %v2823 = vadd.f32 %v2734, %v2822
      %2824 = vmatmul.bf16.gmra.mxu0 %v1417
      %v2825 = vpop.f32.mrf.mxu0
      %v2826 = vadd.f32 %v2737, %v2825
      %v2827 = vpop.f32.mrf.mxu0
      %v2828 = vadd.f32 %v2739, %v2827
      %2829 = vmatmul.bf16.gmra.mxu0 %v1418
      %v2830 = vpop.f32.mrf.mxu0
      %v2831 = vadd.f32 %v2742, %v2830
      %v2832 = vpop.f32.mrf.mxu0
      %v2833 = vadd.f32 %v2744, %v2832
      %2834 = vmatmul.bf16.gmra.mxu0 %v1419
      %v2835 = vpop.f32.mrf.mxu0
      %v2836 = vadd.f32 %v2747, %v2835
      %v2837 = vpop.f32.mrf.mxu0
      %v2838 = vadd.f32 %v2749, %v2837
      %2839 = vmatmul.bf16.gmra.mxu0 %v1420
      %v2840 = vpop.f32.mrf.mxu0
      %v2841 = vadd.f32 %v2752, %v2840
      %v2842 = vpop.f32.mrf.mxu0
      %v2843 = vadd.f32 %v2754, %v2842
      %2844 = vmatmul.bf16.gmra.mxu0 %v1421
      %v2845 = vpop.f32.mrf.mxu0
      %v2846 = vadd.f32 %v2757, %v2845
      %v2847 = vpop.f32.mrf.mxu0
      %v2848 = vadd.f32 %v2759, %v2847
      %2849 = vdwg.mxu0
      %2850 = vmatpush.bf16.msra.mxu0 %v2389
      %2851 = vmatpush.bf16.msra.mxu0 %v2388
      %2852 = vmatpush.bf16.msra.mxu0 %v2387
      %2853 = vmatpush.bf16.msra.mxu0 %v2386
      %2854 = vmatpush.bf16.msra.mxu0 %v2385
      %2855 = vmatpush.bf16.msra.mxu0 %v2384
      %2856 = vmatpush.bf16.msra.mxu0 %v2383
      %2857 = vmatpush.bf16.msra.mxu0 %v2382
      %2858 = vmatmul.bf16.gmra.mxu0 %v1502
      %v2859 = vpop.f32.mrf.mxu0
      %v2860 = vadd.f32 %v2771, %v2859
      %v2861 = vpop.f32.mrf.mxu0
      %v2862 = vadd.f32 %v2773, %v2861
      %2863 = vmatmul.bf16.gmra.mxu0 %v1503
      %v2864 = vpop.f32.mrf.mxu0
      %v2865 = vadd.f32 %v2776, %v2864
      %v2866 = vpop.f32.mrf.mxu0
      %v2867 = vadd.f32 %v2778, %v2866
      %2868 = vmatmul.bf16.gmra.mxu0 %v1504
      %v2869 = vpop.f32.mrf.mxu0
      %v2870 = vadd.f32 %v2781, %v2869
      %v2871 = vpop.f32.mrf.mxu0
      %v2872 = vadd.f32 %v2783, %v2871
      %2873 = vmatmul.bf16.gmra.mxu0 %v1505
      %v2874 = vpop.f32.mrf.mxu0
      %v2875 = vadd.f32 %v2786, %v2874
      %v2876 = vpop.f32.mrf.mxu0
      %v2877 = vadd.f32 %v2788, %v2876
      %2878 = vmatmul.bf16.gmra.mxu0 %v1506
      %v2879 = vpop.f32.mrf.mxu0
      %v2880 = vadd.f32 %v2791, %v2879
      %v2881 = vpop.f32.mrf.mxu0
      %v2882 = vadd.f32 %v2793, %v2881
      %2883 = vmatmul.bf16.gmra.mxu0 %v1507
      %v2884 = vpop.f32.mrf.mxu0
      %v2885 = vadd.f32 %v2796, %v2884
      %v2886 = vpop.f32.mrf.mxu0
      %v2887 = vadd.f32 %v2798, %v2886
      %2888 = vmatmul.bf16.gmra.mxu0 %v1508
      %v2889 = vpop.f32.mrf.mxu0
      %v2890 = vadd.f32 %v2801, %v2889
      %v2891 = vpop.f32.mrf.mxu0
      %v2892 = vadd.f32 %v2803, %v2891
      %2893 = vmatmul.bf16.gmra.mxu0 %v1509
      %v2894 = vpop.f32.mrf.mxu0
      %v2895 = vadd.f32 %v2806, %v2894
      %v2896 = vpop.f32.mrf.mxu0
      %v2897 = vadd.f32 %v2808, %v2896
      %2898 = vmatmul.bf16.gmra.mxu0 %v1510
      %v2899 = vpop.f32.mrf.mxu0
      %v2900 = vadd.f32 %v2811, %v2899
      %v2901 = vpop.f32.mrf.mxu0
      %v2902 = vadd.f32 %v2813, %v2901
      %2903 = vmatmul.bf16.gmra.mxu0 %v1511
      %v2904 = vpop.f32.mrf.mxu0
      %v2905 = vadd.f32 %v2816, %v2904
      %v2906 = vpop.f32.mrf.mxu0
      %v2907 = vadd.f32 %v2818, %v2906
      %2908 = vmatmul.bf16.gmra.mxu0 %v1512
      %v2909 = vpop.f32.mrf.mxu0
      %v2910 = vadd.f32 %v2821, %v2909
      %v2911 = vpop.f32.mrf.mxu0
      %v2912 = vadd.f32 %v2823, %v2911
      %2913 = vmatmul.bf16.gmra.mxu0 %v1513
      %v2914 = vpop.f32.mrf.mxu0
      %v2915 = vadd.f32 %v2826, %v2914
      %v2916 = vpop.f32.mrf.mxu0
      %v2917 = vadd.f32 %v2828, %v2916
      %2918 = vmatmul.bf16.gmra.mxu0 %v1514
      %v2919 = vpop.f32.mrf.mxu0
      %v2920 = vadd.f32 %v2831, %v2919
      %v2921 = vpop.f32.mrf.mxu0
      %v2922 = vadd.f32 %v2833, %v2921
      %2923 = vmatmul.bf16.gmra.mxu0 %v1515
      %v2924 = vpop.f32.mrf.mxu0
      %v2925 = vadd.f32 %v2836, %v2924
      %v2926 = vpop.f32.mrf.mxu0
      %v2927 = vadd.f32 %v2838, %v2926
      %2928 = vmatmul.bf16.gmra.mxu0 %v1516
      %v2929 = vpop.f32.mrf.mxu0
      %v2930 = vadd.f32 %v2841, %v2929
      %v2931 = vpop.f32.mrf.mxu0
      %v2932 = vadd.f32 %v2843, %v2931
      %2933 = vmatmul.bf16.gmra.mxu0 %v1517
      %v2934 = vpop.f32.mrf.mxu0
      %v2935 = vadd.f32 %v2846, %v2934
      %v2936 = vpop.f32.mrf.mxu0
      %v2937 = vadd.f32 %v2848, %v2936
      %2938 = vdwg.mxu0
      %2939 = vmatpush.bf16.msra.mxu0 %v2397
      %2940 = vmatpush.bf16.msra.mxu0 %v2396
      %2941 = vmatpush.bf16.msra.mxu0 %v2395
      %2942 = vmatpush.bf16.msra.mxu0 %v2394
      %2943 = vmatpush.bf16.msra.mxu0 %v2393
      %2944 = vmatpush.bf16.msra.mxu0 %v2392
      %2945 = vmatpush.bf16.msra.mxu0 %v2391
      %2946 = vmatpush.bf16.msra.mxu0 %v2390
      %2947 = vmatmul.bf16.gmra.mxu0 %v1598
      %v2948 = vpop.f32.mrf.mxu0
      %v2949 = vadd.f32 %v2860, %v2948
      %v2950 = vpop.f32.mrf.mxu0
      %v2951 = vadd.f32 %v2862, %v2950
      %2952 = vmatmul.bf16.gmra.mxu0 %v1599
      %v2953 = vpop.f32.mrf.mxu0
      %v2954 = vadd.f32 %v2865, %v2953
      %v2955 = vpop.f32.mrf.mxu0
      %v2956 = vadd.f32 %v2867, %v2955
      %2957 = vmatmul.bf16.gmra.mxu0 %v1600
      %v2958 = vpop.f32.mrf.mxu0
      %v2959 = vadd.f32 %v2870, %v2958
      %v2960 = vpop.f32.mrf.mxu0
      %v2961 = vadd.f32 %v2872, %v2960
      %2962 = vmatmul.bf16.gmra.mxu0 %v1601
      %v2963 = vpop.f32.mrf.mxu0
      %v2964 = vadd.f32 %v2875, %v2963
      %v2965 = vpop.f32.mrf.mxu0
      %v2966 = vadd.f32 %v2877, %v2965
      %2967 = vmatmul.bf16.gmra.mxu0 %v1602
      %v2968 = vpop.f32.mrf.mxu0
      %v2969 = vadd.f32 %v2880, %v2968
      %v2970 = vpop.f32.mrf.mxu0
      %v2971 = vadd.f32 %v2882, %v2970
      %2972 = vmatmul.bf16.gmra.mxu0 %v1603
      %v2973 = vpop.f32.mrf.mxu0
      %v2974 = vadd.f32 %v2885, %v2973
      %v2975 = vpop.f32.mrf.mxu0
      %v2976 = vadd.f32 %v2887, %v2975
      %2977 = vmatmul.bf16.gmra.mxu0 %v1604
      %v2978 = vpop.f32.mrf.mxu0
      %v2979 = vadd.f32 %v2890, %v2978
      %v2980 = vpop.f32.mrf.mxu0
      %v2981 = vadd.f32 %v2892, %v2980
      %2982 = vmatmul.bf16.gmra.mxu0 %v1605
      %v2983 = vpop.f32.mrf.mxu0
      %v2984 = vadd.f32 %v2895, %v2983
      %v2985 = vpop.f32.mrf.mxu0
      %v2986 = vadd.f32 %v2897, %v2985
      %2987 = vmatmul.bf16.gmra.mxu0 %v1606
      %v2988 = vpop.f32.mrf.mxu0
      %v2989 = vadd.f32 %v2900, %v2988
      %v2990 = vpop.f32.mrf.mxu0
      %v2991 = vadd.f32 %v2902, %v2990
      %2992 = vmatmul.bf16.gmra.mxu0 %v1607
      %v2993 = vpop.f32.mrf.mxu0
      %v2994 = vadd.f32 %v2905, %v2993
      %v2995 = vpop.f32.mrf.mxu0
      %v2996 = vadd.f32 %v2907, %v2995
      %2997 = vmatmul.bf16.gmra.mxu0 %v1608
      %v2998 = vpop.f32.mrf.mxu0
      %v2999 = vadd.f32 %v2910, %v2998
      %v3000 = vpop.f32.mrf.mxu0
      %v3001 = vadd.f32 %v2912, %v3000
      %3002 = vmatmul.bf16.gmra.mxu0 %v1609
      %v3003 = vpop.f32.mrf.mxu0
      %v3004 = vadd.f32 %v2915, %v3003
      %v3005 = vpop.f32.mrf.mxu0
      %v3006 = vadd.f32 %v2917, %v3005
      %3007 = vmatmul.bf16.gmra.mxu0 %v1610
      %v3008 = vpop.f32.mrf.mxu0
      %v3009 = vadd.f32 %v2920, %v3008
      %v3010 = vpop.f32.mrf.mxu0
      %v3011 = vadd.f32 %v2922, %v3010
      %3012 = vmatmul.bf16.gmra.mxu0 %v1611
      %v3013 = vpop.f32.mrf.mxu0
      %v3014 = vadd.f32 %v2925, %v3013
      %v3015 = vpop.f32.mrf.mxu0
      %v3016 = vadd.f32 %v2927, %v3015
      %3017 = vmatmul.bf16.gmra.mxu0 %v1612
      %v3018 = vpop.f32.mrf.mxu0
      %v3019 = vadd.f32 %v2930, %v3018
      %v3020 = vpop.f32.mrf.mxu0
      %v3021 = vadd.f32 %v2932, %v3020
      %3022 = vmatmul.bf16.gmra.mxu0 %v1613
      %v3023 = vpop.f32.mrf.mxu0
      %v3024 = vadd.f32 %v2935, %v3023
      %v3025 = vpop.f32.mrf.mxu0
      %v3026 = vadd.f32 %v2937, %v3025
      %3027 = vdwg.mxu0
      %3028 = vmatpush.bf16.msra.mxu0 %v2405
      %3029 = vmatpush.bf16.msra.mxu0 %v2404
      %3030 = vmatpush.bf16.msra.mxu0 %v2403
      %3031 = vmatpush.bf16.msra.mxu0 %v2402
      %3032 = vmatpush.bf16.msra.mxu0 %v2401
      %3033 = vmatpush.bf16.msra.mxu0 %v2400
      %3034 = vmatpush.bf16.msra.mxu0 %v2399
      %3035 = vmatpush.bf16.msra.mxu0 %v2398
      %3036 = vmatmul.bf16.gmra.mxu0 %v1694
      %v3037 = vpop.f32.mrf.mxu0
      %v3038 = vadd.f32 %v2949, %v3037
      %v3039 = vpop.f32.mrf.mxu0
      %v3040 = vadd.f32 %v2951, %v3039
      %3041 = vmatmul.bf16.gmra.mxu0 %v1695
      %v3042 = vpop.f32.mrf.mxu0
      %v3043 = vadd.f32 %v2954, %v3042
      %v3044 = vpop.f32.mrf.mxu0
      %v3045 = vadd.f32 %v2956, %v3044
      %3046 = vmatmul.bf16.gmra.mxu0 %v1696
      %v3047 = vpop.f32.mrf.mxu0
      %v3048 = vadd.f32 %v2959, %v3047
      %v3049 = vpop.f32.mrf.mxu0
      %v3050 = vadd.f32 %v2961, %v3049
      %3051 = vmatmul.bf16.gmra.mxu0 %v1697
      %v3052 = vpop.f32.mrf.mxu0
      %v3053 = vadd.f32 %v2964, %v3052
      %v3054 = vpop.f32.mrf.mxu0
      %v3055 = vadd.f32 %v2966, %v3054
      %3056 = vmatmul.bf16.gmra.mxu0 %v1698
      %v3057 = vpop.f32.mrf.mxu0
      %v3058 = vadd.f32 %v2969, %v3057
      %v3059 = vpop.f32.mrf.mxu0
      %v3060 = vadd.f32 %v2971, %v3059
      %3061 = vmatmul.bf16.gmra.mxu0 %v1699
      %v3062 = vpop.f32.mrf.mxu0
      %v3063 = vadd.f32 %v2974, %v3062
      %v3064 = vpop.f32.mrf.mxu0
      %v3065 = vadd.f32 %v2976, %v3064
      %3066 = vmatmul.bf16.gmra.mxu0 %v1700
      %v3067 = vpop.f32.mrf.mxu0
      %v3068 = vadd.f32 %v2979, %v3067
      %v3069 = vpop.f32.mrf.mxu0
      %v3070 = vadd.f32 %v2981, %v3069
      %3071 = vmatmul.bf16.gmra.mxu0 %v1701
      %v3072 = vpop.f32.mrf.mxu0
      %v3073 = vadd.f32 %v2984, %v3072
      %v3074 = vpop.f32.mrf.mxu0
      %v3075 = vadd.f32 %v2986, %v3074
      %3076 = vmatmul.bf16.gmra.mxu0 %v1702
      %v3077 = vpop.f32.mrf.mxu0
      %v3078 = vadd.f32 %v2989, %v3077
      %v3079 = vpop.f32.mrf.mxu0
      %v3080 = vadd.f32 %v2991, %v3079
      %3081 = vmatmul.bf16.gmra.mxu0 %v1703
      %v3082 = vpop.f32.mrf.mxu0
      %v3083 = vadd.f32 %v2994, %v3082
      %v3084 = vpop.f32.mrf.mxu0
      %v3085 = vadd.f32 %v2996, %v3084
      %3086 = vmatmul.bf16.gmra.mxu0 %v1704
      %v3087 = vpop.f32.mrf.mxu0
      %v3088 = vadd.f32 %v2999, %v3087
      %v3089 = vpop.f32.mrf.mxu0
      %v3090 = vadd.f32 %v3001, %v3089
      %3091 = vmatmul.bf16.gmra.mxu0 %v1705
      %v3092 = vpop.f32.mrf.mxu0
      %v3093 = vadd.f32 %v3004, %v3092
      %v3094 = vpop.f32.mrf.mxu0
      %v3095 = vadd.f32 %v3006, %v3094
      %3096 = vmatmul.bf16.gmra.mxu0 %v1706
      %v3097 = vpop.f32.mrf.mxu0
      %v3098 = vadd.f32 %v3009, %v3097
      %v3099 = vpop.f32.mrf.mxu0
      %v3100 = vadd.f32 %v3011, %v3099
      %3101 = vmatmul.bf16.gmra.mxu0 %v1707
      %v3102 = vpop.f32.mrf.mxu0
      %v3103 = vadd.f32 %v3014, %v3102
      %v3104 = vpop.f32.mrf.mxu0
      %v3105 = vadd.f32 %v3016, %v3104
      %3106 = vmatmul.bf16.gmra.mxu0 %v1708
      %v3107 = vpop.f32.mrf.mxu0
      %v3108 = vadd.f32 %v3019, %v3107
      %v3109 = vpop.f32.mrf.mxu0
      %v3110 = vadd.f32 %v3021, %v3109
      %3111 = vmatmul.bf16.gmra.mxu0 %v1709
      %v3112 = vpop.f32.mrf.mxu0
      %v3113 = vadd.f32 %v3024, %v3112
      %v3114 = vpop.f32.mrf.mxu0
      %v3115 = vadd.f32 %v3026, %v3114
      %3116 = vdwg.mxu0
      %3117 = vmatpush.bf16.msra.mxu0 %v2413
      %3118 = vmatpush.bf16.msra.mxu0 %v2412
      %3119 = vmatpush.bf16.msra.mxu0 %v2411
      %3120 = vmatpush.bf16.msra.mxu0 %v2410
      %3121 = vmatpush.bf16.msra.mxu0 %v2409
      %3122 = vmatpush.bf16.msra.mxu0 %v2408
      %3123 = vmatpush.bf16.msra.mxu0 %v2407
      %3124 = vmatpush.bf16.msra.mxu0 %v2406
      %3125 = vmatmul.bf16.gmra.mxu0 %v1790
      %v3126 = vpop.f32.mrf.mxu0
      %v3127 = vadd.f32 %v3038, %v3126
      %v3128 = vpop.f32.mrf.mxu0
      %v3129 = vadd.f32 %v3040, %v3128
      %3130 = vmatmul.bf16.gmra.mxu0 %v1791
      %v3131 = vpop.f32.mrf.mxu0
      %v3132 = vadd.f32 %v3043, %v3131
      %v3133 = vpop.f32.mrf.mxu0
      %v3134 = vadd.f32 %v3045, %v3133
      %3135 = vmatmul.bf16.gmra.mxu0 %v1792
      %v3136 = vpop.f32.mrf.mxu0
      %v3137 = vadd.f32 %v3048, %v3136
      %v3138 = vpop.f32.mrf.mxu0
      %v3139 = vadd.f32 %v3050, %v3138
      %3140 = vmatmul.bf16.gmra.mxu0 %v1793
      %v3141 = vpop.f32.mrf.mxu0
      %v3142 = vadd.f32 %v3053, %v3141
      %v3143 = vpop.f32.mrf.mxu0
      %v3144 = vadd.f32 %v3055, %v3143
      %3145 = vmatmul.bf16.gmra.mxu0 %v1794
      %v3146 = vpop.f32.mrf.mxu0
      %v3147 = vadd.f32 %v3058, %v3146
      %v3148 = vpop.f32.mrf.mxu0
      %v3149 = vadd.f32 %v3060, %v3148
      %3150 = vmatmul.bf16.gmra.mxu0 %v1795
      %v3151 = vpop.f32.mrf.mxu0
      %v3152 = vadd.f32 %v3063, %v3151
      %v3153 = vpop.f32.mrf.mxu0
      %v3154 = vadd.f32 %v3065, %v3153
      %3155 = vmatmul.bf16.gmra.mxu0 %v1796
      %v3156 = vpop.f32.mrf.mxu0
      %v3157 = vadd.f32 %v3068, %v3156
      %v3158 = vpop.f32.mrf.mxu0
      %v3159 = vadd.f32 %v3070, %v3158
      %3160 = vmatmul.bf16.gmra.mxu0 %v1797
      %v3161 = vpop.f32.mrf.mxu0
      %v3162 = vadd.f32 %v3073, %v3161
      %v3163 = vpop.f32.mrf.mxu0
      %v3164 = vadd.f32 %v3075, %v3163
      %3165 = vmatmul.bf16.gmra.mxu0 %v1798
      %v3166 = vpop.f32.mrf.mxu0
      %v3167 = vadd.f32 %v3078, %v3166
      %v3168 = vpop.f32.mrf.mxu0
      %v3169 = vadd.f32 %v3080, %v3168
      %3170 = vmatmul.bf16.gmra.mxu0 %v1799
      %v3171 = vpop.f32.mrf.mxu0
      %v3172 = vadd.f32 %v3083, %v3171
      %v3173 = vpop.f32.mrf.mxu0
      %v3174 = vadd.f32 %v3085, %v3173
      %3175 = vmatmul.bf16.gmra.mxu0 %v1800
      %v3176 = vpop.f32.mrf.mxu0
      %v3177 = vadd.f32 %v3088, %v3176
      %v3178 = vpop.f32.mrf.mxu0
      %v3179 = vadd.f32 %v3090, %v3178
      %3180 = vmatmul.bf16.gmra.mxu0 %v1801
      %v3181 = vpop.f32.mrf.mxu0
      %v3182 = vadd.f32 %v3093, %v3181
      %v3183 = vpop.f32.mrf.mxu0
      %v3184 = vadd.f32 %v3095, %v3183
      %3185 = vmatmul.bf16.gmra.mxu0 %v1802
      %v3186 = vpop.f32.mrf.mxu0
      %v3187 = vadd.f32 %v3098, %v3186
      %v3188 = vpop.f32.mrf.mxu0
      %v3189 = vadd.f32 %v3100, %v3188
      %3190 = vmatmul.bf16.gmra.mxu0 %v1803
      %v3191 = vpop.f32.mrf.mxu0
      %v3192 = vadd.f32 %v3103, %v3191
      %v3193 = vpop.f32.mrf.mxu0
      %v3194 = vadd.f32 %v3105, %v3193
      %3195 = vmatmul.bf16.gmra.mxu0 %v1804
      %v3196 = vpop.f32.mrf.mxu0
      %v3197 = vadd.f32 %v3108, %v3196
      %v3198 = vpop.f32.mrf.mxu0
      %v3199 = vadd.f32 %v3110, %v3198
      %3200 = vmatmul.bf16.gmra.mxu0 %v1805
      %v3201 = vpop.f32.mrf.mxu0
      %v3202 = vadd.f32 %v3113, %v3201
      %v3203 = vpop.f32.mrf.mxu0
      %v3204 = vadd.f32 %v3115, %v3203
      %3205 = vdwg.mxu0
      %3206 = vmatpush.bf16.msra.mxu0 %v2421
      %3207 = vmatpush.bf16.msra.mxu0 %v2420
      %3208 = vmatpush.bf16.msra.mxu0 %v2419
      %3209 = vmatpush.bf16.msra.mxu0 %v2418
      %3210 = vmatpush.bf16.msra.mxu0 %v2417
      %3211 = vmatpush.bf16.msra.mxu0 %v2416
      %3212 = vmatpush.bf16.msra.mxu0 %v2415
      %3213 = vmatpush.bf16.msra.mxu0 %v2414
      %3214 = vmatmul.bf16.gmra.mxu0 %v1886
      %v3215 = vpop.f32.mrf.mxu0
      %v3216 = vadd.f32 %v3127, %v3215
      %v3217 = vpop.f32.mrf.mxu0
      %v3218 = vadd.f32 %v3129, %v3217
      %3219 = vmatmul.bf16.gmra.mxu0 %v1887
      %v3220 = vpop.f32.mrf.mxu0
      %v3221 = vadd.f32 %v3132, %v3220
      %v3222 = vpop.f32.mrf.mxu0
      %v3223 = vadd.f32 %v3134, %v3222
      %3224 = vmatmul.bf16.gmra.mxu0 %v1888
      %v3225 = vpop.f32.mrf.mxu0
      %v3226 = vadd.f32 %v3137, %v3225
      %v3227 = vpop.f32.mrf.mxu0
      %v3228 = vadd.f32 %v3139, %v3227
      %3229 = vmatmul.bf16.gmra.mxu0 %v1889
      %v3230 = vpop.f32.mrf.mxu0
      %v3231 = vadd.f32 %v3142, %v3230
      %v3232 = vpop.f32.mrf.mxu0
      %v3233 = vadd.f32 %v3144, %v3232
      %3234 = vmatmul.bf16.gmra.mxu0 %v1890
      %v3235 = vpop.f32.mrf.mxu0
      %v3236 = vadd.f32 %v3147, %v3235
      %v3237 = vpop.f32.mrf.mxu0
      %v3238 = vadd.f32 %v3149, %v3237
      %3239 = vmatmul.bf16.gmra.mxu0 %v1891
      %v3240 = vpop.f32.mrf.mxu0
      %v3241 = vadd.f32 %v3152, %v3240
      %v3242 = vpop.f32.mrf.mxu0
      %v3243 = vadd.f32 %v3154, %v3242
      %3244 = vmatmul.bf16.gmra.mxu0 %v1892
      %v3245 = vpop.f32.mrf.mxu0
      %v3246 = vadd.f32 %v3157, %v3245
      %v3247 = vpop.f32.mrf.mxu0
      %v3248 = vadd.f32 %v3159, %v3247
      %3249 = vmatmul.bf16.gmra.mxu0 %v1893
      %v3250 = vpop.f32.mrf.mxu0
      %v3251 = vadd.f32 %v3162, %v3250
      %v3252 = vpop.f32.mrf.mxu0
      %v3253 = vadd.f32 %v3164, %v3252
      %3254 = vmatmul.bf16.gmra.mxu0 %v1894
      %v3255 = vpop.f32.mrf.mxu0
      %v3256 = vadd.f32 %v3167, %v3255
      %v3257 = vpop.f32.mrf.mxu0
      %v3258 = vadd.f32 %v3169, %v3257
      %3259 = vmatmul.bf16.gmra.mxu0 %v1895
      %v3260 = vpop.f32.mrf.mxu0
      %v3261 = vadd.f32 %v3172, %v3260
      %v3262 = vpop.f32.mrf.mxu0
      %v3263 = vadd.f32 %v3174, %v3262
      %3264 = vmatmul.bf16.gmra.mxu0 %v1896
      %v3265 = vpop.f32.mrf.mxu0
      %v3266 = vadd.f32 %v3177, %v3265
      %v3267 = vpop.f32.mrf.mxu0
      %v3268 = vadd.f32 %v3179, %v3267
      %3269 = vmatmul.bf16.gmra.mxu0 %v1897
      %v3270 = vpop.f32.mrf.mxu0
      %v3271 = vadd.f32 %v3182, %v3270
      %v3272 = vpop.f32.mrf.mxu0
      %v3273 = vadd.f32 %v3184, %v3272
      %3274 = vmatmul.bf16.gmra.mxu0 %v1898
      %v3275 = vpop.f32.mrf.mxu0
      %v3276 = vadd.f32 %v3187, %v3275
      %v3277 = vpop.f32.mrf.mxu0
      %v3278 = vadd.f32 %v3189, %v3277
      %3279 = vmatmul.bf16.gmra.mxu0 %v1899
      %v3280 = vpop.f32.mrf.mxu0
      %v3281 = vadd.f32 %v3192, %v3280
      %v3282 = vpop.f32.mrf.mxu0
      %v3283 = vadd.f32 %v3194, %v3282
      %3284 = vmatmul.bf16.gmra.mxu0 %v1900
      %v3285 = vpop.f32.mrf.mxu0
      %v3286 = vadd.f32 %v3197, %v3285
      %v3287 = vpop.f32.mrf.mxu0
      %v3288 = vadd.f32 %v3199, %v3287
      %3289 = vmatmul.bf16.gmra.mxu0 %v1901
      %v3290 = vpop.f32.mrf.mxu0
      %v3291 = vadd.f32 %v3202, %v3290
      %v3292 = vpop.f32.mrf.mxu0
      %v3293 = vadd.f32 %v3204, %v3292
      %3294 = vdwg.mxu0
      %3295 = vst [vmem:[%s262] sm:$0xff] %v3216
      %3296 = vst [vmem:[%s262 + $0x8] sm:$0xff] %v3218
      %3297 = vst [vmem:[%s262 + $0x10] sm:$0xff] %v3221
      %3298 = vst [vmem:[%s262 + $0x18] sm:$0xff] %v3223
      %3299 = vst [vmem:[%s262 + $0x20] sm:$0xff] %v3226
      %3300 = vst [vmem:[%s262 + $0x28] sm:$0xff] %v3228
      %3301 = vst [vmem:[%s262 + $0x30] sm:$0xff] %v3231
      %3302 = vst [vmem:[%s262 + $0x38] sm:$0xff] %v3233
      %3303 = vst [vmem:[%s262 + $0x40] sm:$0xff] %v3236
      %3304 = vst [vmem:[%s262 + $0x48] sm:$0xff] %v3238
      %3305 = vst [vmem:[%s262 + $0x50] sm:$0xff] %v3241
      %3306 = vst [vmem:[%s262 + $0x58] sm:$0xff] %v3243
      %3307 = vst [vmem:[%s262 + $0x60] sm:$0xff] %v3246
      %3308 = vst [vmem:[%s262 + $0x68] sm:$0xff] %v3248
      %3309 = vst [vmem:[%s262 + $0x70] sm:$0xff] %v3251
      %3310 = vst [vmem:[%s262 + $0x78] sm:$0xff] %v3253
      %3311 = vst [vmem:[%s262 + $0x80] sm:$0xff] %v3256
      %3312 = vst [vmem:[%s262 + $0x88] sm:$0xff] %v3258
      %3313 = vst [vmem:[%s262 + $0x90] sm:$0xff] %v3261
      %3314 = vst [vmem:[%s262 + $0x98] sm:$0xff] %v3263
      %3315 = vst [vmem:[%s262 + $0xa0] sm:$0xff] %v3266
      %3316 = vst [vmem:[%s262 + $0xa8] sm:$0xff] %v3268
      %3317 = vst [vmem:[%s262 + $0xb0] sm:$0xff] %v3271
      %3318 = vst [vmem:[%s262 + $0xb8] sm:$0xff] %v3273
      %3319 = vst [vmem:[%s262 + $0xc0] sm:$0xff] %v3276
      %3320 = vst [vmem:[%s262 + $0xc8] sm:$0xff] %v3278
      %3321 = vst [vmem:[%s262 + $0xd0] sm:$0xff] %v3281
      %3322 = vst [vmem:[%s262 + $0xd8] sm:$0xff] %v3283
      %3323 = vst [vmem:[%s262 + $0xe0] sm:$0xff] %v3286
      %3324 = vst [vmem:[%s262 + $0xe8] sm:$0xff] %v3288
      %3325 = vst [vmem:[%s262 + $0xf0] sm:$0xff] %v3291
      %3326 = vst [vmem:[%s262 + $0xf8] sm:$0xff] %v3293
      %v3327 = vadd.f32 %v3216, %v3218
      %v3328 = vadd.f32 %v3327, %v3221
      %v3329 = vadd.f32 %v3328, %v3223
      %v3330 = vadd.f32 %v3329, %v3226
      %v3331 = vadd.f32 %v3330, %v3228
      %v3332 = vadd.f32 %v3331, %v3231
      %v3333 = vadd.f32 %v3332, %v3233
      %v3334 = vadd.f32 %v3333, %v3236
      %v3335 = vadd.f32 %v3334, %v3238
      %v3336 = vadd.f32 %v3335, %v3241
      %v3337 = vadd.f32 %v3336, %v3243
      %v3338 = vadd.f32 %v3337, %v3246
      %v3339 = vadd.f32 %v3338, %v3248
      %v3340 = vadd.f32 %v3339, %v3251
      %v3341 = vadd.f32 %v3340, %v3253
      %v3342 = vadd.f32 %v3341, %v3256
      %v3343 = vadd.f32 %v3342, %v3258
      %v3344 = vadd.f32 %v3343, %v3261
      %v3345 = vadd.f32 %v3344, %v3263
      %v3346 = vadd.f32 %v3345, %v3266
      %v3347 = vadd.f32 %v3346, %v3268
      %v3348 = vadd.f32 %v3347, %v3271
      %v3349 = vadd.f32 %v3348, %v3273
      %v3350 = vadd.f32 %v3349, %v3276
      %v3351 = vadd.f32 %v3350, %v3278
      %v3352 = vadd.f32 %v3351, %v3281
      %v3353 = vadd.f32 %v3352, %v3283
      %v3354 = vadd.f32 %v3353, %v3286
      %v3355 = vadd.f32 %v3354, %v3288
      %v3356 = vadd.f32 %v3355, %v3291
      %v3357 = vadd.f32 %v3356, %v3293
      %v3358 = vrot.slane %v3357, 4
      %v3359 = vadd.f32 %v3357, %v3358
      %v3360 = vrot.slane %v3359, 2
      %v3361 = vadd.f32 %v3359, %v3360
      %v3362 = vrot.slane %v3361, 1
      %v3363 = vadd.f32 %v3361, %v3362
      %3364 = vst [vmem:[%s265] sm:$0x1] %v3363
      %v3365 = vmul.f32 %v3216, %v3216
      %v3366 = vmul.f32 %v3218, %v3218
      %v3367 = vmul.f32 %v3221, %v3221
      %v3368 = vmul.f32 %v3223, %v3223
      %v3369 = vmul.f32 %v3226, %v3226
      %v3370 = vmul.f32 %v3228, %v3228
      %v3371 = vmul.f32 %v3231, %v3231
      %v3372 = vmul.f32 %v3233, %v3233
      %v3373 = vmul.f32 %v3236, %v3236
      %v3374 = vmul.f32 %v3238, %v3238
      %v3375 = vmul.f32 %v3241, %v3241
      %v3376 = vmul.f32 %v3243, %v3243
      %v3377 = vmul.f32 %v3246, %v3246
      %v3378 = vmul.f32 %v3248, %v3248
      %v3379 = vmul.f32 %v3251, %v3251
      %v3380 = vmul.f32 %v3253, %v3253
      %v3381 = vmul.f32 %v3256, %v3256
      %v3382 = vmul.f32 %v3258, %v3258
      %v3383 = vmul.f32 %v3261, %v3261
      %v3384 = vmul.f32 %v3263, %v3263
      %v3385 = vmul.f32 %v3266, %v3266
      %v3386 = vmul.f32 %v3268, %v3268
      %v3387 = vmul.f32 %v3271, %v3271
      %v3388 = vmul.f32 %v3273, %v3273
      %v3389 = vmul.f32 %v3276, %v3276
      %v3390 = vmul.f32 %v3278, %v3278
      %v3391 = vmul.f32 %v3281, %v3281
      %v3392 = vmul.f32 %v3283, %v3283
      %v3393 = vmul.f32 %v3286, %v3286
      %v3394 = vmul.f32 %v3288, %v3288
      %v3395 = vmul.f32 %v3291, %v3291
      %v3396 = vmul.f32 %v3293, %v3293
      %v3397 = vadd.f32 %v3365, %v3366
      %v3398 = vadd.f32 %v3397, %v3367
      %v3399 = vadd.f32 %v3398, %v3368
      %v3400 = vadd.f32 %v3399, %v3369
      %v3401 = vadd.f32 %v3400, %v3370
      %v3402 = vadd.f32 %v3401, %v3371
      %v3403 = vadd.f32 %v3402, %v3372
      %v3404 = vadd.f32 %v3403, %v3373
      %v3405 = vadd.f32 %v3404, %v3374
      %v3406 = vadd.f32 %v3405, %v3375
      %v3407 = vadd.f32 %v3406, %v3376
      %v3408 = vadd.f32 %v3407, %v3377
      %v3409 = vadd.f32 %v3408, %v3378
      %v3410 = vadd.f32 %v3409, %v3379
      %v3411 = vadd.f32 %v3410, %v3380
      %v3412 = vadd.f32 %v3411, %v3381
      %v3413 = vadd.f32 %v3412, %v3382
      %v3414 = vadd.f32 %v3413, %v3383
      %v3415 = vadd.f32 %v3414, %v3384
      %v3416 = vadd.f32 %v3415, %v3385
      %v3417 = vadd.f32 %v3416, %v3386
      %v3418 = vadd.f32 %v3417, %v3387
      %v3419 = vadd.f32 %v3418, %v3388
      %v3420 = vadd.f32 %v3419, %v3389
      %v3421 = vadd.f32 %v3420, %v3390
      %v3422 = vadd.f32 %v3421, %v3391
      %v3423 = vadd.f32 %v3422, %v3392
      %v3424 = vadd.f32 %v3423, %v3393
      %v3425 = vadd.f32 %v3424, %v3394
      %v3426 = vadd.f32 %v3425, %v3395
      %v3427 = vadd.f32 %v3426, %v3396
      %v3428 = vrot.slane %v3427, 4
      %v3429 = vadd.f32 %v3427, %v3428
      %v3430 = vrot.slane %v3429, 2
      %v3431 = vadd.f32 %v3429, %v3430
      %v3432 = vrot.slane %v3431, 1
      %v3433 = vadd.f32 %v3431, %v3432
      %3434 = vst [vmem:[%s268] sm:$0x1] %v3433
      %p3435 = scmp.lt.s32.totalorder %s18, 1
      %s3436 = scalar_select %p3435, %s18, 1
      %s3437 = smul.addr %s3436, 32
      %s3438 = smul.addr %s3437, 8
      %s3439 = scalar_lea.vmem %s4, %s3438
      %p3440 = scmp.lt.s32.totalorder %s18, 1
      %s3441 = scalar_select %p3440, %s18, 1
      %s3442 = scalar_lea.vmem %s5, %s3441
      %p3443 = scmp.lt.s32.totalorder %s18, 1
      %s3444 = scalar_select %p3443, %s18, 1
      %s3445 = scalar_lea.vmem %s6, %s3444
      // Predicated region
      $region37: #{resblock_forward.4} parent=35 // pred_check
        %p3446 = pneg %p125
      $region38: #{resblock_forward.4} parent=35 // pred_check_branch
        %3448 = sbr.rel (%p3446) target = $region40
      $region39: #{resblock_forward.4} parent=35 // pred_region
        _
      $region40: #{resblock_forward.4} parent=35 // pred_fallthru
        _
      // Predicated region
      $region41: #{resblock_forward.4} parent=35 // pred_check
        %p3449 = pneg %p151
      $region42: #{resblock_forward.4} parent=35 // pred_check_branch
        %3451 = sbr.rel (%p3449) target = $region44
      $region43: #{resblock_forward.4} parent=35 // pred_region
        _
      $region44: #{resblock_forward.4} parent=35 // pred_fallthru
        _
      // Predicated region
      $region45: #{resblock_forward.4} parent=35 // pred_check
        %p3452 = pneg %p177
      $region46: #{resblock_forward.4} parent=35 // pred_check_branch
        %3454 = sbr.rel (%p3452) target = $region48
      $region47: #{resblock_forward.4} parent=35 // pred_region
        _
      $region48: #{resblock_forward.4} parent=35 // pred_fallthru
        _
    $region36: #{resblock_forward.4} parent=5 // pred_fallthru
      _
    %p3455 = scmp.le.s32.totalorder 2, %s13
    // Predicated region
    $region49: #{resblock_forward.4} parent=5 // pred_check
      %p3456 = pneg %p3455
    $region50: #{resblock_forward.4} parent=5 // pred_check_branch
      %3458 = sbr.rel (%p3456) target = $region52
    $region51: #{resblock_forward.4} parent=5 // pred_region
      %s3459 = ssub.s32 %s13, 2
      // Predicated region
      $region53: #{resblock_forward.4} parent=51 // pred_check
        %p3460 = pneg %p131
      $region54: #{resblock_forward.4} parent=51 // pred_check_branch
        %3462 = sbr.rel (%p3460) target = $region56
      $region55: #{resblock_forward.4} parent=51 // pred_region
        %p3463 = scmp.lt.s32.totalorder %s19, 1
        %s3464 = scalar_select %p3463, %s19, 1
        %s3465 = smul.addr %s3464, 32
        %s3466 = smul.addr %s3465, 8
        %s3467 = scalar_lea.vmem %s4, %s3466
      $region56: #{resblock_forward.4} parent=51 // pred_fallthru
        _
      // Predicated region
      $region57: #{resblock_forward.4} parent=51 // pred_check
        %p3468 = pneg %p157
      $region58: #{resblock_forward.4} parent=51 // pred_check_branch
        %3470 = sbr.rel (%p3468) target = $region60
      $region59: #{resblock_forward.4} parent=51 // pred_region
        %p3471 = scmp.lt.s32.totalorder %s19, 1
        %s3472 = scalar_select %p3471, %s19, 1
        %s3473 = scalar_lea.vmem %s5, %s3472
      $region60: #{resblock_forward.4} parent=51 // pred_fallthru
        _
      // Predicated region
      $region61: #{resblock_forward.4} parent=51 // pred_check
        %p3474 = pneg %p183
      $region62: #{resblock_forward.4} parent=51 // pred_check_branch
        %3476 = sbr.rel (%p3474) target = $region64
      $region63: #{resblock_forward.4} parent=51 // pred_region
        %p3477 = scmp.lt.s32.totalorder %s19, 1
        %s3478 = scalar_select %p3477, %s19, 1
        %s3479 = scalar_lea.vmem %s6, %s3478
      $region64: #{resblock_forward.4} parent=51 // pred_fallthru
        _
    $region52: #{resblock_forward.4} parent=5 // pred_fallthru
      _
  $region6: #{resblock_forward.4} parent=0 // loop_footer
    %s17 = sadd.s32 1, %s13
  $region7: #{resblock_forward.4} parent=0 // loop_footer_branch
    %12 = sbr.rel target = $region3
  $region8: #{resblock_forward.4} parent=0 // loop_exit
    _

</llo_original>
